<compile_context>
chip_gen: v6e
topology: v6e:2x2x1
jax: 0.10.0
libtpu: 0.0.40
codegen_flags: <defaults>
</compile_context>

<pallas_src>
import functools

import jax
import jax.numpy as jnp
from jax.experimental import pallas as pl
from jax.experimental.pallas import tpu as pltpu


# ---------------------------------------------------------------------------
# Kernel: one grid step == one batch element, x kept as a lane-dense (C, HW)
# slab in its native dtype for the whole kernel.
# ---------------------------------------------------------------------------
def _ca_kernel(x_ref, bh_ref, bw_ref, w1_ref, cp_ref, b1_ref, o_ref):
    x = x_ref[0]                      # (C, HW)  native dtype, no f32 upcast
    bcast_h = bh_ref[...]             # (H, HW)  0/1 selector, x dtype, lane-dense
    bcast_w = bw_ref[...]             # (W, HW)  0/1 selector
    h = bcast_h.shape[0]
    w = bcast_w.shape[0]

    hi = jax.lax.Precision.HIGHEST
    trans_b = (((1,), (1,)), ((), ()))        # contract last dim of both (A @ B^T)

    # --- coordinate pooling on the MXU (x never leaves its (C, HW) layout) ---
    x_h = jax.lax.dot_general(x, bcast_h, trans_b, precision=hi,
                              preferred_element_type=jnp.float32) * (1.0 / w)  # (C, H)
    x_w = jax.lax.dot_general(x, bcast_w, trans_b, precision=hi,
                              preferred_element_type=jnp.float32) * (1.0 / h)  # (C, W)

    # --- conv1 (1x1, C -> 1) with eval-mode BatchNorm folded in --------------
    w1 = w1_ref[...]                  # (1, C) f32, bn-folded
    b1 = b1_ref[0, 0]                 # scalar (SMEM), bn-folded
    y_h = jnp.dot(w1, x_h, precision=hi, preferred_element_type=jnp.float32) + b1  # (1, H)
    y_w = jnp.dot(w1, x_w, precision=hi, preferred_element_type=jnp.float32) + b1  # (1, W)

    # --- h_swish: v * relu6(v + 3) / 6 ---------------------------------------
    def _h_swish(v):
        return v * (jnp.clip(v + 3.0, 0.0, 6.0) * (1.0 / 6.0))

    y_h = _h_swish(y_h)
    y_w = _h_swish(y_w)

    # --- conv_h / conv_w (1x1, 1 -> C) + sigmoid  => per-row / per-col gates -
    cp = cp_ref[...]                  # (C, 4) f32 = [wh | bh | ww | bw]
    a_h = jax.nn.sigmoid(cp[:, 0:1] * y_h + cp[:, 1:2])      # (C, H) f32
    a_w = jax.nn.sigmoid(cp[:, 2:3] * y_w + cp[:, 3:4])      # (C, W) f32

    # --- broadcast gates back to (C, HW) on the MXU and apply ----------------
    ah_full = jnp.dot(a_h.astype(x.dtype), bcast_h, precision=hi,
                      preferred_element_type=x.dtype)        # (C, HW)
    aw_full = jnp.dot(a_w.astype(x.dtype), bcast_w, precision=hi,
                      preferred_element_type=x.dtype)        # (C, HW)
    o_ref[0] = x * ah_full * aw_full


# ---------------------------------------------------------------------------
# Wrapper
# ---------------------------------------------------------------------------
def ca_forward(x, params):
    """Fused Coordinate-Attention forward.  x: (N, C, H, W)."""
    n, c, h, w = x.shape
    hw = h * w
    dt = x.dtype

    # Fold eval-mode BatchNorm (single channel, mip=1) into conv1.
    inv_std = 1.0 / jnp.sqrt(params["bn_var"] + params["bn_eps"])     # (1,)
    scale = params["bn_gamma"] * inv_std                              # (1,)
    w1 = (params["conv1_w"].reshape(1, c) * scale).astype(jnp.float32)          # (1, C)
    b1 = ((params["conv1_b"] - params["bn_mean"]) * scale
          + params["bn_beta"]).reshape(1, 1).astype(jnp.float32)                # (1, 1)

    # Pack the four per-channel vectors into a single block.
    cp = jnp.stack(
        [params["convh_w"].reshape(c), params["convh_b"].reshape(c),
         params["convw_w"].reshape(c), params["convw_b"].reshape(c)],
        axis=1).astype(jnp.float32)                                              # (C, 4)

    # 0/1 selection matrices: bcast_h[r, p] = (p // W == r), bcast_w[s, p] = (p % W == s).
    # Used both for the mean pooling (transposed-RHS contraction over HW) and for
    # broadcasting the gates back to (C, HW) — all on the MXU.
    p_idx = jnp.arange(hw, dtype=jnp.int32)
    bcast_h = (p_idx[None, :] // w == jnp.arange(h, dtype=jnp.int32)[:, None]).astype(dt)
    bcast_w = (p_idx[None, :] % w == jnp.arange(w, dtype=jnp.int32)[:, None]).astype(dt)

    # Lane-dense view of x: (N, C, H*W) — free, contiguous reshape.
    x3 = x.reshape(n, c, hw)

    # Explicit VMEM budget: in/out double buffers + selectors + in-kernel temps.
    itemsize = jnp.dtype(dt).itemsize
    slab = c * hw * itemsize
    needed = (4 * slab                        # x + out, double-buffered
              + 2 * hw * (h + w) * itemsize   # bcast selectors (double-buffered)
              + 3 * c * hw * 4                # gate temporaries (worst case f32)
              + (2 << 20))                    # params + slack
    vmem_limit = int(min(max(needed, 32 << 20), 64 << 20))

    flops = int(n * (4 * c * hw * (h + w) + 2 * c * hw + 8 * c * (h + w)))
    bytes_accessed = int(2 * n * slab + hw * (h + w) * itemsize + (5 * c + 1) * 4)
    transcendentals = int(n * c * (h + w))

    out3 = pl.pallas_call(
        _ca_kernel,
        out_shape=jax.ShapeDtypeStruct((n, c, hw), dt),
        grid_spec=pltpu.PrefetchScalarGridSpec(
            num_scalar_prefetch=0,
            grid=(n,),
            in_specs=[
                # Last two dims equal the full array dims -> tiling-legal blocks.
                pl.BlockSpec((1, c, hw), lambda i: (i, 0, 0)),       # x (lane-dense)
                pl.BlockSpec((h, hw), lambda i: (0, 0)),             # bcast_h
                pl.BlockSpec((w, hw), lambda i: (0, 0)),             # bcast_w
                pl.BlockSpec((1, c), lambda i: (0, 0)),              # w1 (bn-folded)
                pl.BlockSpec((c, 4), lambda i: (0, 0)),              # [wh, bh, ww, bw]
                pl.BlockSpec(memory_space=pltpu.MemorySpace.SMEM),   # b1 scalar
            ],
            out_specs=pl.BlockSpec((1, c, hw), lambda i: (i, 0, 0)),
        ),
        compiler_params=pltpu.CompilerParams(
            dimension_semantics=("parallel",),
            vmem_limit_bytes=vmem_limit,
        ),
        cost_estimate=pl.CostEstimate(
            flops=flops,
            bytes_accessed=bytes_accessed,
            transcendentals=transcendentals,
        ),
    )(x3, bcast_h, bcast_w, w1, cp, b1)

    return out3.reshape(n, c, h, w)


# ---------------------------------------------------------------------------
# Pure-JAX reference (mirrors the PyTorch forward, eval-mode BN)
# ---------------------------------------------------------------------------
def _ca_ref(x, p):
    n, c, h, w = x.shape
    x_h = jnp.mean(x, axis=3, keepdims=True)                        # (n,c,h,1)
    x_w = jnp.mean(x, axis=2, keepdims=True)                        # (n,c,1,w)
    x_w = jnp.transpose(x_w, (0, 1, 3, 2))                          # (n,c,w,1)
    y = jnp.concatenate([x_h, x_w], axis=2)                         # (n,c,h+w,1)

    w1 = p["conv1_w"].reshape(1, c)
    y = jnp.einsum("oc,ncsk->nosk", w1, y) + p["conv1_b"].reshape(1, 1, 1, 1)
    y = ((y - p["bn_mean"].reshape(1, 1, 1, 1))
         / jnp.sqrt(p["bn_var"].reshape(1, 1, 1, 1) + p["bn_eps"])
         * p["bn_gamma"].reshape(1, 1, 1, 1)
         + p["bn_beta"].reshape(1, 1, 1, 1))
    y = y * jnp.clip(y + 3.0, 0.0, 6.0) / 6.0                        # h_swish

    y_h, y_w = y[:, :, :h, :], y[:, :, h:, :]
    y_w = jnp.transpose(y_w, (0, 1, 3, 2))                           # (n,1,1,w)

    wh = p["convh_w"].reshape(c, 1)
    ww_ = p["convw_w"].reshape(c, 1)
    a_h = jax.nn.sigmoid(jnp.einsum("co,nosk->ncsk", wh, y_h)
                         + p["convh_b"].reshape(1, c, 1, 1))         # (n,c,h,1)
    a_w = jax.nn.sigmoid(jnp.einsum("co,nosk->ncsk", ww_, y_w)
                         + p["convw_b"].reshape(1, c, 1, 1))         # (n,c,1,w)
    return x * a_w * a_h


if __name__ == "__main__":
    key = jax.random.PRNGKey(0)
    k_x, k_w1, k_b1, k_wh, k_bh, k_ww, k_bw = jax.random.split(key, 7)

    n, c, h, w = 2, 4, 16, 16
    x = jax.random.normal(k_x, (n, c, h, w), dtype=jnp.float32)

    params = {
        "conv1_w": jax.random.normal(k_w1, (1, c, 1, 1), jnp.float32) * 0.5,
        "conv1_b": jax.random.normal(k_b1, (1,), jnp.float32) * 0.1,
        "bn_gamma": jnp.ones((1,), jnp.float32),
        "bn_beta": jnp.zeros((1,), jnp.float32),
        "bn_mean": jnp.zeros((1,), jnp.float32),
        "bn_var": jnp.ones((1,), jnp.float32),
        "bn_eps": 1e-5,
        "convh_w": jax.random.normal(k_wh, (c, 1, 1, 1), jnp.float32) * 0.5,
        "convh_b": jax.random.normal(k_bh, (c,), jnp.float32) * 0.1,
        "convw_w": jax.random.normal(k_ww, (c, 1, 1, 1), jnp.float32) * 0.5,
        "convw_b": jax.random.normal(k_bw, (c,), jnp.float32) * 0.1,
    }

    y = ca_forward(x, params)
    y = jax.block_until_ready(y)

    y_ref = _ca_ref(x, params)
    assert y.shape == x.shape and y.dtype == x.dtype
    assert jnp.allclose(y, y_ref, atol=1e-5, rtol=1e-5), "mismatch vs reference"

    print("KERNEL_OK")
</pallas_src>

<mosaic_0001>
module attributes {stable_mosaic.version = 11 : i64} {
  func.func @_ca_kernel(%arg0: i32, %arg1: memref<1x4x256xf32, #tpu.memory_space<vmem>>, %arg2: memref<16x256xf32, #tpu.memory_space<vmem>>, %arg3: memref<16x256xf32, #tpu.memory_space<vmem>>, %arg4: memref<1x4xf32, #tpu.memory_space<vmem>>, %arg5: memref<4x4xf32, #tpu.memory_space<vmem>>, %arg6: memref<1x1xf32, #tpu.memory_space<smem>>, %arg7: memref<1x4x256xf32, #tpu.memory_space<vmem>>) attributes {dimension_semantics = [#tpu.dimension_semantics<parallel>], iteration_bounds = array<i64: 2>, scalar_prefetch = 0 : i64, scratch_operands = 0 : i64, tpu.core_type = #tpu.core_type<tc>, window_params = [{transform_indices = @transform_0, window_bounds = array<i64: 1, 4, 256>}, {pipeline_mode = #tpu.pipeline_mode<synchronous>, transform_indices = @transform_1, window_bounds = array<i64: 16, 256>}, {pipeline_mode = #tpu.pipeline_mode<synchronous>, transform_indices = @transform_2, window_bounds = array<i64: 16, 256>}, {pipeline_mode = #tpu.pipeline_mode<synchronous>, transform_indices = @transform_3, window_bounds = array<i64: 1, 4>}, {pipeline_mode = #tpu.pipeline_mode<synchronous>, transform_indices = @transform_4, window_bounds = array<i64: 4, 4>}, {transform_indices = @transform_5, window_bounds = array<i64: 1, 1>}, {transform_indices = @transform_6, window_bounds = array<i64: 1, 4, 256>}]} {
    %c0 = arith.constant 0 : index
    %c0_0 = arith.constant 0 : index
    %c0_1 = arith.constant 0 : index
    %0 = vector.load %arg1[%c0, %c0_0, %c0_1] : memref<1x4x256xf32, #tpu.memory_space<vmem>>, vector<1x4x256xf32>
    %1 = vector.shape_cast %0 : vector<1x4x256xf32> to vector<4x256xf32>
    %c0_2 = arith.constant 0 : index
    %c0_3 = arith.constant 0 : index
    %2 = vector.load %arg2[%c0_2, %c0_3] : memref<16x256xf32, #tpu.memory_space<vmem>>, vector<16x256xf32>
    %c0_4 = arith.constant 0 : index
    %c0_5 = arith.constant 0 : index
    %3 = vector.load %arg3[%c0_4, %c0_5] : memref<16x256xf32, #tpu.memory_space<vmem>>, vector<16x256xf32>
    %cst = arith.constant dense<0.000000e+00> : vector<4x16xf32>
    %4 = tpu.matmul %1, %2, %cst {dimension_numbers = #tpu.dot_dimension_numbers<[1], [1], [0], [0], [0, 0, 1, 0], [], []>, precision = #tpu.contract_precision<fp32>} : vector<4x256xf32>, vector<16x256xf32>, vector<4x16xf32> -> vector<4x16xf32>
    %cst_6 = arith.constant 6.250000e-02 : f32
    %5 = vector.broadcast %cst_6 : f32 to vector<4x16xf32>
    %6 = arith.mulf %4, %5 : vector<4x16xf32>
    %cst_7 = arith.constant dense<0.000000e+00> : vector<4x16xf32>
    %7 = tpu.matmul %1, %3, %cst_7 {dimension_numbers = #tpu.dot_dimension_numbers<[1], [1], [0], [0], [0, 0, 1, 0], [], []>, precision = #tpu.contract_precision<fp32>} : vector<4x256xf32>, vector<16x256xf32>, vector<4x16xf32> -> vector<4x16xf32>
    %cst_8 = arith.constant 6.250000e-02 : f32
    %8 = vector.broadcast %cst_8 : f32 to vector<4x16xf32>
    %9 = arith.mulf %7, %8 : vector<4x16xf32>
    %c0_9 = arith.constant 0 : index
    %c0_10 = arith.constant 0 : index
    %10 = vector.load %arg4[%c0_9, %c0_10] : memref<1x4xf32, #tpu.memory_space<vmem>>, vector<1x4xf32>
    %c0_11 = arith.constant 0 : index
    %c0_12 = arith.constant 0 : index
    %11 = memref.load %arg6[%c0_11, %c0_12] : memref<1x1xf32, #tpu.memory_space<smem>>
    %cst_13 = arith.constant dense<0.000000e+00> : vector<1x16xf32>
    %12 = tpu.matmul %10, %6, %cst_13 {dimension_numbers = #tpu.dot_dimension_numbers<[1], [0], [0], [1], [0, 0, 1, 1], [], []>, precision = #tpu.contract_precision<fp32>} : vector<1x4xf32>, vector<4x16xf32>, vector<1x16xf32> -> vector<1x16xf32>
    %13 = vector.broadcast %11 : f32 to vector<1x16xf32>
    %14 = arith.addf %12, %13 : vector<1x16xf32>
    %cst_14 = arith.constant dense<0.000000e+00> : vector<1x16xf32>
    %15 = tpu.matmul %10, %9, %cst_14 {dimension_numbers = #tpu.dot_dimension_numbers<[1], [0], [0], [1], [0, 0, 1, 1], [], []>, precision = #tpu.contract_precision<fp32>} : vector<1x4xf32>, vector<4x16xf32>, vector<1x16xf32> -> vector<1x16xf32>
    %16 = vector.broadcast %11 : f32 to vector<1x16xf32>
    %17 = arith.addf %15, %16 : vector<1x16xf32>
    %cst_15 = arith.constant 3.000000e+00 : f32
    %18 = vector.broadcast %cst_15 : f32 to vector<1x16xf32>
    %19 = arith.addf %14, %18 : vector<1x16xf32>
    %cst_16 = arith.constant 0.000000e+00 : f32
    %cst_17 = arith.constant 6.000000e+00 : f32
    %20 = vector.broadcast %cst_16 : f32 to vector<1x16xf32>
    %21 = arith.maximumf %20, %19 : vector<1x16xf32>
    %22 = vector.broadcast %cst_17 : f32 to vector<1x16xf32>
    %23 = arith.minimumf %22, %21 : vector<1x16xf32>
    %cst_18 = arith.constant 0.166666672 : f32
    %24 = vector.broadcast %cst_18 : f32 to vector<1x16xf32>
    %25 = arith.mulf %23, %24 : vector<1x16xf32>
    %26 = arith.mulf %14, %25 : vector<1x16xf32>
    %cst_19 = arith.constant 3.000000e+00 : f32
    %27 = vector.broadcast %cst_19 : f32 to vector<1x16xf32>
    %28 = arith.addf %17, %27 : vector<1x16xf32>
    %cst_20 = arith.constant 0.000000e+00 : f32
    %cst_21 = arith.constant 6.000000e+00 : f32
    %29 = vector.broadcast %cst_20 : f32 to vector<1x16xf32>
    %30 = arith.maximumf %29, %28 : vector<1x16xf32>
    %31 = vector.broadcast %cst_21 : f32 to vector<1x16xf32>
    %32 = arith.minimumf %31, %30 : vector<1x16xf32>
    %cst_22 = arith.constant 0.166666672 : f32
    %33 = vector.broadcast %cst_22 : f32 to vector<1x16xf32>
    %34 = arith.mulf %32, %33 : vector<1x16xf32>
    %35 = arith.mulf %17, %34 : vector<1x16xf32>
    %c0_23 = arith.constant 0 : index
    %c0_24 = arith.constant 0 : index
    %36 = vector.load %arg5[%c0_23, %c0_24] : memref<4x4xf32, #tpu.memory_space<vmem>>, vector<4x4xf32>
    %37 = vector.extract_strided_slice %36 {offsets = [0, 0], sizes = [4, 1], strides = [1, 1]} : vector<4x4xf32> to vector<4x1xf32>
    %38 = vector.broadcast %37 : vector<4x1xf32> to vector<4x16xf32>
    %39 = vector.broadcast %26 : vector<1x16xf32> to vector<4x16xf32>
    %40 = arith.mulf %38, %39 : vector<4x16xf32>
    %41 = vector.extract_strided_slice %36 {offsets = [0, 1], sizes = [4, 1], strides = [1, 1]} : vector<4x4xf32> to vector<4x1xf32>
    %42 = vector.broadcast %41 : vector<4x1xf32> to vector<4x16xf32>
    %43 = arith.addf %40, %42 : vector<4x16xf32>
    %44 = arith.negf %43 : vector<4x16xf32>
    %45 = math.exp %44 : vector<4x16xf32>
    %cst_25 = arith.constant 1.000000e+00 : f32
    %46 = vector.broadcast %cst_25 : f32 to vector<4x16xf32>
    %47 = arith.addf %46, %45 : vector<4x16xf32>
    %48 = arith.divf %46, %47 : vector<4x16xf32>
    %49 = vector.extract_strided_slice %36 {offsets = [0, 2], sizes = [4, 1], strides = [1, 1]} : vector<4x4xf32> to vector<4x1xf32>
    %50 = vector.broadcast %49 : vector<4x1xf32> to vector<4x16xf32>
    %51 = vector.broadcast %35 : vector<1x16xf32> to vector<4x16xf32>
    %52 = arith.mulf %50, %51 : vector<4x16xf32>
    %53 = vector.extract_strided_slice %36 {offsets = [0, 3], sizes = [4, 1], strides = [1, 1]} : vector<4x4xf32> to vector<4x1xf32>
    %54 = vector.broadcast %53 : vector<4x1xf32> to vector<4x16xf32>
    %55 = arith.addf %52, %54 : vector<4x16xf32>
    %56 = arith.negf %55 : vector<4x16xf32>
    %57 = math.exp %56 : vector<4x16xf32>
    %cst_26 = arith.constant 1.000000e+00 : f32
    %58 = vector.broadcast %cst_26 : f32 to vector<4x16xf32>
    %59 = arith.addf %58, %57 : vector<4x16xf32>
    %60 = arith.divf %58, %59 : vector<4x16xf32>
    %cst_27 = arith.constant dense<0.000000e+00> : vector<4x256xf32>
    %61 = tpu.matmul %48, %2, %cst_27 {dimension_numbers = #tpu.dot_dimension_numbers<[1], [0], [0], [1], [0, 0, 1, 1], [], []>, precision = #tpu.contract_precision<fp32>} : vector<4x16xf32>, vector<16x256xf32>, vector<4x256xf32> -> vector<4x256xf32>
    %cst_28 = arith.constant dense<0.000000e+00> : vector<4x256xf32>
    %62 = tpu.matmul %60, %3, %cst_28 {dimension_numbers = #tpu.dot_dimension_numbers<[1], [0], [0], [1], [0, 0, 1, 1], [], []>, precision = #tpu.contract_precision<fp32>} : vector<4x16xf32>, vector<16x256xf32>, vector<4x256xf32> -> vector<4x256xf32>
    %63 = arith.mulf %1, %61 : vector<4x256xf32>
    %64 = arith.mulf %63, %62 : vector<4x256xf32>
    %c0_29 = arith.constant 0 : index
    %c0_30 = arith.constant 0 : index
    %c0_31 = arith.constant 0 : index
    %65 = vector.load %arg7[%c0_29, %c0_30, %c0_31] : memref<1x4x256xf32, #tpu.memory_space<vmem>>, vector<1x4x256xf32>
    %66 = vector.shape_cast %65 : vector<1x4x256xf32> to vector<4x256xf32>
    %67 = vector.shape_cast %64 : vector<4x256xf32> to vector<1x4x256xf32>
    tpu.vector_store %arg7[%c0_29, %c0_30, %c0_31], %67 {strides = array<i32>} : memref<1x4x256xf32, #tpu.memory_space<vmem>>, vector<1x4x256xf32>,
    return
  }
  func.func @transform_0(%arg0: i32) -> (i32, i32, i32) {
    %c0_i32 = arith.constant 0 : i32
    %c0_i32_0 = arith.constant 0 : i32
    %c0_i32_1 = arith.constant 0 : i32
    return %arg0, %c0_i32, %c0_i32_0 : i32, i32, i32
  }
  func.func @transform_1(%arg0: i32) -> (i32, i32) {
    %c0_i32 = arith.constant 0 : i32
    %c0_i32_0 = arith.constant 0 : i32
    %c0_i32_1 = arith.constant 0 : i32
    return %c0_i32, %c0_i32_0 : i32, i32
  }
  func.func @transform_2(%arg0: i32) -> (i32, i32) {
    %c0_i32 = arith.constant 0 : i32
    %c0_i32_0 = arith.constant 0 : i32
    %c0_i32_1 = arith.constant 0 : i32
    return %c0_i32, %c0_i32_0 : i32, i32
  }
  func.func @transform_3(%arg0: i32) -> (i32, i32) {
    %c0_i32 = arith.constant 0 : i32
    %c0_i32_0 = arith.constant 0 : i32
    %c0_i32_1 = arith.constant 0 : i32
    return %c0_i32, %c0_i32_0 : i32, i32
  }
  func.func @transform_4(%arg0: i32) -> (i32, i32) {
    %c0_i32 = arith.constant 0 : i32
    %c0_i32_0 = arith.constant 0 : i32
    %c0_i32_1 = arith.constant 0 : i32
    return %c0_i32, %c0_i32_0 : i32, i32
  }
  func.func @transform_5(%arg0: i32) -> (i32, i32) {
    %c0_i32 = arith.constant 0 : i32
    %c0_i32_0 = arith.constant 0 : i32
    %c0_i32_1 = arith.constant 0 : i32
    return %c0_i32, %c0_i32_0 : i32, i32
  }
  func.func @transform_6(%arg0: i32) -> (i32, i32, i32) {
    %c0_i32 = arith.constant 0 : i32
    %c0_i32_0 = arith.constant 0 : i32
    %c0_i32_1 = arith.constant 0 : i32
    return %arg0, %c0_i32, %c0_i32_0 : i32, i32, i32
  }
}

</mosaic_0001>

<llo_original>
// kernel: tpu_custom_call.1
$region0: #{tpu_custom_call.1}
  #allocation0 [shape = 'u32[]', space=smem, size = 0x4, offset = 0x4, fixed_abs, tag = 'smem constant byte address 0x4 - core index']
  #allocation1 [shape = 'u32[144,128]{1,0:T(1,128)}', space=vmem, size = 0x12000, scoped, tag = 'internal scratch']
  #allocation2 [shape = 'f32[1,1]{1,0:T(1,128)S(6)}', space=smem, size = 0x200, scoped, tag = 'scoped memory for tpu_custom_call.1']
  %s0 = inlined_call_operand.hbm [shape: f32[2,4,256], index: 0, kind: input, shape index: {}]
  %s1 = inlined_call_operand.hbm [shape: f32[16,256], index: 1, kind: input, shape index: {}]
  %s2 = inlined_call_operand.hbm [shape: f32[16,256], index: 2, kind: input, shape index: {}]
  %s3 = inlined_call_operand.vmem [shape: f32[1,4], index: 3, kind: input, shape index: {}]
  %s4 = inlined_call_operand.vmem [shape: f32[4,4], index: 4, kind: input, shape index: {}]
  %s5 = inlined_call_operand.<no memory space> [shape: f32[1,1], index: 5, kind: input, shape index: {}]
  %s6 = inlined_call_operand.hbm [shape: f32[2,4,256], index: 6, kind: output, shape index: {}]
  %s7 = sld [smem:[#allocation0]]
  $region69: #{tpu_custom_call.1} parent=0
    _
  %s9 = ssub.s32 1, %s7
  %s10 = scalar_select 0, %s9, %s7
  %11 = sst [smem:[#allocation2]] %s5
  $region1: #{tpu_custom_call.1} parent=0
    #allocation3 [shape = 'u8[8192]{0}', space=vmem, size = 0x2000, scoped, tag = 'input window, operand 0']
    #allocation4 [shape = 's32[2]{0}', space=sflag, size = 0x8, scoped, tag = 'scoped memory for tpu_custom_call.1']
    #allocation5 [shape = 's32[2]{0}', space=sflag, size = 0x8, scoped, tag = 'scoped memory for tpu_custom_call.1']
    #allocation6 [shape = 'u8[16384]{0}', space=vmem, size = 0x4000, scoped, tag = 'input window, operand 1, single buffered']
    #allocation7 [shape = 's32[1]{0}', space=sflag, size = 0x4, scoped, tag = 'scoped memory for tpu_custom_call.1']
    #allocation8 [shape = 'u8[16384]{0}', space=vmem, size = 0x4000, scoped, tag = 'input window, operand 2, single buffered']
    #allocation9 [shape = 'u8[8192]{0}', space=vmem, size = 0x2000, scoped, tag = 'output window, operand 0']
    %12 = vsyncpa [#allocation4], 0
    %s13 = scalar_lea.sflag [#allocation4], 1
    %14 = vsyncpa %s13, 0
    %15 = vsyncpa [#allocation7], 0
    %16 = vsyncpa [#allocation5], 0
    %s17 = scalar_lea.sflag [#allocation5], 1
    %18 = vsyncpa %s17, 0
    loop: start=0, step=1, limit=4
    $region2: #{tpu_custom_call.1} parent=1 // loop_pre_header
      _
    $region3: #{tpu_custom_call.1} parent=1 // loop_header
      %s20 = sphi 0, %s24
      %p21 = scmp.ge.s32.totalorder %s20, 4
      %s30 = sphi 0, %s32
      %s33 = sphi 0, %s30
      %s34 = sphi 0, %s33
      %s50 = sphi 0, %s34
      %s54 = sphi 0, %s54
      %s56 = sphi 0, %s54
      %s57 = sphi 0, %s56
      %s71 = sphi 0, %s57
      %s75 = sphi 0, %s75
      %s77 = sphi 0, %s75
      %s78 = sphi 0, %s77
      %s92 = sphi 0, %s78
      %s96 = sphi 0, %s96
      %s98 = sphi 0, %s96
      %s99 = sphi 0, %s98
      %s113 = sphi 0, %s99
      %s117 = sphi 0, %s117
      %s119 = sphi 0, %s117
      %s120 = sphi 0, %s119
      %s134 = sphi 0, %s120
      %s138 = sphi 0, %s138
      %s140 = sphi 0, %s138
      %s141 = sphi 0, %s140
      %s155 = sphi 0, %s141
      %s161 = sphi 0, %s163
      %s164 = sphi 0, %s161
      %s165 = sphi 0, %s164
      %s181 = sphi 0, %s165
    $region4: #{tpu_custom_call.1} parent=1 // loop_header_branch
      %23 = sbr.rel (%p21) target = $region8
    $region5: #{tpu_custom_call.1} parent=1 // loop_body
      %s25 = ssub.s32 %s20, 1
      %s26 = ssub.s32 %s20, 2
      %s27 = sadd.s32 %s20, 1
      %s28 = ssub.s32 %s20, %s27
      %p29 = scmp.eq.s32.totalorder %s28, 0
      %s31 = sadd.s32 %s30, 1
      %s32 = scalar_select %p29, %s30, %s31
      %p35 = pneg %p29
      %p36 = scmp.eq.s32.totalorder %s20, 1
      %p37 = por %p35, %p36
      %p38 = scmp.ne.s32.totalorder %s30, %s33
      %p39 = scmp.eq.s32.totalorder %s20, 0
      %p40 = por %p38, %p39
      %p41 = scmp.ne.s32.totalorder %s30, %s33
      %p42 = scmp.eq.s32.totalorder %s25, 1
      %p43 = por %p41, %p42
      %p44 = scmp.ne.s32.totalorder %s33, %s34
      %p45 = scmp.eq.s32.totalorder %s25, 0
      %p46 = por %p44, %p45
      %p47 = scmp.ne.s32.totalorder %s33, %s34
      %p48 = scmp.eq.s32.totalorder %s26, 1
      %p49 = por %p47, %p48
      %p51 = scmp.ne.s32.totalorder %s34, %s50
      %p52 = scmp.eq.s32.totalorder %s26, 0
      %p53 = por %p51, %p52
      %s55 = sadd.s32 %s54, 1
      %p58 = scmp.eq.s32.totalorder %s20, 1
      %p59 = scmp.ne.s32.totalorder %s54, %s56
      %p60 = scmp.eq.s32.totalorder %s20, 0
      %p61 = por %p59, %p60
      %p62 = scmp.ne.s32.totalorder %s54, %s56
      %p63 = scmp.eq.s32.totalorder %s25, 1
      %p64 = por %p62, %p63
      %p65 = scmp.ne.s32.totalorder %s56, %s57
      %p66 = scmp.eq.s32.totalorder %s25, 0
      %p67 = por %p65, %p66
      %p68 = scmp.ne.s32.totalorder %s56, %s57
      %p69 = scmp.eq.s32.totalorder %s26, 1
      %p70 = por %p68, %p69
      %p72 = scmp.ne.s32.totalorder %s57, %s71
      %p73 = scmp.eq.s32.totalorder %s26, 0
      %p74 = por %p72, %p73
      %s76 = sadd.s32 %s75, 1
      %p79 = scmp.eq.s32.totalorder %s20, 1
      %p80 = scmp.ne.s32.totalorder %s75, %s77
      %p81 = scmp.eq.s32.totalorder %s20, 0
      %p82 = por %p80, %p81
      %p83 = scmp.ne.s32.totalorder %s75, %s77
      %p84 = scmp.eq.s32.totalorder %s25, 1
      %p85 = por %p83, %p84
      %p86 = scmp.ne.s32.totalorder %s77, %s78
      %p87 = scmp.eq.s32.totalorder %s25, 0
      %p88 = por %p86, %p87
      %p89 = scmp.ne.s32.totalorder %s77, %s78
      %p90 = scmp.eq.s32.totalorder %s26, 1
      %p91 = por %p89, %p90
      %p93 = scmp.ne.s32.totalorder %s78, %s92
      %p94 = scmp.eq.s32.totalorder %s26, 0
      %p95 = por %p93, %p94
      %s97 = sadd.s32 %s96, 1
      %p100 = scmp.eq.s32.totalorder %s20, 1
      %p101 = scmp.ne.s32.totalorder %s96, %s98
      %p102 = scmp.eq.s32.totalorder %s20, 0
      %p103 = por %p101, %p102
      %p104 = scmp.ne.s32.totalorder %s96, %s98
      %p105 = scmp.eq.s32.totalorder %s25, 1
      %p106 = por %p104, %p105
      %p107 = scmp.ne.s32.totalorder %s98, %s99
      %p108 = scmp.eq.s32.totalorder %s25, 0
      %p109 = por %p107, %p108
      %p110 = scmp.ne.s32.totalorder %s98, %s99
      %p111 = scmp.eq.s32.totalorder %s26, 1
      %p112 = por %p110, %p111
      %p114 = scmp.ne.s32.totalorder %s99, %s113
      %p115 = scmp.eq.s32.totalorder %s26, 0
      %p116 = por %p114, %p115
      %s118 = sadd.s32 %s117, 1
      %p121 = scmp.eq.s32.totalorder %s20, 1
      %p122 = scmp.ne.s32.totalorder %s117, %s119
      %p123 = scmp.eq.s32.totalorder %s20, 0
      %p124 = por %p122, %p123
      %p125 = scmp.ne.s32.totalorder %s117, %s119
      %p126 = scmp.eq.s32.totalorder %s25, 1
      %p127 = por %p125, %p126
      %p128 = scmp.ne.s32.totalorder %s119, %s120
      %p129 = scmp.eq.s32.totalorder %s25, 0
      %p130 = por %p128, %p129
      %p131 = scmp.ne.s32.totalorder %s119, %s120
      %p132 = scmp.eq.s32.totalorder %s26, 1
      %p133 = por %p131, %p132
      %p135 = scmp.ne.s32.totalorder %s120, %s134
      %p136 = scmp.eq.s32.totalorder %s26, 0
      %p137 = por %p135, %p136
      %s139 = sadd.s32 %s138, 1
      %p142 = scmp.eq.s32.totalorder %s20, 1
      %p143 = scmp.ne.s32.totalorder %s138, %s140
      %p144 = scmp.eq.s32.totalorder %s20, 0
      %p145 = por %p143, %p144
      %p146 = scmp.ne.s32.totalorder %s138, %s140
      %p147 = scmp.eq.s32.totalorder %s25, 1
      %p148 = por %p146, %p147
      %p149 = scmp.ne.s32.totalorder %s140, %s141
      %p150 = scmp.eq.s32.totalorder %s25, 0
      %p151 = por %p149, %p150
      %p152 = scmp.ne.s32.totalorder %s140, %s141
      %p153 = scmp.eq.s32.totalorder %s26, 1
      %p154 = por %p152, %p153
      %p156 = scmp.ne.s32.totalorder %s141, %s155
      %p157 = scmp.eq.s32.totalorder %s26, 0
      %p158 = por %p156, %p157
      %s159 = ssub.s32 %s20, %s27
      %p160 = scmp.eq.s32.totalorder %s159, 0
      %s162 = sadd.s32 %s161, 1
      %s163 = scalar_select %p160, %s161, %s162
      %p166 = pneg %p160
      %p167 = scmp.eq.s32.totalorder %s20, 1
      %p168 = por %p166, %p167
      %p169 = scmp.ne.s32.totalorder %s161, %s164
      %p170 = scmp.eq.s32.totalorder %s20, 0
      %p171 = por %p169, %p170
      %p172 = scmp.ne.s32.totalorder %s161, %s164
      %p173 = scmp.eq.s32.totalorder %s25, 1
      %p174 = por %p172, %p173
      %p175 = scmp.ne.s32.totalorder %s164, %s165
      %p176 = scmp.eq.s32.totalorder %s25, 0
      %p177 = por %p175, %p176
      %p178 = scmp.ne.s32.totalorder %s164, %s165
      %p179 = scmp.eq.s32.totalorder %s26, 1
      %p180 = por %p178, %p179
      %p182 = scmp.ne.s32.totalorder %s165, %s181
      %p183 = scmp.eq.s32.totalorder %s26, 0
      %p184 = por %p182, %p183
      %p185 = scmp.le.s32.totalorder 1, %s20
      %p186 = scmp.lt.s32.totalorder %s20, 3
      %p187 = pnand %p185, %p186
      %p188 = pneg %p187
      // Predicated region
      $region9: #{tpu_custom_call.1} parent=5 // pred_check
        _
      $region10: #{tpu_custom_call.1} parent=5 // pred_check_branch
        %190 = sbr.rel (%p187) target = $region12
      $region11: #{tpu_custom_call.1} parent=5 // pred_region
        %s191 = ssub.s32 %s20, 1
        // Predicated region
        $region13: #{tpu_custom_call.1} parent=11 // pred_check
          %p192 = pneg %p67
        $region14: #{tpu_custom_call.1} parent=11 // pred_check_branch
          %194 = sbr.rel (%p192) target = $region16
        $region15: #{tpu_custom_call.1} parent=11 // pred_region
          %s196 = ssub.s32 512, 512
          %197 = vsyncadd [#allocation7], %s196
          %s198 = sshll.u32 [#allocation6], 4
          %s199 = int_to_ptr.vmem [resolvable:$true] %s198
          %204 = dma.hbm_to_vmem [thread:$0]  %s1, 512, %s199, [#allocation7], 256, 256, 16
        $region16: #{tpu_custom_call.1} parent=11 // pred_fallthru
          _
        // Predicated region
        $region17: #{tpu_custom_call.1} parent=11 // pred_check
          %p205 = pneg %p88
        $region18: #{tpu_custom_call.1} parent=11 // pred_check_branch
          %207 = sbr.rel (%p205) target = $region20
        $region19: #{tpu_custom_call.1} parent=11 // pred_region
          %s209 = ssub.s32 512, 512
          %210 = vsyncadd [#allocation7], %s209
          %s211 = sshll.u32 [#allocation8], 4
          %s212 = int_to_ptr.vmem [resolvable:$true] %s211
          %217 = dma.hbm_to_vmem [thread:$0]  %s2, 512, %s212, [#allocation7], 256, 256, 16
        $region20: #{tpu_custom_call.1} parent=11 // pred_fallthru
          _
        // Predicated region
        $region21: #{tpu_custom_call.1} parent=11 // pred_check
          %p218 = pneg %p109
        $region22: #{tpu_custom_call.1} parent=11 // pred_check_branch
          %220 = sbr.rel (%p218) target = $region24
        $region23: #{tpu_custom_call.1} parent=11 // pred_region
          _
        $region24: #{tpu_custom_call.1} parent=11 // pred_fallthru
          _
        // Predicated region
        $region25: #{tpu_custom_call.1} parent=11 // pred_check
          %p221 = pneg %p130
        $region26: #{tpu_custom_call.1} parent=11 // pred_check_branch
          %223 = sbr.rel (%p221) target = $region28
        $region27: #{tpu_custom_call.1} parent=11 // pred_region
          _
        $region28: #{tpu_custom_call.1} parent=11 // pred_fallthru
          _
        // Predicated region
        $region29: #{tpu_custom_call.1} parent=11 // pred_check
          %p224 = pneg %p151
        $region30: #{tpu_custom_call.1} parent=11 // pred_check_branch
          %226 = sbr.rel (%p224) target = $region32
        $region31: #{tpu_custom_call.1} parent=11 // pred_region
          _
        $region32: #{tpu_custom_call.1} parent=11 // pred_fallthru
          _
      $region12: #{tpu_custom_call.1} parent=5 // pred_fallthru
        _
      %p227 = scmp.lt.s32.totalorder %s20, 2
      // Predicated region
      $region33: #{tpu_custom_call.1} parent=5 // pred_check
        %p228 = pneg %p227
      $region34: #{tpu_custom_call.1} parent=5 // pred_check_branch
        %230 = sbr.rel (%p228) target = $region36
      $region35: #{tpu_custom_call.1} parent=5 // pred_region
        // Predicated region
        $region37: #{tpu_custom_call.1} parent=35 // pred_check
          %p231 = pneg %p40
        $region38: #{tpu_custom_call.1} parent=35 // pred_check_branch
          %233 = sbr.rel (%p231) target = $region40
        $region39: #{tpu_custom_call.1} parent=35 // pred_region
          %s234 = sand.u32 %s30, 1
          %s235 = scalar_lea.sflag [#allocation4], %s234
          %s236 = sand.u32 %s30, 1
          %s237 = smul.addr %s236, 8
          %s238 = scalar_lea.vmem [#allocation3], %s237
          %s240 = ssub.s32 128, 128
          %241 = vsyncadd %s235, %s240
          %s242 = smul.addr %s20, 2
          %s243 = smul.addr %s242, 64
          %s244 = scalar_lea.hbm %s0, %s243
          %s246 = sshll.u32 %s238, 4
          %s247 = int_to_ptr.vmem [resolvable:$true] %s246
          %249 = dma.hbm_to_vmem [thread:$0]  %s244, 128, %s247, %s235
        $region40: #{tpu_custom_call.1} parent=35 // pred_fallthru
          _
      $region36: #{tpu_custom_call.1} parent=5 // pred_fallthru
        _
      %p250 = scmp.le.s32.totalorder 1, %s20
      %p251 = scmp.lt.s32.totalorder %s20, 3
      %p252 = pnand %p250, %p251
      %p253 = pneg %p252
      // Predicated region
      $region41: #{tpu_custom_call.1} parent=5 // pred_check
        _
      $region42: #{tpu_custom_call.1} parent=5 // pred_check_branch
        %255 = sbr.rel (%p252) target = $region44
      $region43: #{tpu_custom_call.1} parent=5 // pred_region
        %s256 = ssub.s32 %s20, 1
        %s257 = sand.u32 %s33, 1
        %s258 = scalar_lea.sflag [#allocation4], %s257
        %s259 = sand.u32 %s33, 1
        %s260 = smul.addr %s259, 8
        %s261 = scalar_lea.vmem [#allocation3], %s260
        // Predicated region
        $region45: #{tpu_custom_call.1} parent=43 // pred_check
          %p262 = pneg %p46
        $region46: #{tpu_custom_call.1} parent=43 // pred_check_branch
          %264 = sbr.rel (%p262) target = $region48
        $region47: #{tpu_custom_call.1} parent=43 // pred_region
          %265 = dma.done %s258, 128
        $region48: #{tpu_custom_call.1} parent=43 // pred_fallthru
          _
        // Predicated region
        $region49: #{tpu_custom_call.1} parent=43 // pred_check
          %p266 = pneg %p67
        $region50: #{tpu_custom_call.1} parent=43 // pred_check_branch
          %268 = sbr.rel (%p266) target = $region52
        $region51: #{tpu_custom_call.1} parent=43 // pred_region
          %269 = dma.done [#allocation7], 512
        $region52: #{tpu_custom_call.1} parent=43 // pred_fallthru
          _
        // Predicated region
        $region53: #{tpu_custom_call.1} parent=43 // pred_check
          %p270 = pneg %p88
        $region54: #{tpu_custom_call.1} parent=43 // pred_check_branch
          %272 = sbr.rel (%p270) target = $region56
        $region55: #{tpu_custom_call.1} parent=43 // pred_region
          %273 = dma.done [#allocation7], 512
        $region56: #{tpu_custom_call.1} parent=43 // pred_fallthru
          _
        %s274 = sand.u32 %s33, 1
        %s275 = scalar_lea.sflag [#allocation4], %s274
        %s276 = sand.u32 %s33, 1
        %s277 = smul.addr %s276, 8
        %s278 = scalar_lea.vmem [#allocation3], %s277
        %p279 = pneg %p46
        %p280 = pneg %p43
        %p281 = pneg %p67
        %p282 = pneg %p64
        %p283 = pneg %p88
        %p284 = pneg %p85
        %p285 = pneg %p109
        %p286 = pneg %p106
        %p287 = pneg %p130
        %p288 = pneg %p127
        %p289 = pneg %p151
        %p290 = pneg %p148
        %p291 = pneg %p177
        %p292 = pneg %p174
        %s293 = sand.u32 %s164, 1
        %s294 = scalar_lea.sflag [#allocation5], %s293
        %s295 = sand.u32 %s164, 1
        %s296 = smul.addr %s295, 8
        %s297 = scalar_lea.vmem [#allocation9], %s296
        %v298 = vld [vmem:[%s261] sm:$0xff]
        %v299 = vld [vmem:[#allocation6] sm:$0xff]
        %v300 = vld [vmem:[#allocation6 + $0x8] sm:$0xff]
        %v301 = vld [vmem:[#allocation6 + $0x10] sm:$0xff]
        %v302 = vld [vmem:[#allocation6 + $0x18] sm:$0xff]
        %v303 = vld [vmem:[#allocation8] sm:$0xff]
        %v304 = vld [vmem:[#allocation8 + $0x8] sm:$0xff]
        %v305 = vld [vmem:[#allocation8 + $0x10] sm:$0xff]
        %v306 = vld [vmem:[#allocation8 + $0x18] sm:$0xff]
        %v308 = vcombine.high %v298, %v298
        %310 = vmatprep.subr.mxu0 0.0
        %311 = vmatpush1.xpose.msra.mxu0 0.0
        %312 = vmatprep.subr.mxu0 0.0
        %313 = vmatpush1.xpose.msra.mxu0 0.0
        %314 = vmatprep.subr.mxu0 0.0
        %315 = vmatpush1.xpose.msra.mxu0 0.0
        %316 = vmatprep.subr.mxu0 0.0
        %317 = vmatpush1.xpose.msra.mxu0 0.0
        %318 = vmatprep.subr.mxu0 0.0
        %319 = vmatpush1.xpose.msra.mxu0 0.0
        %320 = vmatprep.subr.mxu0 0.0
        %321 = vmatpush1.xpose.msra.mxu0 0.0
        %322 = vmatprep.subr.mxu0 0.0
        %323 = vmatpush1.xpose.msra.mxu0 0.0
        %324 = vmatprep.subr.mxu0 0.0
        %325 = vmatpush1.xpose.msra.mxu0 0.0
        %326 = vmatprep.subr.mxu0 0.0
        %327 = vmatpush1.xpose.msra.mxu0 0.0
        %328 = vmatprep.subr.mxu0 0.0
        %329 = vmatpush1.xpose.msra.mxu0 0.0
        %330 = vmatprep.subr.mxu0 0.0
        %331 = vmatpush1.xpose.msra.mxu0 0.0
        %332 = vmatprep.subr.mxu0 0.0
        %333 = vmatpush1.xpose.msra.mxu0 0.0
        %334 = vmatprep.subr.mxu0 0.0
        %335 = vmatpush1.xpose.msra.mxu0 0.0
        %336 = vmatprep.subr.mxu0 0.0
        %337 = vmatpush1.xpose.msra.mxu0 0.0
        %v338 = vand.u32 %v302, 4294901760
        %339 = vmatprep.subr.mxu0 %v338
        %v340 = vand.u32 %v301, 4294901760
        %341 = vmatpush1.xpose.msra.mxu0 %v340
        %v342 = vand.u32 %v300, 4294901760
        %343 = vmatprep.subr.mxu0 %v342
        %v344 = vand.u32 %v299, 4294901760
        %345 = vmatpush1.xpose.msra.mxu0 %v344
        %346 = vmatprep.subr.mxu0 0.0
        %347 = vmatpush2.xpose.msra.mxu0 0.0
        %348 = vmatprep.subr.mxu0 0.0
        %349 = vmatpush2.xpose.msra.mxu0 0.0
        %350 = vmatprep.subr.mxu0 0.0
        %351 = vmatpush2.xpose.msra.mxu0 0.0
        %352 = vmatprep.subr.mxu0 0.0
        %353 = vmatpush2.xpose.msra.mxu0 0.0
        %354 = vmatprep.subr.mxu0 0.0
        %355 = vmatpush2.xpose.msra.mxu0 0.0
        %356 = vmatprep.subr.mxu0 0.0
        %357 = vmatpush2.xpose.msra.mxu0 0.0
        %358 = vmatprep.subr.mxu0 0.0
        %359 = vmatpush2.xpose.msra.mxu0 0.0
        %360 = vmatprep.subr.mxu0 0.0
        %361 = vmatpush2.xpose.msra.mxu0 0.0
        %362 = vmatprep.subr.mxu0 0.0
        %363 = vmatpush2.xpose.msra.mxu0 0.0
        %364 = vmatprep.subr.mxu0 0.0
        %365 = vmatpush2.xpose.msra.mxu0 0.0
        %366 = vmatprep.subr.mxu0 0.0
        %367 = vmatpush2.xpose.msra.mxu0 0.0
        %368 = vmatprep.subr.mxu0 0.0
        %369 = vmatpush2.xpose.msra.mxu0 0.0
        %370 = vmatprep.subr.mxu0 0.0
        %371 = vmatpush2.xpose.msra.mxu0 0.0
        %372 = vmatprep.subr.mxu0 0.0
        %373 = vmatpush2.xpose.msra.mxu0 0.0
        %374 = vmatprep.subr.mxu0 0.0
        %375 = vmatpush2.xpose.msra.mxu0 0.0
        %376 = vmatprep.subr.mxu0 0.0
        %377 = vmatpush2.xpose.msra.mxu0 0.0
        %v378 = vand.u32 %v308, 4294901760
        %v379 = vsub.f32 %v308, %v378
        %v380 = vand.u32 %v379, 4294901760
        %v381 = vsub.f32 %v379, %v380
        %v382 = vand.u32 %v381, 4294901760
        %383 = vmatprep.mubr.f32.mxu0 %v382
        %v384 = vand.u32 %v298, 4294901760
        %v385 = vsub.f32 %v298, %v384
        %v386 = vand.u32 %v385, 4294901760
        %v387 = vsub.f32 %v385, %v386
        %v388 = vand.u32 %v387, 4294901760
        %389 = vmatmul.mubr.f32.gmra.mxu0 %v388
        %v390 = vpop.f32.mrf.mxu0
        %v391 = vadd.f32 0.0, %v390
        %v392 = vpop.f32.mrf.mxu0
        %393 = vdwg.mxu0
        %394 = vmatprep.subr.mxu0 0.0
        %395 = vmatpush1.xpose.msra.mxu0 0.0
        %396 = vmatprep.subr.mxu0 0.0
        %397 = vmatpush1.xpose.msra.mxu0 0.0
        %398 = vmatprep.subr.mxu0 0.0
        %399 = vmatpush1.xpose.msra.mxu0 0.0
        %400 = vmatprep.subr.mxu0 0.0
        %401 = vmatpush1.xpose.msra.mxu0 0.0
        %402 = vmatprep.subr.mxu0 0.0
        %403 = vmatpush1.xpose.msra.mxu0 0.0
        %404 = vmatprep.subr.mxu0 0.0
        %405 = vmatpush1.xpose.msra.mxu0 0.0
        %406 = vmatprep.subr.mxu0 0.0
        %407 = vmatpush1.xpose.msra.mxu0 0.0
        %408 = vmatprep.subr.mxu0 0.0
        %409 = vmatpush1.xpose.msra.mxu0 0.0
        %410 = vmatprep.subr.mxu0 0.0
        %411 = vmatpush1.xpose.msra.mxu0 0.0
        %412 = vmatprep.subr.mxu0 0.0
        %413 = vmatpush1.xpose.msra.mxu0 0.0
        %414 = vmatprep.subr.mxu0 0.0
        %415 = vmatpush1.xpose.msra.mxu0 0.0
        %416 = vmatprep.subr.mxu0 0.0
        %417 = vmatpush1.xpose.msra.mxu0 0.0
        %418 = vmatprep.subr.mxu0 0.0
        %419 = vmatpush1.xpose.msra.mxu0 0.0
        %420 = vmatprep.subr.mxu0 0.0
        %421 = vmatpush1.xpose.msra.mxu0 0.0
        %v422 = vand.u32 %v302, 4294901760
        %v423 = vsub.f32 %v302, %v422
        %v424 = vand.u32 %v423, 4294901760
        %v425 = vsub.f32 %v423, %v424
        %v426 = vand.u32 %v425, 4294901760
        %427 = vmatprep.subr.mxu0 %v426
        %v428 = vand.u32 %v301, 4294901760
        %v429 = vsub.f32 %v301, %v428
        %v430 = vand.u32 %v429, 4294901760
        %v431 = vsub.f32 %v429, %v430
        %v432 = vand.u32 %v431, 4294901760
        %433 = vmatpush1.xpose.msra.mxu0 %v432
        %v434 = vand.u32 %v300, 4294901760
        %v435 = vsub.f32 %v300, %v434
        %v436 = vand.u32 %v435, 4294901760
        %v437 = vsub.f32 %v435, %v436
        %v438 = vand.u32 %v437, 4294901760
        %439 = vmatprep.subr.mxu0 %v438
        %v440 = vand.u32 %v299, 4294901760
        %v441 = vsub.f32 %v299, %v440
        %v442 = vand.u32 %v441, 4294901760
        %v443 = vsub.f32 %v441, %v442
        %v444 = vand.u32 %v443, 4294901760
        %445 = vmatpush1.xpose.msra.mxu0 %v444
        %446 = vmatprep.subr.mxu0 0.0
        %447 = vmatpush2.xpose.msra.mxu0 0.0
        %448 = vmatprep.subr.mxu0 0.0
        %449 = vmatpush2.xpose.msra.mxu0 0.0
        %450 = vmatprep.subr.mxu0 0.0
        %451 = vmatpush2.xpose.msra.mxu0 0.0
        %452 = vmatprep.subr.mxu0 0.0
        %453 = vmatpush2.xpose.msra.mxu0 0.0
        %454 = vmatprep.subr.mxu0 0.0
        %455 = vmatpush2.xpose.msra.mxu0 0.0
        %456 = vmatprep.subr.mxu0 0.0
        %457 = vmatpush2.xpose.msra.mxu0 0.0
        %458 = vmatprep.subr.mxu0 0.0
        %459 = vmatpush2.xpose.msra.mxu0 0.0
        %460 = vmatprep.subr.mxu0 0.0
        %461 = vmatpush2.xpose.msra.mxu0 0.0
        %462 = vmatprep.subr.mxu0 0.0
        %463 = vmatpush2.xpose.msra.mxu0 0.0
        %464 = vmatprep.subr.mxu0 0.0
        %465 = vmatpush2.xpose.msra.mxu0 0.0
        %466 = vmatprep.subr.mxu0 0.0
        %467 = vmatpush2.xpose.msra.mxu0 0.0
        %468 = vmatprep.subr.mxu0 0.0
        %469 = vmatpush2.xpose.msra.mxu0 0.0
        %470 = vmatprep.subr.mxu0 0.0
        %471 = vmatpush2.xpose.msra.mxu0 0.0
        %472 = vmatprep.subr.mxu0 0.0
        %473 = vmatpush2.xpose.msra.mxu0 0.0
        %474 = vmatprep.subr.mxu0 0.0
        %475 = vmatpush2.xpose.msra.mxu0 0.0
        %476 = vmatprep.subr.mxu0 0.0
        %477 = vmatpush2.xpose.msra.mxu0 0.0
        %v478 = vand.u32 %v308, 4294901760
        %479 = vmatprep.mubr.f32.mxu0 %v478
        %v480 = vand.u32 %v298, 4294901760
        %481 = vmatmul.mubr.f32.gmra.mxu0 %v480
        %v482 = vpop.f32.mrf.mxu0
        %v483 = vadd.f32 %v391, %v482
        %v484 = vpop.f32.mrf.mxu0
        %485 = vdwg.mxu0
        %486 = vmatprep.subr.mxu0 0.0
        %487 = vmatpush1.xpose.msra.mxu0 0.0
        %488 = vmatprep.subr.mxu0 0.0
        %489 = vmatpush1.xpose.msra.mxu0 0.0
        %490 = vmatprep.subr.mxu0 0.0
        %491 = vmatpush1.xpose.msra.mxu0 0.0
        %492 = vmatprep.subr.mxu0 0.0
        %493 = vmatpush1.xpose.msra.mxu0 0.0
        %494 = vmatprep.subr.mxu0 0.0
        %495 = vmatpush1.xpose.msra.mxu0 0.0
        %496 = vmatprep.subr.mxu0 0.0
        %497 = vmatpush1.xpose.msra.mxu0 0.0
        %498 = vmatprep.subr.mxu0 0.0
        %499 = vmatpush1.xpose.msra.mxu0 0.0
        %500 = vmatprep.subr.mxu0 0.0
        %501 = vmatpush1.xpose.msra.mxu0 0.0
        %502 = vmatprep.subr.mxu0 0.0
        %503 = vmatpush1.xpose.msra.mxu0 0.0
        %504 = vmatprep.subr.mxu0 0.0
        %505 = vmatpush1.xpose.msra.mxu0 0.0
        %506 = vmatprep.subr.mxu0 0.0
        %507 = vmatpush1.xpose.msra.mxu0 0.0
        %508 = vmatprep.subr.mxu0 0.0
        %509 = vmatpush1.xpose.msra.mxu0 0.0
        %510 = vmatprep.subr.mxu0 0.0
        %511 = vmatpush1.xpose.msra.mxu0 0.0
        %512 = vmatprep.subr.mxu0 0.0
        %513 = vmatpush1.xpose.msra.mxu0 0.0
        %v514 = vand.u32 %v302, 4294901760
        %v515 = vsub.f32 %v302, %v514
        %516 = vmatprep.subr.mxu0 %v515
        %v517 = vand.u32 %v301, 4294901760
        %v518 = vsub.f32 %v301, %v517
        %519 = vmatpush1.xpose.msra.mxu0 %v518
        %v520 = vand.u32 %v300, 4294901760
        %v521 = vsub.f32 %v300, %v520
        %522 = vmatprep.subr.mxu0 %v521
        %v523 = vand.u32 %v299, 4294901760
        %v524 = vsub.f32 %v299, %v523
        %525 = vmatpush1.xpose.msra.mxu0 %v524
        %526 = vmatprep.subr.mxu0 0.0
        %527 = vmatpush2.xpose.msra.mxu0 0.0
        %528 = vmatprep.subr.mxu0 0.0
        %529 = vmatpush2.xpose.msra.mxu0 0.0
        %530 = vmatprep.subr.mxu0 0.0
        %531 = vmatpush2.xpose.msra.mxu0 0.0
        %532 = vmatprep.subr.mxu0 0.0
        %533 = vmatpush2.xpose.msra.mxu0 0.0
        %534 = vmatprep.subr.mxu0 0.0
        %535 = vmatpush2.xpose.msra.mxu0 0.0
        %536 = vmatprep.subr.mxu0 0.0
        %537 = vmatpush2.xpose.msra.mxu0 0.0
        %538 = vmatprep.subr.mxu0 0.0
        %539 = vmatpush2.xpose.msra.mxu0 0.0
        %540 = vmatprep.subr.mxu0 0.0
        %541 = vmatpush2.xpose.msra.mxu0 0.0
        %542 = vmatprep.subr.mxu0 0.0
        %543 = vmatpush2.xpose.msra.mxu0 0.0
        %544 = vmatprep.subr.mxu0 0.0
        %545 = vmatpush2.xpose.msra.mxu0 0.0
        %546 = vmatprep.subr.mxu0 0.0
        %547 = vmatpush2.xpose.msra.mxu0 0.0
        %548 = vmatprep.subr.mxu0 0.0
        %549 = vmatpush2.xpose.msra.mxu0 0.0
        %550 = vmatprep.subr.mxu0 0.0
        %551 = vmatpush2.xpose.msra.mxu0 0.0
        %552 = vmatprep.subr.mxu0 0.0
        %553 = vmatpush2.xpose.msra.mxu0 0.0
        %554 = vmatprep.subr.mxu0 0.0
        %555 = vmatpush2.xpose.msra.mxu0 0.0
        %556 = vmatprep.subr.mxu0 0.0
        %557 = vmatpush2.xpose.msra.mxu0 0.0
        %v558 = vand.u32 %v308, 4294901760
        %v559 = vsub.f32 %v308, %v558
        %560 = vmatprep.mubr.f32.mxu0 %v559
        %v561 = vand.u32 %v298, 4294901760
        %v562 = vsub.f32 %v298, %v561
        %563 = vmatmul.mubr.f32.gmra.mxu0 %v562
        %v564 = vpop.f32.mrf.mxu0
        %v565 = vadd.f32 %v483, %v564
        %v566 = vpop.f32.mrf.mxu0
        %567 = vdwg.mxu0
        %568 = vmatprep.subr.mxu0 0.0
        %569 = vmatpush1.xpose.msra.mxu0 0.0
        %570 = vmatprep.subr.mxu0 0.0
        %571 = vmatpush1.xpose.msra.mxu0 0.0
        %572 = vmatprep.subr.mxu0 0.0
        %573 = vmatpush1.xpose.msra.mxu0 0.0
        %574 = vmatprep.subr.mxu0 0.0
        %575 = vmatpush1.xpose.msra.mxu0 0.0
        %576 = vmatprep.subr.mxu0 0.0
        %577 = vmatpush1.xpose.msra.mxu0 0.0
        %578 = vmatprep.subr.mxu0 0.0
        %579 = vmatpush1.xpose.msra.mxu0 0.0
        %580 = vmatprep.subr.mxu0 0.0
        %581 = vmatpush1.xpose.msra.mxu0 0.0
        %582 = vmatprep.subr.mxu0 0.0
        %583 = vmatpush1.xpose.msra.mxu0 0.0
        %584 = vmatprep.subr.mxu0 0.0
        %585 = vmatpush1.xpose.msra.mxu0 0.0
        %586 = vmatprep.subr.mxu0 0.0
        %587 = vmatpush1.xpose.msra.mxu0 0.0
        %588 = vmatprep.subr.mxu0 0.0
        %589 = vmatpush1.xpose.msra.mxu0 0.0
        %590 = vmatprep.subr.mxu0 0.0
        %591 = vmatpush1.xpose.msra.mxu0 0.0
        %592 = vmatprep.subr.mxu0 0.0
        %593 = vmatpush1.xpose.msra.mxu0 0.0
        %594 = vmatprep.subr.mxu0 0.0
        %595 = vmatpush1.xpose.msra.mxu0 0.0
        %v596 = vand.u32 %v302, 4294901760
        %597 = vmatprep.subr.mxu0 %v596
        %v598 = vand.u32 %v301, 4294901760
        %599 = vmatpush1.xpose.msra.mxu0 %v598
        %v600 = vand.u32 %v300, 4294901760
        %601 = vmatprep.subr.mxu0 %v600
        %v602 = vand.u32 %v299, 4294901760
        %603 = vmatpush1.xpose.msra.mxu0 %v602
        %604 = vmatprep.subr.mxu0 0.0
        %605 = vmatpush2.xpose.msra.mxu0 0.0
        %606 = vmatprep.subr.mxu0 0.0
        %607 = vmatpush2.xpose.msra.mxu0 0.0
        %608 = vmatprep.subr.mxu0 0.0
        %609 = vmatpush2.xpose.msra.mxu0 0.0
        %610 = vmatprep.subr.mxu0 0.0
        %611 = vmatpush2.xpose.msra.mxu0 0.0
        %612 = vmatprep.subr.mxu0 0.0
        %613 = vmatpush2.xpose.msra.mxu0 0.0
        %614 = vmatprep.subr.mxu0 0.0
        %615 = vmatpush2.xpose.msra.mxu0 0.0
        %616 = vmatprep.subr.mxu0 0.0
        %617 = vmatpush2.xpose.msra.mxu0 0.0
        %618 = vmatprep.subr.mxu0 0.0
        %619 = vmatpush2.xpose.msra.mxu0 0.0
        %620 = vmatprep.subr.mxu0 0.0
        %621 = vmatpush2.xpose.msra.mxu0 0.0
        %622 = vmatprep.subr.mxu0 0.0
        %623 = vmatpush2.xpose.msra.mxu0 0.0
        %624 = vmatprep.subr.mxu0 0.0
        %625 = vmatpush2.xpose.msra.mxu0 0.0
        %626 = vmatprep.subr.mxu0 0.0
        %627 = vmatpush2.xpose.msra.mxu0 0.0
        %628 = vmatprep.subr.mxu0 0.0
        %629 = vmatpush2.xpose.msra.mxu0 0.0
        %630 = vmatprep.subr.mxu0 0.0
        %631 = vmatpush2.xpose.msra.mxu0 0.0
        %632 = vmatprep.subr.mxu0 0.0
        %633 = vmatpush2.xpose.msra.mxu0 0.0
        %634 = vmatprep.subr.mxu0 0.0
        %635 = vmatpush2.xpose.msra.mxu0 0.0
        %v636 = vand.u32 %v308, 4294901760
        %v637 = vsub.f32 %v308, %v636
        %v638 = vand.u32 %v637, 4294901760
        %639 = vmatprep.mubr.f32.mxu0 %v638
        %v640 = vand.u32 %v298, 4294901760
        %v641 = vsub.f32 %v298, %v640
        %v642 = vand.u32 %v641, 4294901760
        %643 = vmatmul.mubr.f32.gmra.mxu0 %v642
        %v644 = vpop.f32.mrf.mxu0
        %v645 = vadd.f32 %v565, %v644
        %v646 = vpop.f32.mrf.mxu0
        %647 = vdwg.mxu0
        %648 = vmatprep.subr.mxu0 0.0
        %649 = vmatpush1.xpose.msra.mxu0 0.0
        %650 = vmatprep.subr.mxu0 0.0
        %651 = vmatpush1.xpose.msra.mxu0 0.0
        %652 = vmatprep.subr.mxu0 0.0
        %653 = vmatpush1.xpose.msra.mxu0 0.0
        %654 = vmatprep.subr.mxu0 0.0
        %655 = vmatpush1.xpose.msra.mxu0 0.0
        %656 = vmatprep.subr.mxu0 0.0
        %657 = vmatpush1.xpose.msra.mxu0 0.0
        %658 = vmatprep.subr.mxu0 0.0
        %659 = vmatpush1.xpose.msra.mxu0 0.0
        %660 = vmatprep.subr.mxu0 0.0
        %661 = vmatpush1.xpose.msra.mxu0 0.0
        %662 = vmatprep.subr.mxu0 0.0
        %663 = vmatpush1.xpose.msra.mxu0 0.0
        %664 = vmatprep.subr.mxu0 0.0
        %665 = vmatpush1.xpose.msra.mxu0 0.0
        %666 = vmatprep.subr.mxu0 0.0
        %667 = vmatpush1.xpose.msra.mxu0 0.0
        %668 = vmatprep.subr.mxu0 0.0
        %669 = vmatpush1.xpose.msra.mxu0 0.0
        %670 = vmatprep.subr.mxu0 0.0
        %671 = vmatpush1.xpose.msra.mxu0 0.0
        %672 = vmatprep.subr.mxu0 0.0
        %673 = vmatpush1.xpose.msra.mxu0 0.0
        %674 = vmatprep.subr.mxu0 0.0
        %675 = vmatpush1.xpose.msra.mxu0 0.0
        %v676 = vand.u32 %v302, 4294901760
        %v677 = vsub.f32 %v302, %v676
        %v678 = vand.u32 %v677, 4294901760
        %679 = vmatprep.subr.mxu0 %v678
        %v680 = vand.u32 %v301, 4294901760
        %v681 = vsub.f32 %v301, %v680
        %v682 = vand.u32 %v681, 4294901760
        %683 = vmatpush1.xpose.msra.mxu0 %v682
        %v684 = vand.u32 %v300, 4294901760
        %v685 = vsub.f32 %v300, %v684
        %v686 = vand.u32 %v685, 4294901760
        %687 = vmatprep.subr.mxu0 %v686
        %v688 = vand.u32 %v299, 4294901760
        %v689 = vsub.f32 %v299, %v688
        %v690 = vand.u32 %v689, 4294901760
        %691 = vmatpush1.xpose.msra.mxu0 %v690
        %692 = vmatprep.subr.mxu0 0.0
        %693 = vmatpush2.xpose.msra.mxu0 0.0
        %694 = vmatprep.subr.mxu0 0.0
        %695 = vmatpush2.xpose.msra.mxu0 0.0
        %696 = vmatprep.subr.mxu0 0.0
        %697 = vmatpush2.xpose.msra.mxu0 0.0
        %698 = vmatprep.subr.mxu0 0.0
        %699 = vmatpush2.xpose.msra.mxu0 0.0
        %700 = vmatprep.subr.mxu0 0.0
        %701 = vmatpush2.xpose.msra.mxu0 0.0
        %702 = vmatprep.subr.mxu0 0.0
        %703 = vmatpush2.xpose.msra.mxu0 0.0
        %704 = vmatprep.subr.mxu0 0.0
        %705 = vmatpush2.xpose.msra.mxu0 0.0
        %706 = vmatprep.subr.mxu0 0.0
        %707 = vmatpush2.xpose.msra.mxu0 0.0
        %708 = vmatprep.subr.mxu0 0.0
        %709 = vmatpush2.xpose.msra.mxu0 0.0
        %710 = vmatprep.subr.mxu0 0.0
        %711 = vmatpush2.xpose.msra.mxu0 0.0
        %712 = vmatprep.subr.mxu0 0.0
        %713 = vmatpush2.xpose.msra.mxu0 0.0
        %714 = vmatprep.subr.mxu0 0.0
        %715 = vmatpush2.xpose.msra.mxu0 0.0
        %716 = vmatprep.subr.mxu0 0.0
        %717 = vmatpush2.xpose.msra.mxu0 0.0
        %718 = vmatprep.subr.mxu0 0.0
        %719 = vmatpush2.xpose.msra.mxu0 0.0
        %720 = vmatprep.subr.mxu0 0.0
        %721 = vmatpush2.xpose.msra.mxu0 0.0
        %722 = vmatprep.subr.mxu0 0.0
        %723 = vmatpush2.xpose.msra.mxu0 0.0
        %v724 = vand.u32 %v308, 4294901760
        %725 = vmatprep.mubr.f32.mxu0 %v724
        %v726 = vand.u32 %v298, 4294901760
        %727 = vmatmul.mubr.f32.gmra.mxu0 %v726
        %v728 = vpop.f32.mrf.mxu0
        %v729 = vadd.f32 %v645, %v728
        %v730 = vpop.f32.mrf.mxu0
        %731 = vdwg.mxu0
        %732 = vmatprep.subr.mxu0 0.0
        %733 = vmatpush1.xpose.msra.mxu0 0.0
        %734 = vmatprep.subr.mxu0 0.0
        %735 = vmatpush1.xpose.msra.mxu0 0.0
        %736 = vmatprep.subr.mxu0 0.0
        %737 = vmatpush1.xpose.msra.mxu0 0.0
        %738 = vmatprep.subr.mxu0 0.0
        %739 = vmatpush1.xpose.msra.mxu0 0.0
        %740 = vmatprep.subr.mxu0 0.0
        %741 = vmatpush1.xpose.msra.mxu0 0.0
        %742 = vmatprep.subr.mxu0 0.0
        %743 = vmatpush1.xpose.msra.mxu0 0.0
        %744 = vmatprep.subr.mxu0 0.0
        %745 = vmatpush1.xpose.msra.mxu0 0.0
        %746 = vmatprep.subr.mxu0 0.0
        %747 = vmatpush1.xpose.msra.mxu0 0.0
        %748 = vmatprep.subr.mxu0 0.0
        %749 = vmatpush1.xpose.msra.mxu0 0.0
        %750 = vmatprep.subr.mxu0 0.0
        %751 = vmatpush1.xpose.msra.mxu0 0.0
        %752 = vmatprep.subr.mxu0 0.0
        %753 = vmatpush1.xpose.msra.mxu0 0.0
        %754 = vmatprep.subr.mxu0 0.0
        %755 = vmatpush1.xpose.msra.mxu0 0.0
        %756 = vmatprep.subr.mxu0 0.0
        %757 = vmatpush1.xpose.msra.mxu0 0.0
        %758 = vmatprep.subr.mxu0 0.0
        %759 = vmatpush1.xpose.msra.mxu0 0.0
        %v760 = vand.u32 %v302, 4294901760
        %761 = vmatprep.subr.mxu0 %v760
        %v762 = vand.u32 %v301, 4294901760
        %763 = vmatpush1.xpose.msra.mxu0 %v762
        %v764 = vand.u32 %v300, 4294901760
        %765 = vmatprep.subr.mxu0 %v764
        %v766 = vand.u32 %v299, 4294901760
        %767 = vmatpush1.xpose.msra.mxu0 %v766
        %768 = vmatprep.subr.mxu0 0.0
        %769 = vmatpush2.xpose.msra.mxu0 0.0
        %770 = vmatprep.subr.mxu0 0.0
        %771 = vmatpush2.xpose.msra.mxu0 0.0
        %772 = vmatprep.subr.mxu0 0.0
        %773 = vmatpush2.xpose.msra.mxu0 0.0
        %774 = vmatprep.subr.mxu0 0.0
        %775 = vmatpush2.xpose.msra.mxu0 0.0
        %776 = vmatprep.subr.mxu0 0.0
        %777 = vmatpush2.xpose.msra.mxu0 0.0
        %778 = vmatprep.subr.mxu0 0.0
        %779 = vmatpush2.xpose.msra.mxu0 0.0
        %780 = vmatprep.subr.mxu0 0.0
        %781 = vmatpush2.xpose.msra.mxu0 0.0
        %782 = vmatprep.subr.mxu0 0.0
        %783 = vmatpush2.xpose.msra.mxu0 0.0
        %784 = vmatprep.subr.mxu0 0.0
        %785 = vmatpush2.xpose.msra.mxu0 0.0
        %786 = vmatprep.subr.mxu0 0.0
        %787 = vmatpush2.xpose.msra.mxu0 0.0
        %788 = vmatprep.subr.mxu0 0.0
        %789 = vmatpush2.xpose.msra.mxu0 0.0
        %790 = vmatprep.subr.mxu0 0.0
        %791 = vmatpush2.xpose.msra.mxu0 0.0
        %792 = vmatprep.subr.mxu0 0.0
        %793 = vmatpush2.xpose.msra.mxu0 0.0
        %794 = vmatprep.subr.mxu0 0.0
        %795 = vmatpush2.xpose.msra.mxu0 0.0
        %796 = vmatprep.subr.mxu0 0.0
        %797 = vmatpush2.xpose.msra.mxu0 0.0
        %798 = vmatprep.subr.mxu0 0.0
        %799 = vmatpush2.xpose.msra.mxu0 0.0
        %v800 = vand.u32 %v308, 4294901760
        %801 = vmatprep.mubr.f32.mxu0 %v800
        %v802 = vand.u32 %v298, 4294901760
        %803 = vmatmul.mubr.f32.gmra.mxu0 %v802
        %v804 = vpop.f32.mrf.mxu0
        %v805 = vadd.f32 %v729, %v804
        %v806 = vpop.f32.mrf.mxu0
        %807 = vdwg.mxu0
        %v808 = vmul.f32 %v805, 0.0625
        %809 = vmatprep.subr.mxu0 0.0
        %810 = vmatpush1.xpose.msra.mxu0 0.0
        %811 = vmatprep.subr.mxu0 0.0
        %812 = vmatpush1.xpose.msra.mxu0 0.0
        %813 = vmatprep.subr.mxu0 0.0
        %814 = vmatpush1.xpose.msra.mxu0 0.0
        %815 = vmatprep.subr.mxu0 0.0
        %816 = vmatpush1.xpose.msra.mxu0 0.0
        %817 = vmatprep.subr.mxu0 0.0
        %818 = vmatpush1.xpose.msra.mxu0 0.0
        %819 = vmatprep.subr.mxu0 0.0
        %820 = vmatpush1.xpose.msra.mxu0 0.0
        %821 = vmatprep.subr.mxu0 0.0
        %822 = vmatpush1.xpose.msra.mxu0 0.0
        %823 = vmatprep.subr.mxu0 0.0
        %824 = vmatpush1.xpose.msra.mxu0 0.0
        %825 = vmatprep.subr.mxu0 0.0
        %826 = vmatpush1.xpose.msra.mxu0 0.0
        %827 = vmatprep.subr.mxu0 0.0
        %828 = vmatpush1.xpose.msra.mxu0 0.0
        %829 = vmatprep.subr.mxu0 0.0
        %830 = vmatpush1.xpose.msra.mxu0 0.0
        %831 = vmatprep.subr.mxu0 0.0
        %832 = vmatpush1.xpose.msra.mxu0 0.0
        %833 = vmatprep.subr.mxu0 0.0
        %834 = vmatpush1.xpose.msra.mxu0 0.0
        %835 = vmatprep.subr.mxu0 0.0
        %836 = vmatpush1.xpose.msra.mxu0 0.0
        %v837 = vand.u32 %v306, 4294901760
        %838 = vmatprep.subr.mxu0 %v837
        %v839 = vand.u32 %v305, 4294901760
        %840 = vmatpush1.xpose.msra.mxu0 %v839
        %v841 = vand.u32 %v304, 4294901760
        %842 = vmatprep.subr.mxu0 %v841
        %v843 = vand.u32 %v303, 4294901760
        %844 = vmatpush1.xpose.msra.mxu0 %v843
        %845 = vmatprep.subr.mxu0 0.0
        %846 = vmatpush2.xpose.msra.mxu0 0.0
        %847 = vmatprep.subr.mxu0 0.0
        %848 = vmatpush2.xpose.msra.mxu0 0.0
        %849 = vmatprep.subr.mxu0 0.0
        %850 = vmatpush2.xpose.msra.mxu0 0.0
        %851 = vmatprep.subr.mxu0 0.0
        %852 = vmatpush2.xpose.msra.mxu0 0.0
        %853 = vmatprep.subr.mxu0 0.0
        %854 = vmatpush2.xpose.msra.mxu0 0.0
        %855 = vmatprep.subr.mxu0 0.0
        %856 = vmatpush2.xpose.msra.mxu0 0.0
        %857 = vmatprep.subr.mxu0 0.0
        %858 = vmatpush2.xpose.msra.mxu0 0.0
        %859 = vmatprep.subr.mxu0 0.0
        %860 = vmatpush2.xpose.msra.mxu0 0.0
        %861 = vmatprep.subr.mxu0 0.0
        %862 = vmatpush2.xpose.msra.mxu0 0.0
        %863 = vmatprep.subr.mxu0 0.0
        %864 = vmatpush2.xpose.msra.mxu0 0.0
        %865 = vmatprep.subr.mxu0 0.0
        %866 = vmatpush2.xpose.msra.mxu0 0.0
        %867 = vmatprep.subr.mxu0 0.0
        %868 = vmatpush2.xpose.msra.mxu0 0.0
        %869 = vmatprep.subr.mxu0 0.0
        %870 = vmatpush2.xpose.msra.mxu0 0.0
        %871 = vmatprep.subr.mxu0 0.0
        %872 = vmatpush2.xpose.msra.mxu0 0.0
        %873 = vmatprep.subr.mxu0 0.0
        %874 = vmatpush2.xpose.msra.mxu0 0.0
        %875 = vmatprep.subr.mxu0 0.0
        %876 = vmatpush2.xpose.msra.mxu0 0.0
        %v877 = vand.u32 %v308, 4294901760
        %v878 = vsub.f32 %v308, %v877
        %v879 = vand.u32 %v878, 4294901760
        %v880 = vsub.f32 %v878, %v879
        %v881 = vand.u32 %v880, 4294901760
        %882 = vmatprep.mubr.f32.mxu0 %v881
        %v883 = vand.u32 %v298, 4294901760
        %v884 = vsub.f32 %v298, %v883
        %v885 = vand.u32 %v884, 4294901760
        %v886 = vsub.f32 %v884, %v885
        %v887 = vand.u32 %v886, 4294901760
        %888 = vmatmul.mubr.f32.gmra.mxu0 %v887
        %v889 = vpop.f32.mrf.mxu0
        %v890 = vadd.f32 0.0, %v889
        %v891 = vpop.f32.mrf.mxu0
        %892 = vdwg.mxu0
        %893 = vmatprep.subr.mxu0 0.0
        %894 = vmatpush1.xpose.msra.mxu0 0.0
        %895 = vmatprep.subr.mxu0 0.0
        %896 = vmatpush1.xpose.msra.mxu0 0.0
        %897 = vmatprep.subr.mxu0 0.0
        %898 = vmatpush1.xpose.msra.mxu0 0.0
        %899 = vmatprep.subr.mxu0 0.0
        %900 = vmatpush1.xpose.msra.mxu0 0.0
        %901 = vmatprep.subr.mxu0 0.0
        %902 = vmatpush1.xpose.msra.mxu0 0.0
        %903 = vmatprep.subr.mxu0 0.0
        %904 = vmatpush1.xpose.msra.mxu0 0.0
        %905 = vmatprep.subr.mxu0 0.0
        %906 = vmatpush1.xpose.msra.mxu0 0.0
        %907 = vmatprep.subr.mxu0 0.0
        %908 = vmatpush1.xpose.msra.mxu0 0.0
        %909 = vmatprep.subr.mxu0 0.0
        %910 = vmatpush1.xpose.msra.mxu0 0.0
        %911 = vmatprep.subr.mxu0 0.0
        %912 = vmatpush1.xpose.msra.mxu0 0.0
        %913 = vmatprep.subr.mxu0 0.0
        %914 = vmatpush1.xpose.msra.mxu0 0.0
        %915 = vmatprep.subr.mxu0 0.0
        %916 = vmatpush1.xpose.msra.mxu0 0.0
        %917 = vmatprep.subr.mxu0 0.0
        %918 = vmatpush1.xpose.msra.mxu0 0.0
        %919 = vmatprep.subr.mxu0 0.0
        %920 = vmatpush1.xpose.msra.mxu0 0.0
        %v921 = vand.u32 %v306, 4294901760
        %v922 = vsub.f32 %v306, %v921
        %v923 = vand.u32 %v922, 4294901760
        %v924 = vsub.f32 %v922, %v923
        %v925 = vand.u32 %v924, 4294901760
        %926 = vmatprep.subr.mxu0 %v925
        %v927 = vand.u32 %v305, 4294901760
        %v928 = vsub.f32 %v305, %v927
        %v929 = vand.u32 %v928, 4294901760
        %v930 = vsub.f32 %v928, %v929
        %v931 = vand.u32 %v930, 4294901760
        %932 = vmatpush1.xpose.msra.mxu0 %v931
        %v933 = vand.u32 %v304, 4294901760
        %v934 = vsub.f32 %v304, %v933
        %v935 = vand.u32 %v934, 4294901760
        %v936 = vsub.f32 %v934, %v935
        %v937 = vand.u32 %v936, 4294901760
        %938 = vmatprep.subr.mxu0 %v937
        %v939 = vand.u32 %v303, 4294901760
        %v940 = vsub.f32 %v303, %v939
        %v941 = vand.u32 %v940, 4294901760
        %v942 = vsub.f32 %v940, %v941
        %v943 = vand.u32 %v942, 4294901760
        %944 = vmatpush1.xpose.msra.mxu0 %v943
        %945 = vmatprep.subr.mxu0 0.0
        %946 = vmatpush2.xpose.msra.mxu0 0.0
        %947 = vmatprep.subr.mxu0 0.0
        %948 = vmatpush2.xpose.msra.mxu0 0.0
        %949 = vmatprep.subr.mxu0 0.0
        %950 = vmatpush2.xpose.msra.mxu0 0.0
        %951 = vmatprep.subr.mxu0 0.0
        %952 = vmatpush2.xpose.msra.mxu0 0.0
        %953 = vmatprep.subr.mxu0 0.0
        %954 = vmatpush2.xpose.msra.mxu0 0.0
        %955 = vmatprep.subr.mxu0 0.0
        %956 = vmatpush2.xpose.msra.mxu0 0.0
        %957 = vmatprep.subr.mxu0 0.0
        %958 = vmatpush2.xpose.msra.mxu0 0.0
        %959 = vmatprep.subr.mxu0 0.0
        %960 = vmatpush2.xpose.msra.mxu0 0.0
        %961 = vmatprep.subr.mxu0 0.0
        %962 = vmatpush2.xpose.msra.mxu0 0.0
        %963 = vmatprep.subr.mxu0 0.0
        %964 = vmatpush2.xpose.msra.mxu0 0.0
        %965 = vmatprep.subr.mxu0 0.0
        %966 = vmatpush2.xpose.msra.mxu0 0.0
        %967 = vmatprep.subr.mxu0 0.0
        %968 = vmatpush2.xpose.msra.mxu0 0.0
        %969 = vmatprep.subr.mxu0 0.0
        %970 = vmatpush2.xpose.msra.mxu0 0.0
        %971 = vmatprep.subr.mxu0 0.0
        %972 = vmatpush2.xpose.msra.mxu0 0.0
        %973 = vmatprep.subr.mxu0 0.0
        %974 = vmatpush2.xpose.msra.mxu0 0.0
        %975 = vmatprep.subr.mxu0 0.0
        %976 = vmatpush2.xpose.msra.mxu0 0.0
        %v977 = vand.u32 %v308, 4294901760
        %978 = vmatprep.mubr.f32.mxu0 %v977
        %v979 = vand.u32 %v298, 4294901760
        %980 = vmatmul.mubr.f32.gmra.mxu0 %v979
        %v981 = vpop.f32.mrf.mxu0
        %v982 = vadd.f32 %v890, %v981
        %v983 = vpop.f32.mrf.mxu0
        %984 = vdwg.mxu0
        %985 = vmatprep.subr.mxu0 0.0
        %986 = vmatpush1.xpose.msra.mxu0 0.0
        %987 = vmatprep.subr.mxu0 0.0
        %988 = vmatpush1.xpose.msra.mxu0 0.0
        %989 = vmatprep.subr.mxu0 0.0
        %990 = vmatpush1.xpose.msra.mxu0 0.0
        %991 = vmatprep.subr.mxu0 0.0
        %992 = vmatpush1.xpose.msra.mxu0 0.0
        %993 = vmatprep.subr.mxu0 0.0
        %994 = vmatpush1.xpose.msra.mxu0 0.0
        %995 = vmatprep.subr.mxu0 0.0
        %996 = vmatpush1.xpose.msra.mxu0 0.0
        %997 = vmatprep.subr.mxu0 0.0
        %998 = vmatpush1.xpose.msra.mxu0 0.0
        %999 = vmatprep.subr.mxu0 0.0
        %1000 = vmatpush1.xpose.msra.mxu0 0.0
        %1001 = vmatprep.subr.mxu0 0.0
        %1002 = vmatpush1.xpose.msra.mxu0 0.0
        %1003 = vmatprep.subr.mxu0 0.0
        %1004 = vmatpush1.xpose.msra.mxu0 0.0
        %1005 = vmatprep.subr.mxu0 0.0
        %1006 = vmatpush1.xpose.msra.mxu0 0.0
        %1007 = vmatprep.subr.mxu0 0.0
        %1008 = vmatpush1.xpose.msra.mxu0 0.0
        %1009 = vmatprep.subr.mxu0 0.0
        %1010 = vmatpush1.xpose.msra.mxu0 0.0
        %1011 = vmatprep.subr.mxu0 0.0
        %1012 = vmatpush1.xpose.msra.mxu0 0.0
        %v1013 = vand.u32 %v306, 4294901760
        %v1014 = vsub.f32 %v306, %v1013
        %1015 = vmatprep.subr.mxu0 %v1014
        %v1016 = vand.u32 %v305, 4294901760
        %v1017 = vsub.f32 %v305, %v1016
        %1018 = vmatpush1.xpose.msra.mxu0 %v1017
        %v1019 = vand.u32 %v304, 4294901760
        %v1020 = vsub.f32 %v304, %v1019
        %1021 = vmatprep.subr.mxu0 %v1020
        %v1022 = vand.u32 %v303, 4294901760
        %v1023 = vsub.f32 %v303, %v1022
        %1024 = vmatpush1.xpose.msra.mxu0 %v1023
        %1025 = vmatprep.subr.mxu0 0.0
        %1026 = vmatpush2.xpose.msra.mxu0 0.0
        %1027 = vmatprep.subr.mxu0 0.0
        %1028 = vmatpush2.xpose.msra.mxu0 0.0
        %1029 = vmatprep.subr.mxu0 0.0
        %1030 = vmatpush2.xpose.msra.mxu0 0.0
        %1031 = vmatprep.subr.mxu0 0.0
        %1032 = vmatpush2.xpose.msra.mxu0 0.0
        %1033 = vmatprep.subr.mxu0 0.0
        %1034 = vmatpush2.xpose.msra.mxu0 0.0
        %1035 = vmatprep.subr.mxu0 0.0
        %1036 = vmatpush2.xpose.msra.mxu0 0.0
        %1037 = vmatprep.subr.mxu0 0.0
        %1038 = vmatpush2.xpose.msra.mxu0 0.0
        %1039 = vmatprep.subr.mxu0 0.0
        %1040 = vmatpush2.xpose.msra.mxu0 0.0
        %1041 = vmatprep.subr.mxu0 0.0
        %1042 = vmatpush2.xpose.msra.mxu0 0.0
        %1043 = vmatprep.subr.mxu0 0.0
        %1044 = vmatpush2.xpose.msra.mxu0 0.0
        %1045 = vmatprep.subr.mxu0 0.0
        %1046 = vmatpush2.xpose.msra.mxu0 0.0
        %1047 = vmatprep.subr.mxu0 0.0
        %1048 = vmatpush2.xpose.msra.mxu0 0.0
        %1049 = vmatprep.subr.mxu0 0.0
        %1050 = vmatpush2.xpose.msra.mxu0 0.0
        %1051 = vmatprep.subr.mxu0 0.0
        %1052 = vmatpush2.xpose.msra.mxu0 0.0
        %1053 = vmatprep.subr.mxu0 0.0
        %1054 = vmatpush2.xpose.msra.mxu0 0.0
        %1055 = vmatprep.subr.mxu0 0.0
        %1056 = vmatpush2.xpose.msra.mxu0 0.0
        %v1057 = vand.u32 %v308, 4294901760
        %v1058 = vsub.f32 %v308, %v1057
        %1059 = vmatprep.mubr.f32.mxu0 %v1058
        %v1060 = vand.u32 %v298, 4294901760
        %v1061 = vsub.f32 %v298, %v1060
        %1062 = vmatmul.mubr.f32.gmra.mxu0 %v1061
        %v1063 = vpop.f32.mrf.mxu0
        %v1064 = vadd.f32 %v982, %v1063
        %v1065 = vpop.f32.mrf.mxu0
        %1066 = vdwg.mxu0
        %1067 = vmatprep.subr.mxu0 0.0
        %1068 = vmatpush1.xpose.msra.mxu0 0.0
        %1069 = vmatprep.subr.mxu0 0.0
        %1070 = vmatpush1.xpose.msra.mxu0 0.0
        %1071 = vmatprep.subr.mxu0 0.0
        %1072 = vmatpush1.xpose.msra.mxu0 0.0
        %1073 = vmatprep.subr.mxu0 0.0
        %1074 = vmatpush1.xpose.msra.mxu0 0.0
        %1075 = vmatprep.subr.mxu0 0.0
        %1076 = vmatpush1.xpose.msra.mxu0 0.0
        %1077 = vmatprep.subr.mxu0 0.0
        %1078 = vmatpush1.xpose.msra.mxu0 0.0
        %1079 = vmatprep.subr.mxu0 0.0
        %1080 = vmatpush1.xpose.msra.mxu0 0.0
        %1081 = vmatprep.subr.mxu0 0.0
        %1082 = vmatpush1.xpose.msra.mxu0 0.0
        %1083 = vmatprep.subr.mxu0 0.0
        %1084 = vmatpush1.xpose.msra.mxu0 0.0
        %1085 = vmatprep.subr.mxu0 0.0
        %1086 = vmatpush1.xpose.msra.mxu0 0.0
        %1087 = vmatprep.subr.mxu0 0.0
        %1088 = vmatpush1.xpose.msra.mxu0 0.0
        %1089 = vmatprep.subr.mxu0 0.0
        %1090 = vmatpush1.xpose.msra.mxu0 0.0
        %1091 = vmatprep.subr.mxu0 0.0
        %1092 = vmatpush1.xpose.msra.mxu0 0.0
        %1093 = vmatprep.subr.mxu0 0.0
        %1094 = vmatpush1.xpose.msra.mxu0 0.0
        %v1095 = vand.u32 %v306, 4294901760
        %1096 = vmatprep.subr.mxu0 %v1095
        %v1097 = vand.u32 %v305, 4294901760
        %1098 = vmatpush1.xpose.msra.mxu0 %v1097
        %v1099 = vand.u32 %v304, 4294901760
        %1100 = vmatprep.subr.mxu0 %v1099
        %v1101 = vand.u32 %v303, 4294901760
        %1102 = vmatpush1.xpose.msra.mxu0 %v1101
        %1103 = vmatprep.subr.mxu0 0.0
        %1104 = vmatpush2.xpose.msra.mxu0 0.0
        %1105 = vmatprep.subr.mxu0 0.0
        %1106 = vmatpush2.xpose.msra.mxu0 0.0
        %1107 = vmatprep.subr.mxu0 0.0
        %1108 = vmatpush2.xpose.msra.mxu0 0.0
        %1109 = vmatprep.subr.mxu0 0.0
        %1110 = vmatpush2.xpose.msra.mxu0 0.0
        %1111 = vmatprep.subr.mxu0 0.0
        %1112 = vmatpush2.xpose.msra.mxu0 0.0
        %1113 = vmatprep.subr.mxu0 0.0
        %1114 = vmatpush2.xpose.msra.mxu0 0.0
        %1115 = vmatprep.subr.mxu0 0.0
        %1116 = vmatpush2.xpose.msra.mxu0 0.0
        %1117 = vmatprep.subr.mxu0 0.0
        %1118 = vmatpush2.xpose.msra.mxu0 0.0
        %1119 = vmatprep.subr.mxu0 0.0
        %1120 = vmatpush2.xpose.msra.mxu0 0.0
        %1121 = vmatprep.subr.mxu0 0.0
        %1122 = vmatpush2.xpose.msra.mxu0 0.0
        %1123 = vmatprep.subr.mxu0 0.0
        %1124 = vmatpush2.xpose.msra.mxu0 0.0
        %1125 = vmatprep.subr.mxu0 0.0
        %1126 = vmatpush2.xpose.msra.mxu0 0.0
        %1127 = vmatprep.subr.mxu0 0.0
        %1128 = vmatpush2.xpose.msra.mxu0 0.0
        %1129 = vmatprep.subr.mxu0 0.0
        %1130 = vmatpush2.xpose.msra.mxu0 0.0
        %1131 = vmatprep.subr.mxu0 0.0
        %1132 = vmatpush2.xpose.msra.mxu0 0.0
        %1133 = vmatprep.subr.mxu0 0.0
        %1134 = vmatpush2.xpose.msra.mxu0 0.0
        %v1135 = vand.u32 %v308, 4294901760
        %v1136 = vsub.f32 %v308, %v1135
        %v1137 = vand.u32 %v1136, 4294901760
        %1138 = vmatprep.mubr.f32.mxu0 %v1137
        %v1139 = vand.u32 %v298, 4294901760
        %v1140 = vsub.f32 %v298, %v1139
        %v1141 = vand.u32 %v1140, 4294901760
        %1142 = vmatmul.mubr.f32.gmra.mxu0 %v1141
        %v1143 = vpop.f32.mrf.mxu0
        %v1144 = vadd.f32 %v1064, %v1143
        %v1145 = vpop.f32.mrf.mxu0
        %1146 = vdwg.mxu0
        %1147 = vmatprep.subr.mxu0 0.0
        %1148 = vmatpush1.xpose.msra.mxu0 0.0
        %1149 = vmatprep.subr.mxu0 0.0
        %1150 = vmatpush1.xpose.msra.mxu0 0.0
        %1151 = vmatprep.subr.mxu0 0.0
        %1152 = vmatpush1.xpose.msra.mxu0 0.0
        %1153 = vmatprep.subr.mxu0 0.0
        %1154 = vmatpush1.xpose.msra.mxu0 0.0
        %1155 = vmatprep.subr.mxu0 0.0
        %1156 = vmatpush1.xpose.msra.mxu0 0.0
        %1157 = vmatprep.subr.mxu0 0.0
        %1158 = vmatpush1.xpose.msra.mxu0 0.0
        %1159 = vmatprep.subr.mxu0 0.0
        %1160 = vmatpush1.xpose.msra.mxu0 0.0
        %1161 = vmatprep.subr.mxu0 0.0
        %1162 = vmatpush1.xpose.msra.mxu0 0.0
        %1163 = vmatprep.subr.mxu0 0.0
        %1164 = vmatpush1.xpose.msra.mxu0 0.0
        %1165 = vmatprep.subr.mxu0 0.0
        %1166 = vmatpush1.xpose.msra.mxu0 0.0
        %1167 = vmatprep.subr.mxu0 0.0
        %1168 = vmatpush1.xpose.msra.mxu0 0.0
        %1169 = vmatprep.subr.mxu0 0.0
        %1170 = vmatpush1.xpose.msra.mxu0 0.0
        %1171 = vmatprep.subr.mxu0 0.0
        %1172 = vmatpush1.xpose.msra.mxu0 0.0
        %1173 = vmatprep.subr.mxu0 0.0
        %1174 = vmatpush1.xpose.msra.mxu0 0.0
        %v1175 = vand.u32 %v306, 4294901760
        %v1176 = vsub.f32 %v306, %v1175
        %v1177 = vand.u32 %v1176, 4294901760
        %1178 = vmatprep.subr.mxu0 %v1177
        %v1179 = vand.u32 %v305, 4294901760
        %v1180 = vsub.f32 %v305, %v1179
        %v1181 = vand.u32 %v1180, 4294901760
        %1182 = vmatpush1.xpose.msra.mxu0 %v1181
        %v1183 = vand.u32 %v304, 4294901760
        %v1184 = vsub.f32 %v304, %v1183
        %v1185 = vand.u32 %v1184, 4294901760
        %1186 = vmatprep.subr.mxu0 %v1185
        %v1187 = vand.u32 %v303, 4294901760
        %v1188 = vsub.f32 %v303, %v1187
        %v1189 = vand.u32 %v1188, 4294901760
        %1190 = vmatpush1.xpose.msra.mxu0 %v1189
        %1191 = vmatprep.subr.mxu0 0.0
        %1192 = vmatpush2.xpose.msra.mxu0 0.0
        %1193 = vmatprep.subr.mxu0 0.0
        %1194 = vmatpush2.xpose.msra.mxu0 0.0
        %1195 = vmatprep.subr.mxu0 0.0
        %1196 = vmatpush2.xpose.msra.mxu0 0.0
        %1197 = vmatprep.subr.mxu0 0.0
        %1198 = vmatpush2.xpose.msra.mxu0 0.0
        %1199 = vmatprep.subr.mxu0 0.0
        %1200 = vmatpush2.xpose.msra.mxu0 0.0
        %1201 = vmatprep.subr.mxu0 0.0
        %1202 = vmatpush2.xpose.msra.mxu0 0.0
        %1203 = vmatprep.subr.mxu0 0.0
        %1204 = vmatpush2.xpose.msra.mxu0 0.0
        %1205 = vmatprep.subr.mxu0 0.0
        %1206 = vmatpush2.xpose.msra.mxu0 0.0
        %1207 = vmatprep.subr.mxu0 0.0
        %1208 = vmatpush2.xpose.msra.mxu0 0.0
        %1209 = vmatprep.subr.mxu0 0.0
        %1210 = vmatpush2.xpose.msra.mxu0 0.0
        %1211 = vmatprep.subr.mxu0 0.0
        %1212 = vmatpush2.xpose.msra.mxu0 0.0
        %1213 = vmatprep.subr.mxu0 0.0
        %1214 = vmatpush2.xpose.msra.mxu0 0.0
        %1215 = vmatprep.subr.mxu0 0.0
        %1216 = vmatpush2.xpose.msra.mxu0 0.0
        %1217 = vmatprep.subr.mxu0 0.0
        %1218 = vmatpush2.xpose.msra.mxu0 0.0
        %1219 = vmatprep.subr.mxu0 0.0
        %1220 = vmatpush2.xpose.msra.mxu0 0.0
        %1221 = vmatprep.subr.mxu0 0.0
        %1222 = vmatpush2.xpose.msra.mxu0 0.0
        %v1223 = vand.u32 %v308, 4294901760
        %1224 = vmatprep.mubr.f32.mxu0 %v1223
        %v1225 = vand.u32 %v298, 4294901760
        %1226 = vmatmul.mubr.f32.gmra.mxu0 %v1225
        %v1227 = vpop.f32.mrf.mxu0
        %v1228 = vadd.f32 %v1144, %v1227
        %v1229 = vpop.f32.mrf.mxu0
        %1230 = vdwg.mxu0
        %1231 = vmatprep.subr.mxu0 0.0
        %1232 = vmatpush1.xpose.msra.mxu0 0.0
        %1233 = vmatprep.subr.mxu0 0.0
        %1234 = vmatpush1.xpose.msra.mxu0 0.0
        %1235 = vmatprep.subr.mxu0 0.0
        %1236 = vmatpush1.xpose.msra.mxu0 0.0
        %1237 = vmatprep.subr.mxu0 0.0
        %1238 = vmatpush1.xpose.msra.mxu0 0.0
        %1239 = vmatprep.subr.mxu0 0.0
        %1240 = vmatpush1.xpose.msra.mxu0 0.0
        %1241 = vmatprep.subr.mxu0 0.0
        %1242 = vmatpush1.xpose.msra.mxu0 0.0
        %1243 = vmatprep.subr.mxu0 0.0
        %1244 = vmatpush1.xpose.msra.mxu0 0.0
        %1245 = vmatprep.subr.mxu0 0.0
        %1246 = vmatpush1.xpose.msra.mxu0 0.0
        %1247 = vmatprep.subr.mxu0 0.0
        %1248 = vmatpush1.xpose.msra.mxu0 0.0
        %1249 = vmatprep.subr.mxu0 0.0
        %1250 = vmatpush1.xpose.msra.mxu0 0.0
        %1251 = vmatprep.subr.mxu0 0.0
        %1252 = vmatpush1.xpose.msra.mxu0 0.0
        %1253 = vmatprep.subr.mxu0 0.0
        %1254 = vmatpush1.xpose.msra.mxu0 0.0
        %1255 = vmatprep.subr.mxu0 0.0
        %1256 = vmatpush1.xpose.msra.mxu0 0.0
        %1257 = vmatprep.subr.mxu0 0.0
        %1258 = vmatpush1.xpose.msra.mxu0 0.0
        %v1259 = vand.u32 %v306, 4294901760
        %1260 = vmatprep.subr.mxu0 %v1259
        %v1261 = vand.u32 %v305, 4294901760
        %1262 = vmatpush1.xpose.msra.mxu0 %v1261
        %v1263 = vand.u32 %v304, 4294901760
        %1264 = vmatprep.subr.mxu0 %v1263
        %v1265 = vand.u32 %v303, 4294901760
        %1266 = vmatpush1.xpose.msra.mxu0 %v1265
        %1267 = vmatprep.subr.mxu0 0.0
        %1268 = vmatpush2.xpose.msra.mxu0 0.0
        %1269 = vmatprep.subr.mxu0 0.0
        %1270 = vmatpush2.xpose.msra.mxu0 0.0
        %1271 = vmatprep.subr.mxu0 0.0
        %1272 = vmatpush2.xpose.msra.mxu0 0.0
        %1273 = vmatprep.subr.mxu0 0.0
        %1274 = vmatpush2.xpose.msra.mxu0 0.0
        %1275 = vmatprep.subr.mxu0 0.0
        %1276 = vmatpush2.xpose.msra.mxu0 0.0
        %1277 = vmatprep.subr.mxu0 0.0
        %1278 = vmatpush2.xpose.msra.mxu0 0.0
        %1279 = vmatprep.subr.mxu0 0.0
        %1280 = vmatpush2.xpose.msra.mxu0 0.0
        %1281 = vmatprep.subr.mxu0 0.0
        %1282 = vmatpush2.xpose.msra.mxu0 0.0
        %1283 = vmatprep.subr.mxu0 0.0
        %1284 = vmatpush2.xpose.msra.mxu0 0.0
        %1285 = vmatprep.subr.mxu0 0.0
        %1286 = vmatpush2.xpose.msra.mxu0 0.0
        %1287 = vmatprep.subr.mxu0 0.0
        %1288 = vmatpush2.xpose.msra.mxu0 0.0
        %1289 = vmatprep.subr.mxu0 0.0
        %1290 = vmatpush2.xpose.msra.mxu0 0.0
        %1291 = vmatprep.subr.mxu0 0.0
        %1292 = vmatpush2.xpose.msra.mxu0 0.0
        %1293 = vmatprep.subr.mxu0 0.0
        %1294 = vmatpush2.xpose.msra.mxu0 0.0
        %1295 = vmatprep.subr.mxu0 0.0
        %1296 = vmatpush2.xpose.msra.mxu0 0.0
        %1297 = vmatprep.subr.mxu0 0.0
        %1298 = vmatpush2.xpose.msra.mxu0 0.0
        %v1299 = vand.u32 %v308, 4294901760
        %1300 = vmatprep.mubr.f32.mxu0 %v1299
        %v1301 = vand.u32 %v298, 4294901760
        %1302 = vmatmul.mubr.f32.gmra.mxu0 %v1301
        %v1303 = vpop.f32.mrf.mxu0
        %v1304 = vadd.f32 %v1228, %v1303
        %v1305 = vpop.f32.mrf.mxu0
        %1306 = vdwg.mxu0
        %v1307 = vmul.f32 %v1304, 0.0625
        %v1308 = vld [vmem:[%s3] sm:$0x1]
        %s1309 = sld [smem:[#allocation2]]
        %v1310 = vstv %s1309
        %vm1311 = vcmask 31744
        %v1313 = vsel %vm1311, %v1308, 0
        %vm1315 = vcmask 1043456
        %v1317 = vsel %vm1315, %v808, 0
        %1319 = vmatprep.subr.mxu0 0.0
        %1320 = vmatpush1.msra.mxu0 0.0
        %1321 = vmatprep.subr.mxu0 0.0
        %1322 = vmatpush1.msra.mxu0 0.0
        %1323 = vmatprep.subr.mxu0 0.0
        %1324 = vmatpush1.msra.mxu0 0.0
        %1325 = vmatprep.subr.mxu0 0.0
        %1326 = vmatpush1.msra.mxu0 0.0
        %1327 = vmatprep.subr.mxu0 0.0
        %1328 = vmatpush1.msra.mxu0 0.0
        %1329 = vmatprep.subr.mxu0 0.0
        %1330 = vmatpush1.msra.mxu0 0.0
        %1331 = vmatprep.subr.mxu0 0.0
        %1332 = vmatpush1.msra.mxu0 0.0
        %1333 = vmatprep.subr.mxu0 0.0
        %1334 = vmatpush1.msra.mxu0 0.0
        %1335 = vmatprep.subr.mxu0 0.0
        %1336 = vmatpush1.msra.mxu0 0.0
        %1337 = vmatprep.subr.mxu0 0.0
        %1338 = vmatpush1.msra.mxu0 0.0
        %1339 = vmatprep.subr.mxu0 0.0
        %1340 = vmatpush1.msra.mxu0 0.0
        %1341 = vmatprep.subr.mxu0 0.0
        %1342 = vmatpush1.msra.mxu0 0.0
        %1343 = vmatprep.subr.mxu0 0.0
        %1344 = vmatpush1.msra.mxu0 0.0
        %1345 = vmatprep.subr.mxu0 0.0
        %1346 = vmatpush1.msra.mxu0 0.0
        %1347 = vmatprep.subr.mxu0 0.0
        %1348 = vmatpush1.msra.mxu0 0.0
        %1349 = vmatprep.subr.mxu0 0.0
        %v1350 = vand.u32 %v1317, 4294901760
        %1351 = vmatpush1.msra.mxu0 %v1350
        %1352 = vmatprep.subr.mxu0 0.0
        %1353 = vmatpush2.msra.mxu0 0.0
        %1354 = vmatprep.subr.mxu0 0.0
        %1355 = vmatpush2.msra.mxu0 0.0
        %1356 = vmatprep.subr.mxu0 0.0
        %1357 = vmatpush2.msra.mxu0 0.0
        %1358 = vmatprep.subr.mxu0 0.0
        %1359 = vmatpush2.msra.mxu0 0.0
        %1360 = vmatprep.subr.mxu0 0.0
        %1361 = vmatpush2.msra.mxu0 0.0
        %1362 = vmatprep.subr.mxu0 0.0
        %1363 = vmatpush2.msra.mxu0 0.0
        %1364 = vmatprep.subr.mxu0 0.0
        %1365 = vmatpush2.msra.mxu0 0.0
        %1366 = vmatprep.subr.mxu0 0.0
        %1367 = vmatpush2.msra.mxu0 0.0
        %1368 = vmatprep.subr.mxu0 0.0
        %1369 = vmatpush2.msra.mxu0 0.0
        %1370 = vmatprep.subr.mxu0 0.0
        %1371 = vmatpush2.msra.mxu0 0.0
        %1372 = vmatprep.subr.mxu0 0.0
        %1373 = vmatpush2.msra.mxu0 0.0
        %1374 = vmatprep.subr.mxu0 0.0
        %1375 = vmatpush2.msra.mxu0 0.0
        %1376 = vmatprep.subr.mxu0 0.0
        %1377 = vmatpush2.msra.mxu0 0.0
        %1378 = vmatprep.subr.mxu0 0.0
        %1379 = vmatpush2.msra.mxu0 0.0
        %1380 = vmatprep.subr.mxu0 0.0
        %1381 = vmatpush2.msra.mxu0 0.0
        %1382 = vmatprep.subr.mxu0 0.0
        %1383 = vmatpush2.msra.mxu0 0.0
        %1384 = vmatprep.mubr.f32.mxu0 0.0
        %v1385 = vand.u32 %v1313, 4294901760
        %v1386 = vsub.f32 %v1313, %v1385
        %v1387 = vand.u32 %v1386, 4294901760
        %v1388 = vsub.f32 %v1386, %v1387
        %v1389 = vand.u32 %v1388, 4294901760
        %1390 = vmatmul.mubr.f32.gmra.mxu0 %v1389
        %v1391 = vpop.f32.mrf.mxu0
        %v1392 = vadd.f32 %v1310, %v1391
        %v1393 = vpop.f32.mrf.mxu0
        %1394 = vdwg.mxu0
        %1395 = vmatprep.subr.mxu0 0.0
        %1396 = vmatpush1.msra.mxu0 0.0
        %1397 = vmatprep.subr.mxu0 0.0
        %1398 = vmatpush1.msra.mxu0 0.0
        %1399 = vmatprep.subr.mxu0 0.0
        %1400 = vmatpush1.msra.mxu0 0.0
        %1401 = vmatprep.subr.mxu0 0.0
        %1402 = vmatpush1.msra.mxu0 0.0
        %1403 = vmatprep.subr.mxu0 0.0
        %1404 = vmatpush1.msra.mxu0 0.0
        %1405 = vmatprep.subr.mxu0 0.0
        %1406 = vmatpush1.msra.mxu0 0.0
        %1407 = vmatprep.subr.mxu0 0.0
        %1408 = vmatpush1.msra.mxu0 0.0
        %1409 = vmatprep.subr.mxu0 0.0
        %1410 = vmatpush1.msra.mxu0 0.0
        %1411 = vmatprep.subr.mxu0 0.0
        %1412 = vmatpush1.msra.mxu0 0.0
        %1413 = vmatprep.subr.mxu0 0.0
        %1414 = vmatpush1.msra.mxu0 0.0
        %1415 = vmatprep.subr.mxu0 0.0
        %1416 = vmatpush1.msra.mxu0 0.0
        %1417 = vmatprep.subr.mxu0 0.0
        %1418 = vmatpush1.msra.mxu0 0.0
        %1419 = vmatprep.subr.mxu0 0.0
        %1420 = vmatpush1.msra.mxu0 0.0
        %1421 = vmatprep.subr.mxu0 0.0
        %1422 = vmatpush1.msra.mxu0 0.0
        %1423 = vmatprep.subr.mxu0 0.0
        %1424 = vmatpush1.msra.mxu0 0.0
        %1425 = vmatprep.subr.mxu0 0.0
        %v1426 = vand.u32 %v1317, 4294901760
        %v1427 = vsub.f32 %v1317, %v1426
        %v1428 = vand.u32 %v1427, 4294901760
        %v1429 = vsub.f32 %v1427, %v1428
        %v1430 = vand.u32 %v1429, 4294901760
        %1431 = vmatpush1.msra.mxu0 %v1430
        %1432 = vmatprep.subr.mxu0 0.0
        %1433 = vmatpush2.msra.mxu0 0.0
        %1434 = vmatprep.subr.mxu0 0.0
        %1435 = vmatpush2.msra.mxu0 0.0
        %1436 = vmatprep.subr.mxu0 0.0
        %1437 = vmatpush2.msra.mxu0 0.0
        %1438 = vmatprep.subr.mxu0 0.0
        %1439 = vmatpush2.msra.mxu0 0.0
        %1440 = vmatprep.subr.mxu0 0.0
        %1441 = vmatpush2.msra.mxu0 0.0
        %1442 = vmatprep.subr.mxu0 0.0
        %1443 = vmatpush2.msra.mxu0 0.0
        %1444 = vmatprep.subr.mxu0 0.0
        %1445 = vmatpush2.msra.mxu0 0.0
        %1446 = vmatprep.subr.mxu0 0.0
        %1447 = vmatpush2.msra.mxu0 0.0
        %1448 = vmatprep.subr.mxu0 0.0
        %1449 = vmatpush2.msra.mxu0 0.0
        %1450 = vmatprep.subr.mxu0 0.0
        %1451 = vmatpush2.msra.mxu0 0.0
        %1452 = vmatprep.subr.mxu0 0.0
        %1453 = vmatpush2.msra.mxu0 0.0
        %1454 = vmatprep.subr.mxu0 0.0
        %1455 = vmatpush2.msra.mxu0 0.0
        %1456 = vmatprep.subr.mxu0 0.0
        %1457 = vmatpush2.msra.mxu0 0.0
        %1458 = vmatprep.subr.mxu0 0.0
        %1459 = vmatpush2.msra.mxu0 0.0
        %1460 = vmatprep.subr.mxu0 0.0
        %1461 = vmatpush2.msra.mxu0 0.0
        %1462 = vmatprep.subr.mxu0 0.0
        %1463 = vmatpush2.msra.mxu0 0.0
        %1464 = vmatprep.mubr.f32.mxu0 0.0
        %v1465 = vand.u32 %v1313, 4294901760
        %1466 = vmatmul.mubr.f32.gmra.mxu0 %v1465
        %v1467 = vpop.f32.mrf.mxu0
        %v1468 = vadd.f32 %v1392, %v1467
        %v1469 = vpop.f32.mrf.mxu0
        %1470 = vdwg.mxu0
        %1471 = vmatprep.subr.mxu0 0.0
        %1472 = vmatpush1.msra.mxu0 0.0
        %1473 = vmatprep.subr.mxu0 0.0
        %1474 = vmatpush1.msra.mxu0 0.0
        %1475 = vmatprep.subr.mxu0 0.0
        %1476 = vmatpush1.msra.mxu0 0.0
        %1477 = vmatprep.subr.mxu0 0.0
        %1478 = vmatpush1.msra.mxu0 0.0
        %1479 = vmatprep.subr.mxu0 0.0
        %1480 = vmatpush1.msra.mxu0 0.0
        %1481 = vmatprep.subr.mxu0 0.0
        %1482 = vmatpush1.msra.mxu0 0.0
        %1483 = vmatprep.subr.mxu0 0.0
        %1484 = vmatpush1.msra.mxu0 0.0
        %1485 = vmatprep.subr.mxu0 0.0
        %1486 = vmatpush1.msra.mxu0 0.0
        %1487 = vmatprep.subr.mxu0 0.0
        %1488 = vmatpush1.msra.mxu0 0.0
        %1489 = vmatprep.subr.mxu0 0.0
        %1490 = vmatpush1.msra.mxu0 0.0
        %1491 = vmatprep.subr.mxu0 0.0
        %1492 = vmatpush1.msra.mxu0 0.0
        %1493 = vmatprep.subr.mxu0 0.0
        %1494 = vmatpush1.msra.mxu0 0.0
        %1495 = vmatprep.subr.mxu0 0.0
        %1496 = vmatpush1.msra.mxu0 0.0
        %1497 = vmatprep.subr.mxu0 0.0
        %1498 = vmatpush1.msra.mxu0 0.0
        %1499 = vmatprep.subr.mxu0 0.0
        %1500 = vmatpush1.msra.mxu0 0.0
        %1501 = vmatprep.subr.mxu0 0.0
        %v1502 = vand.u32 %v1317, 4294901760
        %v1503 = vsub.f32 %v1317, %v1502
        %1504 = vmatpush1.msra.mxu0 %v1503
        %1505 = vmatprep.subr.mxu0 0.0
        %1506 = vmatpush2.msra.mxu0 0.0
        %1507 = vmatprep.subr.mxu0 0.0
        %1508 = vmatpush2.msra.mxu0 0.0
        %1509 = vmatprep.subr.mxu0 0.0
        %1510 = vmatpush2.msra.mxu0 0.0
        %1511 = vmatprep.subr.mxu0 0.0
        %1512 = vmatpush2.msra.mxu0 0.0
        %1513 = vmatprep.subr.mxu0 0.0
        %1514 = vmatpush2.msra.mxu0 0.0
        %1515 = vmatprep.subr.mxu0 0.0
        %1516 = vmatpush2.msra.mxu0 0.0
        %1517 = vmatprep.subr.mxu0 0.0
        %1518 = vmatpush2.msra.mxu0 0.0
        %1519 = vmatprep.subr.mxu0 0.0
        %1520 = vmatpush2.msra.mxu0 0.0
        %1521 = vmatprep.subr.mxu0 0.0
        %1522 = vmatpush2.msra.mxu0 0.0
        %1523 = vmatprep.subr.mxu0 0.0
        %1524 = vmatpush2.msra.mxu0 0.0
        %1525 = vmatprep.subr.mxu0 0.0
        %1526 = vmatpush2.msra.mxu0 0.0
        %1527 = vmatprep.subr.mxu0 0.0
        %1528 = vmatpush2.msra.mxu0 0.0
        %1529 = vmatprep.subr.mxu0 0.0
        %1530 = vmatpush2.msra.mxu0 0.0
        %1531 = vmatprep.subr.mxu0 0.0
        %1532 = vmatpush2.msra.mxu0 0.0
        %1533 = vmatprep.subr.mxu0 0.0
        %1534 = vmatpush2.msra.mxu0 0.0
        %1535 = vmatprep.subr.mxu0 0.0
        %1536 = vmatpush2.msra.mxu0 0.0
        %1537 = vmatprep.mubr.f32.mxu0 0.0
        %v1538 = vand.u32 %v1313, 4294901760
        %v1539 = vsub.f32 %v1313, %v1538
        %1540 = vmatmul.mubr.f32.gmra.mxu0 %v1539
        %v1541 = vpop.f32.mrf.mxu0
        %v1542 = vadd.f32 %v1468, %v1541
        %v1543 = vpop.f32.mrf.mxu0
        %1544 = vdwg.mxu0
        %1545 = vmatprep.subr.mxu0 0.0
        %1546 = vmatpush1.msra.mxu0 0.0
        %1547 = vmatprep.subr.mxu0 0.0
        %1548 = vmatpush1.msra.mxu0 0.0
        %1549 = vmatprep.subr.mxu0 0.0
        %1550 = vmatpush1.msra.mxu0 0.0
        %1551 = vmatprep.subr.mxu0 0.0
        %1552 = vmatpush1.msra.mxu0 0.0
        %1553 = vmatprep.subr.mxu0 0.0
        %1554 = vmatpush1.msra.mxu0 0.0
        %1555 = vmatprep.subr.mxu0 0.0
        %1556 = vmatpush1.msra.mxu0 0.0
        %1557 = vmatprep.subr.mxu0 0.0
        %1558 = vmatpush1.msra.mxu0 0.0
        %1559 = vmatprep.subr.mxu0 0.0
        %1560 = vmatpush1.msra.mxu0 0.0
        %1561 = vmatprep.subr.mxu0 0.0
        %1562 = vmatpush1.msra.mxu0 0.0
        %1563 = vmatprep.subr.mxu0 0.0
        %1564 = vmatpush1.msra.mxu0 0.0
        %1565 = vmatprep.subr.mxu0 0.0
        %1566 = vmatpush1.msra.mxu0 0.0
        %1567 = vmatprep.subr.mxu0 0.0
        %1568 = vmatpush1.msra.mxu0 0.0
        %1569 = vmatprep.subr.mxu0 0.0
        %1570 = vmatpush1.msra.mxu0 0.0
        %1571 = vmatprep.subr.mxu0 0.0
        %1572 = vmatpush1.msra.mxu0 0.0
        %1573 = vmatprep.subr.mxu0 0.0
        %1574 = vmatpush1.msra.mxu0 0.0
        %1575 = vmatprep.subr.mxu0 0.0
        %v1576 = vand.u32 %v1317, 4294901760
        %1577 = vmatpush1.msra.mxu0 %v1576
        %1578 = vmatprep.subr.mxu0 0.0
        %1579 = vmatpush2.msra.mxu0 0.0
        %1580 = vmatprep.subr.mxu0 0.0
        %1581 = vmatpush2.msra.mxu0 0.0
        %1582 = vmatprep.subr.mxu0 0.0
        %1583 = vmatpush2.msra.mxu0 0.0
        %1584 = vmatprep.subr.mxu0 0.0
        %1585 = vmatpush2.msra.mxu0 0.0
        %1586 = vmatprep.subr.mxu0 0.0
        %1587 = vmatpush2.msra.mxu0 0.0
        %1588 = vmatprep.subr.mxu0 0.0
        %1589 = vmatpush2.msra.mxu0 0.0
        %1590 = vmatprep.subr.mxu0 0.0
        %1591 = vmatpush2.msra.mxu0 0.0
        %1592 = vmatprep.subr.mxu0 0.0
        %1593 = vmatpush2.msra.mxu0 0.0
        %1594 = vmatprep.subr.mxu0 0.0
        %1595 = vmatpush2.msra.mxu0 0.0
        %1596 = vmatprep.subr.mxu0 0.0
        %1597 = vmatpush2.msra.mxu0 0.0
        %1598 = vmatprep.subr.mxu0 0.0
        %1599 = vmatpush2.msra.mxu0 0.0
        %1600 = vmatprep.subr.mxu0 0.0
        %1601 = vmatpush2.msra.mxu0 0.0
        %1602 = vmatprep.subr.mxu0 0.0
        %1603 = vmatpush2.msra.mxu0 0.0
        %1604 = vmatprep.subr.mxu0 0.0
        %1605 = vmatpush2.msra.mxu0 0.0
        %1606 = vmatprep.subr.mxu0 0.0
        %1607 = vmatpush2.msra.mxu0 0.0
        %1608 = vmatprep.subr.mxu0 0.0
        %1609 = vmatpush2.msra.mxu0 0.0
        %1610 = vmatprep.mubr.f32.mxu0 0.0
        %v1611 = vand.u32 %v1313, 4294901760
        %v1612 = vsub.f32 %v1313, %v1611
        %v1613 = vand.u32 %v1612, 4294901760
        %1614 = vmatmul.mubr.f32.gmra.mxu0 %v1613
        %v1615 = vpop.f32.mrf.mxu0
        %v1616 = vadd.f32 %v1542, %v1615
        %v1617 = vpop.f32.mrf.mxu0
        %1618 = vdwg.mxu0
        %1619 = vmatprep.subr.mxu0 0.0
        %1620 = vmatpush1.msra.mxu0 0.0
        %1621 = vmatprep.subr.mxu0 0.0
        %1622 = vmatpush1.msra.mxu0 0.0
        %1623 = vmatprep.subr.mxu0 0.0
        %1624 = vmatpush1.msra.mxu0 0.0
        %1625 = vmatprep.subr.mxu0 0.0
        %1626 = vmatpush1.msra.mxu0 0.0
        %1627 = vmatprep.subr.mxu0 0.0
        %1628 = vmatpush1.msra.mxu0 0.0
        %1629 = vmatprep.subr.mxu0 0.0
        %1630 = vmatpush1.msra.mxu0 0.0
        %1631 = vmatprep.subr.mxu0 0.0
        %1632 = vmatpush1.msra.mxu0 0.0
        %1633 = vmatprep.subr.mxu0 0.0
        %1634 = vmatpush1.msra.mxu0 0.0
        %1635 = vmatprep.subr.mxu0 0.0
        %1636 = vmatpush1.msra.mxu0 0.0
        %1637 = vmatprep.subr.mxu0 0.0
        %1638 = vmatpush1.msra.mxu0 0.0
        %1639 = vmatprep.subr.mxu0 0.0
        %1640 = vmatpush1.msra.mxu0 0.0
        %1641 = vmatprep.subr.mxu0 0.0
        %1642 = vmatpush1.msra.mxu0 0.0
        %1643 = vmatprep.subr.mxu0 0.0
        %1644 = vmatpush1.msra.mxu0 0.0
        %1645 = vmatprep.subr.mxu0 0.0
        %1646 = vmatpush1.msra.mxu0 0.0
        %1647 = vmatprep.subr.mxu0 0.0
        %1648 = vmatpush1.msra.mxu0 0.0
        %1649 = vmatprep.subr.mxu0 0.0
        %v1650 = vand.u32 %v1317, 4294901760
        %v1651 = vsub.f32 %v1317, %v1650
        %v1652 = vand.u32 %v1651, 4294901760
        %1653 = vmatpush1.msra.mxu0 %v1652
        %1654 = vmatprep.subr.mxu0 0.0
        %1655 = vmatpush2.msra.mxu0 0.0
        %1656 = vmatprep.subr.mxu0 0.0
        %1657 = vmatpush2.msra.mxu0 0.0
        %1658 = vmatprep.subr.mxu0 0.0
        %1659 = vmatpush2.msra.mxu0 0.0
        %1660 = vmatprep.subr.mxu0 0.0
        %1661 = vmatpush2.msra.mxu0 0.0
        %1662 = vmatprep.subr.mxu0 0.0
        %1663 = vmatpush2.msra.mxu0 0.0
        %1664 = vmatprep.subr.mxu0 0.0
        %1665 = vmatpush2.msra.mxu0 0.0
        %1666 = vmatprep.subr.mxu0 0.0
        %1667 = vmatpush2.msra.mxu0 0.0
        %1668 = vmatprep.subr.mxu0 0.0
        %1669 = vmatpush2.msra.mxu0 0.0
        %1670 = vmatprep.subr.mxu0 0.0
        %1671 = vmatpush2.msra.mxu0 0.0
        %1672 = vmatprep.subr.mxu0 0.0
        %1673 = vmatpush2.msra.mxu0 0.0
        %1674 = vmatprep.subr.mxu0 0.0
        %1675 = vmatpush2.msra.mxu0 0.0
        %1676 = vmatprep.subr.mxu0 0.0
        %1677 = vmatpush2.msra.mxu0 0.0
        %1678 = vmatprep.subr.mxu0 0.0
        %1679 = vmatpush2.msra.mxu0 0.0
        %1680 = vmatprep.subr.mxu0 0.0
        %1681 = vmatpush2.msra.mxu0 0.0
        %1682 = vmatprep.subr.mxu0 0.0
        %1683 = vmatpush2.msra.mxu0 0.0
        %1684 = vmatprep.subr.mxu0 0.0
        %1685 = vmatpush2.msra.mxu0 0.0
        %1686 = vmatprep.mubr.f32.mxu0 0.0
        %v1687 = vand.u32 %v1313, 4294901760
        %1688 = vmatmul.mubr.f32.gmra.mxu0 %v1687
        %v1689 = vpop.f32.mrf.mxu0
        %v1690 = vadd.f32 %v1616, %v1689
        %v1691 = vpop.f32.mrf.mxu0
        %1692 = vdwg.mxu0
        %1693 = vmatprep.subr.mxu0 0.0
        %1694 = vmatpush1.msra.mxu0 0.0
        %1695 = vmatprep.subr.mxu0 0.0
        %1696 = vmatpush1.msra.mxu0 0.0
        %1697 = vmatprep.subr.mxu0 0.0
        %1698 = vmatpush1.msra.mxu0 0.0
        %1699 = vmatprep.subr.mxu0 0.0
        %1700 = vmatpush1.msra.mxu0 0.0
        %1701 = vmatprep.subr.mxu0 0.0
        %1702 = vmatpush1.msra.mxu0 0.0
        %1703 = vmatprep.subr.mxu0 0.0
        %1704 = vmatpush1.msra.mxu0 0.0
        %1705 = vmatprep.subr.mxu0 0.0
        %1706 = vmatpush1.msra.mxu0 0.0
        %1707 = vmatprep.subr.mxu0 0.0
        %1708 = vmatpush1.msra.mxu0 0.0
        %1709 = vmatprep.subr.mxu0 0.0
        %1710 = vmatpush1.msra.mxu0 0.0
        %1711 = vmatprep.subr.mxu0 0.0
        %1712 = vmatpush1.msra.mxu0 0.0
        %1713 = vmatprep.subr.mxu0 0.0
        %1714 = vmatpush1.msra.mxu0 0.0
        %1715 = vmatprep.subr.mxu0 0.0
        %1716 = vmatpush1.msra.mxu0 0.0
        %1717 = vmatprep.subr.mxu0 0.0
        %1718 = vmatpush1.msra.mxu0 0.0
        %1719 = vmatprep.subr.mxu0 0.0
        %1720 = vmatpush1.msra.mxu0 0.0
        %1721 = vmatprep.subr.mxu0 0.0
        %1722 = vmatpush1.msra.mxu0 0.0
        %1723 = vmatprep.subr.mxu0 0.0
        %v1724 = vand.u32 %v1317, 4294901760
        %1725 = vmatpush1.msra.mxu0 %v1724
        %1726 = vmatprep.subr.mxu0 0.0
        %1727 = vmatpush2.msra.mxu0 0.0
        %1728 = vmatprep.subr.mxu0 0.0
        %1729 = vmatpush2.msra.mxu0 0.0
        %1730 = vmatprep.subr.mxu0 0.0
        %1731 = vmatpush2.msra.mxu0 0.0
        %1732 = vmatprep.subr.mxu0 0.0
        %1733 = vmatpush2.msra.mxu0 0.0
        %1734 = vmatprep.subr.mxu0 0.0
        %1735 = vmatpush2.msra.mxu0 0.0
        %1736 = vmatprep.subr.mxu0 0.0
        %1737 = vmatpush2.msra.mxu0 0.0
        %1738 = vmatprep.subr.mxu0 0.0
        %1739 = vmatpush2.msra.mxu0 0.0
        %1740 = vmatprep.subr.mxu0 0.0
        %1741 = vmatpush2.msra.mxu0 0.0
        %1742 = vmatprep.subr.mxu0 0.0
        %1743 = vmatpush2.msra.mxu0 0.0
        %1744 = vmatprep.subr.mxu0 0.0
        %1745 = vmatpush2.msra.mxu0 0.0
        %1746 = vmatprep.subr.mxu0 0.0
        %1747 = vmatpush2.msra.mxu0 0.0
        %1748 = vmatprep.subr.mxu0 0.0
        %1749 = vmatpush2.msra.mxu0 0.0
        %1750 = vmatprep.subr.mxu0 0.0
        %1751 = vmatpush2.msra.mxu0 0.0
        %1752 = vmatprep.subr.mxu0 0.0
        %1753 = vmatpush2.msra.mxu0 0.0
        %1754 = vmatprep.subr.mxu0 0.0
        %1755 = vmatpush2.msra.mxu0 0.0
        %1756 = vmatprep.subr.mxu0 0.0
        %1757 = vmatpush2.msra.mxu0 0.0
        %1758 = vmatprep.mubr.f32.mxu0 0.0
        %v1759 = vand.u32 %v1313, 4294901760
        %1760 = vmatmul.mubr.f32.gmra.mxu0 %v1759
        %v1761 = vpop.f32.mrf.mxu0
        %v1762 = vadd.f32 %v1690, %v1761
        %v1763 = vpop.f32.mrf.mxu0
        %1764 = vdwg.mxu0
        %v1766 = vsel %vm1315, %v1307, 0
        %1768 = vmatprep.subr.mxu0 0.0
        %1769 = vmatpush1.msra.mxu0 0.0
        %1770 = vmatprep.subr.mxu0 0.0
        %1771 = vmatpush1.msra.mxu0 0.0
        %1772 = vmatprep.subr.mxu0 0.0
        %1773 = vmatpush1.msra.mxu0 0.0
        %1774 = vmatprep.subr.mxu0 0.0
        %1775 = vmatpush1.msra.mxu0 0.0
        %1776 = vmatprep.subr.mxu0 0.0
        %1777 = vmatpush1.msra.mxu0 0.0
        %1778 = vmatprep.subr.mxu0 0.0
        %1779 = vmatpush1.msra.mxu0 0.0
        %1780 = vmatprep.subr.mxu0 0.0
        %1781 = vmatpush1.msra.mxu0 0.0
        %1782 = vmatprep.subr.mxu0 0.0
        %1783 = vmatpush1.msra.mxu0 0.0
        %1784 = vmatprep.subr.mxu0 0.0
        %1785 = vmatpush1.msra.mxu0 0.0
        %1786 = vmatprep.subr.mxu0 0.0
        %1787 = vmatpush1.msra.mxu0 0.0
        %1788 = vmatprep.subr.mxu0 0.0
        %1789 = vmatpush1.msra.mxu0 0.0
        %1790 = vmatprep.subr.mxu0 0.0
        %1791 = vmatpush1.msra.mxu0 0.0
        %1792 = vmatprep.subr.mxu0 0.0
        %1793 = vmatpush1.msra.mxu0 0.0
        %1794 = vmatprep.subr.mxu0 0.0
        %1795 = vmatpush1.msra.mxu0 0.0
        %1796 = vmatprep.subr.mxu0 0.0
        %1797 = vmatpush1.msra.mxu0 0.0
        %1798 = vmatprep.subr.mxu0 0.0
        %v1799 = vand.u32 %v1766, 4294901760
        %1800 = vmatpush1.msra.mxu0 %v1799
        %1801 = vmatprep.subr.mxu0 0.0
        %1802 = vmatpush2.msra.mxu0 0.0
        %1803 = vmatprep.subr.mxu0 0.0
        %1804 = vmatpush2.msra.mxu0 0.0
        %1805 = vmatprep.subr.mxu0 0.0
        %1806 = vmatpush2.msra.mxu0 0.0
        %1807 = vmatprep.subr.mxu0 0.0
        %1808 = vmatpush2.msra.mxu0 0.0
        %1809 = vmatprep.subr.mxu0 0.0
        %1810 = vmatpush2.msra.mxu0 0.0
        %1811 = vmatprep.subr.mxu0 0.0
        %1812 = vmatpush2.msra.mxu0 0.0
        %1813 = vmatprep.subr.mxu0 0.0
        %1814 = vmatpush2.msra.mxu0 0.0
        %1815 = vmatprep.subr.mxu0 0.0
        %1816 = vmatpush2.msra.mxu0 0.0
        %1817 = vmatprep.subr.mxu0 0.0
        %1818 = vmatpush2.msra.mxu0 0.0
        %1819 = vmatprep.subr.mxu0 0.0
        %1820 = vmatpush2.msra.mxu0 0.0
        %1821 = vmatprep.subr.mxu0 0.0
        %1822 = vmatpush2.msra.mxu0 0.0
        %1823 = vmatprep.subr.mxu0 0.0
        %1824 = vmatpush2.msra.mxu0 0.0
        %1825 = vmatprep.subr.mxu0 0.0
        %1826 = vmatpush2.msra.mxu0 0.0
        %1827 = vmatprep.subr.mxu0 0.0
        %1828 = vmatpush2.msra.mxu0 0.0
        %1829 = vmatprep.subr.mxu0 0.0
        %1830 = vmatpush2.msra.mxu0 0.0
        %1831 = vmatprep.subr.mxu0 0.0
        %1832 = vmatpush2.msra.mxu0 0.0
        %1833 = vmatprep.mubr.f32.mxu0 0.0
        %v1834 = vand.u32 %v1313, 4294901760
        %v1835 = vsub.f32 %v1313, %v1834
        %v1836 = vand.u32 %v1835, 4294901760
        %v1837 = vsub.f32 %v1835, %v1836
        %v1838 = vand.u32 %v1837, 4294901760
        %1839 = vmatmul.mubr.f32.gmra.mxu0 %v1838
        %v1840 = vpop.f32.mrf.mxu0
        %v1841 = vadd.f32 %v1310, %v1840
        %v1842 = vpop.f32.mrf.mxu0
        %1843 = vdwg.mxu0
        %1844 = vmatprep.subr.mxu0 0.0
        %1845 = vmatpush1.msra.mxu0 0.0
        %1846 = vmatprep.subr.mxu0 0.0
        %1847 = vmatpush1.msra.mxu0 0.0
        %1848 = vmatprep.subr.mxu0 0.0
        %1849 = vmatpush1.msra.mxu0 0.0
        %1850 = vmatprep.subr.mxu0 0.0
        %1851 = vmatpush1.msra.mxu0 0.0
        %1852 = vmatprep.subr.mxu0 0.0
        %1853 = vmatpush1.msra.mxu0 0.0
        %1854 = vmatprep.subr.mxu0 0.0
        %1855 = vmatpush1.msra.mxu0 0.0
        %1856 = vmatprep.subr.mxu0 0.0
        %1857 = vmatpush1.msra.mxu0 0.0
        %1858 = vmatprep.subr.mxu0 0.0
        %1859 = vmatpush1.msra.mxu0 0.0
        %1860 = vmatprep.subr.mxu0 0.0
        %1861 = vmatpush1.msra.mxu0 0.0
        %1862 = vmatprep.subr.mxu0 0.0
        %1863 = vmatpush1.msra.mxu0 0.0
        %1864 = vmatprep.subr.mxu0 0.0
        %1865 = vmatpush1.msra.mxu0 0.0
        %1866 = vmatprep.subr.mxu0 0.0
        %1867 = vmatpush1.msra.mxu0 0.0
        %1868 = vmatprep.subr.mxu0 0.0
        %1869 = vmatpush1.msra.mxu0 0.0
        %1870 = vmatprep.subr.mxu0 0.0
        %1871 = vmatpush1.msra.mxu0 0.0
        %1872 = vmatprep.subr.mxu0 0.0
        %1873 = vmatpush1.msra.mxu0 0.0
        %1874 = vmatprep.subr.mxu0 0.0
        %v1875 = vand.u32 %v1766, 4294901760
        %v1876 = vsub.f32 %v1766, %v1875
        %v1877 = vand.u32 %v1876, 4294901760
        %v1878 = vsub.f32 %v1876, %v1877
        %v1879 = vand.u32 %v1878, 4294901760
        %1880 = vmatpush1.msra.mxu0 %v1879
        %1881 = vmatprep.subr.mxu0 0.0
        %1882 = vmatpush2.msra.mxu0 0.0
        %1883 = vmatprep.subr.mxu0 0.0
        %1884 = vmatpush2.msra.mxu0 0.0
        %1885 = vmatprep.subr.mxu0 0.0
        %1886 = vmatpush2.msra.mxu0 0.0
        %1887 = vmatprep.subr.mxu0 0.0
        %1888 = vmatpush2.msra.mxu0 0.0
        %1889 = vmatprep.subr.mxu0 0.0
        %1890 = vmatpush2.msra.mxu0 0.0
        %1891 = vmatprep.subr.mxu0 0.0
        %1892 = vmatpush2.msra.mxu0 0.0
        %1893 = vmatprep.subr.mxu0 0.0
        %1894 = vmatpush2.msra.mxu0 0.0
        %1895 = vmatprep.subr.mxu0 0.0
        %1896 = vmatpush2.msra.mxu0 0.0
        %1897 = vmatprep.subr.mxu0 0.0
        %1898 = vmatpush2.msra.mxu0 0.0
        %1899 = vmatprep.subr.mxu0 0.0
        %1900 = vmatpush2.msra.mxu0 0.0
        %1901 = vmatprep.subr.mxu0 0.0
        %1902 = vmatpush2.msra.mxu0 0.0
        %1903 = vmatprep.subr.mxu0 0.0
        %1904 = vmatpush2.msra.mxu0 0.0
        %1905 = vmatprep.subr.mxu0 0.0
        %1906 = vmatpush2.msra.mxu0 0.0
        %1907 = vmatprep.subr.mxu0 0.0
        %1908 = vmatpush2.msra.mxu0 0.0
        %1909 = vmatprep.subr.mxu0 0.0
        %1910 = vmatpush2.msra.mxu0 0.0
        %1911 = vmatprep.subr.mxu0 0.0
        %1912 = vmatpush2.msra.mxu0 0.0
        %1913 = vmatprep.mubr.f32.mxu0 0.0
        %v1914 = vand.u32 %v1313, 4294901760
        %1915 = vmatmul.mubr.f32.gmra.mxu0 %v1914
        %v1916 = vpop.f32.mrf.mxu0
        %v1917 = vadd.f32 %v1841, %v1916
        %v1918 = vpop.f32.mrf.mxu0
        %1919 = vdwg.mxu0
        %1920 = vmatprep.subr.mxu0 0.0
        %1921 = vmatpush1.msra.mxu0 0.0
        %1922 = vmatprep.subr.mxu0 0.0
        %1923 = vmatpush1.msra.mxu0 0.0
        %1924 = vmatprep.subr.mxu0 0.0
        %1925 = vmatpush1.msra.mxu0 0.0
        %1926 = vmatprep.subr.mxu0 0.0
        %1927 = vmatpush1.msra.mxu0 0.0
        %1928 = vmatprep.subr.mxu0 0.0
        %1929 = vmatpush1.msra.mxu0 0.0
        %1930 = vmatprep.subr.mxu0 0.0
        %1931 = vmatpush1.msra.mxu0 0.0
        %1932 = vmatprep.subr.mxu0 0.0
        %1933 = vmatpush1.msra.mxu0 0.0
        %1934 = vmatprep.subr.mxu0 0.0
        %1935 = vmatpush1.msra.mxu0 0.0
        %1936 = vmatprep.subr.mxu0 0.0
        %1937 = vmatpush1.msra.mxu0 0.0
        %1938 = vmatprep.subr.mxu0 0.0
        %1939 = vmatpush1.msra.mxu0 0.0
        %1940 = vmatprep.subr.mxu0 0.0
        %1941 = vmatpush1.msra.mxu0 0.0
        %1942 = vmatprep.subr.mxu0 0.0
        %1943 = vmatpush1.msra.mxu0 0.0
        %1944 = vmatprep.subr.mxu0 0.0
        %1945 = vmatpush1.msra.mxu0 0.0
        %1946 = vmatprep.subr.mxu0 0.0
        %1947 = vmatpush1.msra.mxu0 0.0
        %1948 = vmatprep.subr.mxu0 0.0
        %1949 = vmatpush1.msra.mxu0 0.0
        %1950 = vmatprep.subr.mxu0 0.0
        %v1951 = vand.u32 %v1766, 4294901760
        %v1952 = vsub.f32 %v1766, %v1951
        %1953 = vmatpush1.msra.mxu0 %v1952
        %1954 = vmatprep.subr.mxu0 0.0
        %1955 = vmatpush2.msra.mxu0 0.0
        %1956 = vmatprep.subr.mxu0 0.0
        %1957 = vmatpush2.msra.mxu0 0.0
        %1958 = vmatprep.subr.mxu0 0.0
        %1959 = vmatpush2.msra.mxu0 0.0
        %1960 = vmatprep.subr.mxu0 0.0
        %1961 = vmatpush2.msra.mxu0 0.0
        %1962 = vmatprep.subr.mxu0 0.0
        %1963 = vmatpush2.msra.mxu0 0.0
        %1964 = vmatprep.subr.mxu0 0.0
        %1965 = vmatpush2.msra.mxu0 0.0
        %1966 = vmatprep.subr.mxu0 0.0
        %1967 = vmatpush2.msra.mxu0 0.0
        %1968 = vmatprep.subr.mxu0 0.0
        %1969 = vmatpush2.msra.mxu0 0.0
        %1970 = vmatprep.subr.mxu0 0.0
        %1971 = vmatpush2.msra.mxu0 0.0
        %1972 = vmatprep.subr.mxu0 0.0
        %1973 = vmatpush2.msra.mxu0 0.0
        %1974 = vmatprep.subr.mxu0 0.0
        %1975 = vmatpush2.msra.mxu0 0.0
        %1976 = vmatprep.subr.mxu0 0.0
        %1977 = vmatpush2.msra.mxu0 0.0
        %1978 = vmatprep.subr.mxu0 0.0
        %1979 = vmatpush2.msra.mxu0 0.0
        %1980 = vmatprep.subr.mxu0 0.0
        %1981 = vmatpush2.msra.mxu0 0.0
        %1982 = vmatprep.subr.mxu0 0.0
        %1983 = vmatpush2.msra.mxu0 0.0
        %1984 = vmatprep.subr.mxu0 0.0
        %1985 = vmatpush2.msra.mxu0 0.0
        %1986 = vmatprep.mubr.f32.mxu0 0.0
        %v1987 = vand.u32 %v1313, 4294901760
        %v1988 = vsub.f32 %v1313, %v1987
        %1989 = vmatmul.mubr.f32.gmra.mxu0 %v1988
        %v1990 = vpop.f32.mrf.mxu0
        %v1991 = vadd.f32 %v1917, %v1990
        %v1992 = vpop.f32.mrf.mxu0
        %1993 = vdwg.mxu0
        %1994 = vmatprep.subr.mxu0 0.0
        %1995 = vmatpush1.msra.mxu0 0.0
        %1996 = vmatprep.subr.mxu0 0.0
        %1997 = vmatpush1.msra.mxu0 0.0
        %1998 = vmatprep.subr.mxu0 0.0
        %1999 = vmatpush1.msra.mxu0 0.0
        %2000 = vmatprep.subr.mxu0 0.0
        %2001 = vmatpush1.msra.mxu0 0.0
        %2002 = vmatprep.subr.mxu0 0.0
        %2003 = vmatpush1.msra.mxu0 0.0
        %2004 = vmatprep.subr.mxu0 0.0
        %2005 = vmatpush1.msra.mxu0 0.0
        %2006 = vmatprep.subr.mxu0 0.0
        %2007 = vmatpush1.msra.mxu0 0.0
        %2008 = vmatprep.subr.mxu0 0.0
        %2009 = vmatpush1.msra.mxu0 0.0
        %2010 = vmatprep.subr.mxu0 0.0
        %2011 = vmatpush1.msra.mxu0 0.0
        %2012 = vmatprep.subr.mxu0 0.0
        %2013 = vmatpush1.msra.mxu0 0.0
        %2014 = vmatprep.subr.mxu0 0.0
        %2015 = vmatpush1.msra.mxu0 0.0
        %2016 = vmatprep.subr.mxu0 0.0
        %2017 = vmatpush1.msra.mxu0 0.0
        %2018 = vmatprep.subr.mxu0 0.0
        %2019 = vmatpush1.msra.mxu0 0.0
        %2020 = vmatprep.subr.mxu0 0.0
        %2021 = vmatpush1.msra.mxu0 0.0
        %2022 = vmatprep.subr.mxu0 0.0
        %2023 = vmatpush1.msra.mxu0 0.0
        %2024 = vmatprep.subr.mxu0 0.0
        %v2025 = vand.u32 %v1766, 4294901760
        %2026 = vmatpush1.msra.mxu0 %v2025
        %2027 = vmatprep.subr.mxu0 0.0
        %2028 = vmatpush2.msra.mxu0 0.0
        %2029 = vmatprep.subr.mxu0 0.0
        %2030 = vmatpush2.msra.mxu0 0.0
        %2031 = vmatprep.subr.mxu0 0.0
        %2032 = vmatpush2.msra.mxu0 0.0
        %2033 = vmatprep.subr.mxu0 0.0
        %2034 = vmatpush2.msra.mxu0 0.0
        %2035 = vmatprep.subr.mxu0 0.0
        %2036 = vmatpush2.msra.mxu0 0.0
        %2037 = vmatprep.subr.mxu0 0.0
        %2038 = vmatpush2.msra.mxu0 0.0
        %2039 = vmatprep.subr.mxu0 0.0
        %2040 = vmatpush2.msra.mxu0 0.0
        %2041 = vmatprep.subr.mxu0 0.0
        %2042 = vmatpush2.msra.mxu0 0.0
        %2043 = vmatprep.subr.mxu0 0.0
        %2044 = vmatpush2.msra.mxu0 0.0
        %2045 = vmatprep.subr.mxu0 0.0
        %2046 = vmatpush2.msra.mxu0 0.0
        %2047 = vmatprep.subr.mxu0 0.0
        %2048 = vmatpush2.msra.mxu0 0.0
        %2049 = vmatprep.subr.mxu0 0.0
        %2050 = vmatpush2.msra.mxu0 0.0
        %2051 = vmatprep.subr.mxu0 0.0
        %2052 = vmatpush2.msra.mxu0 0.0
        %2053 = vmatprep.subr.mxu0 0.0
        %2054 = vmatpush2.msra.mxu0 0.0
        %2055 = vmatprep.subr.mxu0 0.0
        %2056 = vmatpush2.msra.mxu0 0.0
        %2057 = vmatprep.subr.mxu0 0.0
        %2058 = vmatpush2.msra.mxu0 0.0
        %2059 = vmatprep.mubr.f32.mxu0 0.0
        %v2060 = vand.u32 %v1313, 4294901760
        %v2061 = vsub.f32 %v1313, %v2060
        %v2062 = vand.u32 %v2061, 4294901760
        %2063 = vmatmul.mubr.f32.gmra.mxu0 %v2062
        %v2064 = vpop.f32.mrf.mxu0
        %v2065 = vadd.f32 %v1991, %v2064
        %v2066 = vpop.f32.mrf.mxu0
        %2067 = vdwg.mxu0
        %2068 = vmatprep.subr.mxu0 0.0
        %2069 = vmatpush1.msra.mxu0 0.0
        %2070 = vmatprep.subr.mxu0 0.0
        %2071 = vmatpush1.msra.mxu0 0.0
        %2072 = vmatprep.subr.mxu0 0.0
        %2073 = vmatpush1.msra.mxu0 0.0
        %2074 = vmatprep.subr.mxu0 0.0
        %2075 = vmatpush1.msra.mxu0 0.0
        %2076 = vmatprep.subr.mxu0 0.0
        %2077 = vmatpush1.msra.mxu0 0.0
        %2078 = vmatprep.subr.mxu0 0.0
        %2079 = vmatpush1.msra.mxu0 0.0
        %2080 = vmatprep.subr.mxu0 0.0
        %2081 = vmatpush1.msra.mxu0 0.0
        %2082 = vmatprep.subr.mxu0 0.0
        %2083 = vmatpush1.msra.mxu0 0.0
        %2084 = vmatprep.subr.mxu0 0.0
        %2085 = vmatpush1.msra.mxu0 0.0
        %2086 = vmatprep.subr.mxu0 0.0
        %2087 = vmatpush1.msra.mxu0 0.0
        %2088 = vmatprep.subr.mxu0 0.0
        %2089 = vmatpush1.msra.mxu0 0.0
        %2090 = vmatprep.subr.mxu0 0.0
        %2091 = vmatpush1.msra.mxu0 0.0
        %2092 = vmatprep.subr.mxu0 0.0
        %2093 = vmatpush1.msra.mxu0 0.0
        %2094 = vmatprep.subr.mxu0 0.0
        %2095 = vmatpush1.msra.mxu0 0.0
        %2096 = vmatprep.subr.mxu0 0.0
        %2097 = vmatpush1.msra.mxu0 0.0
        %2098 = vmatprep.subr.mxu0 0.0
        %v2099 = vand.u32 %v1766, 4294901760
        %v2100 = vsub.f32 %v1766, %v2099
        %v2101 = vand.u32 %v2100, 4294901760
        %2102 = vmatpush1.msra.mxu0 %v2101
        %2103 = vmatprep.subr.mxu0 0.0
        %2104 = vmatpush2.msra.mxu0 0.0
        %2105 = vmatprep.subr.mxu0 0.0
        %2106 = vmatpush2.msra.mxu0 0.0
        %2107 = vmatprep.subr.mxu0 0.0
        %2108 = vmatpush2.msra.mxu0 0.0
        %2109 = vmatprep.subr.mxu0 0.0
        %2110 = vmatpush2.msra.mxu0 0.0
        %2111 = vmatprep.subr.mxu0 0.0
        %2112 = vmatpush2.msra.mxu0 0.0
        %2113 = vmatprep.subr.mxu0 0.0
        %2114 = vmatpush2.msra.mxu0 0.0
        %2115 = vmatprep.subr.mxu0 0.0
        %2116 = vmatpush2.msra.mxu0 0.0
        %2117 = vmatprep.subr.mxu0 0.0
        %2118 = vmatpush2.msra.mxu0 0.0
        %2119 = vmatprep.subr.mxu0 0.0
        %2120 = vmatpush2.msra.mxu0 0.0
        %2121 = vmatprep.subr.mxu0 0.0
        %2122 = vmatpush2.msra.mxu0 0.0
        %2123 = vmatprep.subr.mxu0 0.0
        %2124 = vmatpush2.msra.mxu0 0.0
        %2125 = vmatprep.subr.mxu0 0.0
        %2126 = vmatpush2.msra.mxu0 0.0
        %2127 = vmatprep.subr.mxu0 0.0
        %2128 = vmatpush2.msra.mxu0 0.0
        %2129 = vmatprep.subr.mxu0 0.0
        %2130 = vmatpush2.msra.mxu0 0.0
        %2131 = vmatprep.subr.mxu0 0.0
        %2132 = vmatpush2.msra.mxu0 0.0
        %2133 = vmatprep.subr.mxu0 0.0
        %2134 = vmatpush2.msra.mxu0 0.0
        %2135 = vmatprep.mubr.f32.mxu0 0.0
        %v2136 = vand.u32 %v1313, 4294901760
        %2137 = vmatmul.mubr.f32.gmra.mxu0 %v2136
        %v2138 = vpop.f32.mrf.mxu0
        %v2139 = vadd.f32 %v2065, %v2138
        %v2140 = vpop.f32.mrf.mxu0
        %2141 = vdwg.mxu0
        %2142 = vmatprep.subr.mxu0 0.0
        %2143 = vmatpush1.msra.mxu0 0.0
        %2144 = vmatprep.subr.mxu0 0.0
        %2145 = vmatpush1.msra.mxu0 0.0
        %2146 = vmatprep.subr.mxu0 0.0
        %2147 = vmatpush1.msra.mxu0 0.0
        %2148 = vmatprep.subr.mxu0 0.0
        %2149 = vmatpush1.msra.mxu0 0.0
        %2150 = vmatprep.subr.mxu0 0.0
        %2151 = vmatpush1.msra.mxu0 0.0
        %2152 = vmatprep.subr.mxu0 0.0
        %2153 = vmatpush1.msra.mxu0 0.0
        %2154 = vmatprep.subr.mxu0 0.0
        %2155 = vmatpush1.msra.mxu0 0.0
        %2156 = vmatprep.subr.mxu0 0.0
        %2157 = vmatpush1.msra.mxu0 0.0
        %2158 = vmatprep.subr.mxu0 0.0
        %2159 = vmatpush1.msra.mxu0 0.0
        %2160 = vmatprep.subr.mxu0 0.0
        %2161 = vmatpush1.msra.mxu0 0.0
        %2162 = vmatprep.subr.mxu0 0.0
        %2163 = vmatpush1.msra.mxu0 0.0
        %2164 = vmatprep.subr.mxu0 0.0
        %2165 = vmatpush1.msra.mxu0 0.0
        %2166 = vmatprep.subr.mxu0 0.0
        %2167 = vmatpush1.msra.mxu0 0.0
        %2168 = vmatprep.subr.mxu0 0.0
        %2169 = vmatpush1.msra.mxu0 0.0
        %2170 = vmatprep.subr.mxu0 0.0
        %2171 = vmatpush1.msra.mxu0 0.0
        %2172 = vmatprep.subr.mxu0 0.0
        %v2173 = vand.u32 %v1766, 4294901760
        %2174 = vmatpush1.msra.mxu0 %v2173
        %2175 = vmatprep.subr.mxu0 0.0
        %2176 = vmatpush2.msra.mxu0 0.0
        %2177 = vmatprep.subr.mxu0 0.0
        %2178 = vmatpush2.msra.mxu0 0.0
        %2179 = vmatprep.subr.mxu0 0.0
        %2180 = vmatpush2.msra.mxu0 0.0
        %2181 = vmatprep.subr.mxu0 0.0
        %2182 = vmatpush2.msra.mxu0 0.0
        %2183 = vmatprep.subr.mxu0 0.0
        %2184 = vmatpush2.msra.mxu0 0.0
        %2185 = vmatprep.subr.mxu0 0.0
        %2186 = vmatpush2.msra.mxu0 0.0
        %2187 = vmatprep.subr.mxu0 0.0
        %2188 = vmatpush2.msra.mxu0 0.0
        %2189 = vmatprep.subr.mxu0 0.0
        %2190 = vmatpush2.msra.mxu0 0.0
        %2191 = vmatprep.subr.mxu0 0.0
        %2192 = vmatpush2.msra.mxu0 0.0
        %2193 = vmatprep.subr.mxu0 0.0
        %2194 = vmatpush2.msra.mxu0 0.0
        %2195 = vmatprep.subr.mxu0 0.0
        %2196 = vmatpush2.msra.mxu0 0.0
        %2197 = vmatprep.subr.mxu0 0.0
        %2198 = vmatpush2.msra.mxu0 0.0
        %2199 = vmatprep.subr.mxu0 0.0
        %2200 = vmatpush2.msra.mxu0 0.0
        %2201 = vmatprep.subr.mxu0 0.0
        %2202 = vmatpush2.msra.mxu0 0.0
        %2203 = vmatprep.subr.mxu0 0.0
        %2204 = vmatpush2.msra.mxu0 0.0
        %2205 = vmatprep.subr.mxu0 0.0
        %2206 = vmatpush2.msra.mxu0 0.0
        %2207 = vmatprep.mubr.f32.mxu0 0.0
        %v2208 = vand.u32 %v1313, 4294901760
        %2209 = vmatmul.mubr.f32.gmra.mxu0 %v2208
        %v2210 = vpop.f32.mrf.mxu0
        %v2211 = vadd.f32 %v2139, %v2210
        %v2212 = vpop.f32.mrf.mxu0
        %2213 = vdwg.mxu0
        %v2214 = vadd.f32 %v1762, 3.0
        %v2215 = vmax.f32 %v2214, 0.0
        %v2216 = vmin.f32 %v2215, 6.0
        %v2217 = vmul.f32 %v2216, 0.16666667
        %v2218 = vmul.f32 %v1762, %v2217
        %v2219 = vadd.f32 %v2211, 3.0
        %v2220 = vmax.f32 %v2219, 0.0
        %v2221 = vmin.f32 %v2220, 6.0
        %v2222 = vmul.f32 %v2221, 0.16666667
        %v2223 = vmul.f32 %v2211, %v2222
        %v2224 = vld [vmem:[%s4] sm:$0xf]
        %2226 = vset.pattern.permute.xlu0 0
        %2227 = vperm.xlu0 %2226, %v2224
        %v2228 = vpop.permute.xlu0 %2227
        %v2230 = vlaneseq
        %v2231 = vshrl.u32 %v2230, 7
        %v2232 = vsub.s32 0, %v2231
        %v2233 = vrot.slane %v2218, %v2232
        %v2234 = vmul.f32 %v2228, %v2233
        %2235 = vset.pattern.permute.xlu0 1
        %2236 = vperm.xlu0 %2235, %v2224
        %v2237 = vpop.permute.xlu0 %2236
        %v2239 = vadd.f32 %v2234, %v2237
        %v2240 = vxor.u32 %v2239, 2147483648
        %v2241 = vmul.f32 %v2240, 1.442695
        %v2242 = vpow.pop %v2241
        %v2243 = vadd.f32 %v2242, 1.0
        %v2244 = vrcp.pop %v2243
        %v2245 = vmul.f32 1.0, %v2244
        %2246 = vset.pattern.permute.xlu0 2
        %2247 = vperm.xlu0 %2246, %v2224
        %v2248 = vpop.permute.xlu0 %2247
        %v2250 = vlaneseq
        %v2251 = vshrl.u32 %v2250, 7
        %v2252 = vsub.s32 0, %v2251
        %v2253 = vrot.slane %v2223, %v2252
        %v2254 = vmul.f32 %v2248, %v2253
        %2255 = vset.pattern.permute.xlu0 3
        %2256 = vperm.xlu0 %2255, %v2224
        %v2257 = vpop.permute.xlu0 %2256
        %v2259 = vadd.f32 %v2254, %v2257
        %v2260 = vxor.u32 %v2259, 2147483648
        %v2261 = vmul.f32 %v2260, 1.442695
        %v2262 = vpow.pop %v2261
        %v2263 = vadd.f32 %v2262, 1.0
        %v2264 = vrcp.pop %v2263
        %v2265 = vmul.f32 1.0, %v2264
        %vm2266 = vcmask 130048
        %v2268 = vsel %vm2266, %v2245, 0
        %2270 = vmatprep.subr.mxu0 0.0
        %2271 = vmatpush1.msra.mxu0 0.0
        %2272 = vmatprep.subr.mxu0 0.0
        %2273 = vmatpush1.msra.mxu0 0.0
        %2274 = vmatprep.subr.mxu0 0.0
        %2275 = vmatpush1.msra.mxu0 0.0
        %2276 = vmatprep.subr.mxu0 0.0
        %2277 = vmatpush1.msra.mxu0 0.0
        %2278 = vmatprep.subr.mxu0 0.0
        %2279 = vmatpush1.msra.mxu0 0.0
        %2280 = vmatprep.subr.mxu0 0.0
        %2281 = vmatpush1.msra.mxu0 0.0
        %2282 = vmatprep.subr.mxu0 0.0
        %2283 = vmatpush1.msra.mxu0 0.0
        %2284 = vmatprep.subr.mxu0 0.0
        %2285 = vmatpush1.msra.mxu0 0.0
        %2286 = vmatprep.subr.mxu0 0.0
        %2287 = vmatpush1.msra.mxu0 0.0
        %2288 = vmatprep.subr.mxu0 0.0
        %2289 = vmatpush1.msra.mxu0 0.0
        %2290 = vmatprep.subr.mxu0 0.0
        %2291 = vmatpush1.msra.mxu0 0.0
        %2292 = vmatprep.subr.mxu0 0.0
        %2293 = vmatpush1.msra.mxu0 0.0
        %2294 = vmatprep.subr.mxu0 0.0
        %2295 = vmatpush1.msra.mxu0 0.0
        %2296 = vmatprep.subr.mxu0 0.0
        %2297 = vmatpush1.msra.mxu0 0.0
        %v2298 = vand.u32 %v302, 4294901760
        %2299 = vmatprep.subr.mxu0 %v2298
        %v2300 = vand.u32 %v301, 4294901760
        %2301 = vmatpush1.msra.mxu0 %v2300
        %v2302 = vand.u32 %v300, 4294901760
        %2303 = vmatprep.subr.mxu0 %v2302
        %v2304 = vand.u32 %v299, 4294901760
        %2305 = vmatpush1.msra.mxu0 %v2304
        %2306 = vmatprep.subr.mxu0 0.0
        %2307 = vmatpush2.msra.mxu0 0.0
        %2308 = vmatprep.subr.mxu0 0.0
        %2309 = vmatpush2.msra.mxu0 0.0
        %2310 = vmatprep.subr.mxu0 0.0
        %2311 = vmatpush2.msra.mxu0 0.0
        %2312 = vmatprep.subr.mxu0 0.0
        %2313 = vmatpush2.msra.mxu0 0.0
        %2314 = vmatprep.subr.mxu0 0.0
        %2315 = vmatpush2.msra.mxu0 0.0
        %2316 = vmatprep.subr.mxu0 0.0
        %2317 = vmatpush2.msra.mxu0 0.0
        %2318 = vmatprep.subr.mxu0 0.0
        %2319 = vmatpush2.msra.mxu0 0.0
        %2320 = vmatprep.subr.mxu0 0.0
        %2321 = vmatpush2.msra.mxu0 0.0
        %2322 = vmatprep.subr.mxu0 0.0
        %2323 = vmatpush2.msra.mxu0 0.0
        %2324 = vmatprep.subr.mxu0 0.0
        %2325 = vmatpush2.msra.mxu0 0.0
        %2326 = vmatprep.subr.mxu0 0.0
        %2327 = vmatpush2.msra.mxu0 0.0
        %2328 = vmatprep.subr.mxu0 0.0
        %2329 = vmatpush2.msra.mxu0 0.0
        %2330 = vmatprep.subr.mxu0 0.0
        %2331 = vmatpush2.msra.mxu0 0.0
        %2332 = vmatprep.subr.mxu0 0.0
        %2333 = vmatpush2.msra.mxu0 0.0
        %2334 = vmatprep.subr.mxu0 0.0
        %2335 = vmatpush2.msra.mxu0 0.0
        %2336 = vmatprep.subr.mxu0 0.0
        %2337 = vmatpush2.msra.mxu0 0.0
        %2338 = vmatprep.mubr.f32.mxu0 0.0
        %v2339 = vand.u32 %v2268, 4294901760
        %v2340 = vsub.f32 %v2268, %v2339
        %v2341 = vand.u32 %v2340, 4294901760
        %v2342 = vsub.f32 %v2340, %v2341
        %v2343 = vand.u32 %v2342, 4294901760
        %2344 = vmatmul.mubr.f32.gmra.mxu0 %v2343
        %v2345 = vpop.f32.mrf.mxu0
        %v2346 = vadd.f32 0.0, %v2345
        %v2347 = vpop.f32.mrf.mxu0
        %v2348 = vadd.f32 0.0, %v2347
        %2349 = vdwg.mxu0
        %2350 = vmatprep.subr.mxu0 0.0
        %2351 = vmatpush1.msra.mxu0 0.0
        %2352 = vmatprep.subr.mxu0 0.0
        %2353 = vmatpush1.msra.mxu0 0.0
        %2354 = vmatprep.subr.mxu0 0.0
        %2355 = vmatpush1.msra.mxu0 0.0
        %2356 = vmatprep.subr.mxu0 0.0
        %2357 = vmatpush1.msra.mxu0 0.0
        %2358 = vmatprep.subr.mxu0 0.0
        %2359 = vmatpush1.msra.mxu0 0.0
        %2360 = vmatprep.subr.mxu0 0.0
        %2361 = vmatpush1.msra.mxu0 0.0
        %2362 = vmatprep.subr.mxu0 0.0
        %2363 = vmatpush1.msra.mxu0 0.0
        %2364 = vmatprep.subr.mxu0 0.0
        %2365 = vmatpush1.msra.mxu0 0.0
        %2366 = vmatprep.subr.mxu0 0.0
        %2367 = vmatpush1.msra.mxu0 0.0
        %2368 = vmatprep.subr.mxu0 0.0
        %2369 = vmatpush1.msra.mxu0 0.0
        %2370 = vmatprep.subr.mxu0 0.0
        %2371 = vmatpush1.msra.mxu0 0.0
        %2372 = vmatprep.subr.mxu0 0.0
        %2373 = vmatpush1.msra.mxu0 0.0
        %2374 = vmatprep.subr.mxu0 0.0
        %2375 = vmatpush1.msra.mxu0 0.0
        %2376 = vmatprep.subr.mxu0 0.0
        %2377 = vmatpush1.msra.mxu0 0.0
        %v2378 = vand.u32 %v302, 4294901760
        %v2379 = vsub.f32 %v302, %v2378
        %v2380 = vand.u32 %v2379, 4294901760
        %v2381 = vsub.f32 %v2379, %v2380
        %v2382 = vand.u32 %v2381, 4294901760
        %2383 = vmatprep.subr.mxu0 %v2382
        %v2384 = vand.u32 %v301, 4294901760
        %v2385 = vsub.f32 %v301, %v2384
        %v2386 = vand.u32 %v2385, 4294901760
        %v2387 = vsub.f32 %v2385, %v2386
        %v2388 = vand.u32 %v2387, 4294901760
        %2389 = vmatpush1.msra.mxu0 %v2388
        %v2390 = vand.u32 %v300, 4294901760
        %v2391 = vsub.f32 %v300, %v2390
        %v2392 = vand.u32 %v2391, 4294901760
        %v2393 = vsub.f32 %v2391, %v2392
        %v2394 = vand.u32 %v2393, 4294901760
        %2395 = vmatprep.subr.mxu0 %v2394
        %v2396 = vand.u32 %v299, 4294901760
        %v2397 = vsub.f32 %v299, %v2396
        %v2398 = vand.u32 %v2397, 4294901760
        %v2399 = vsub.f32 %v2397, %v2398
        %v2400 = vand.u32 %v2399, 4294901760
        %2401 = vmatpush1.msra.mxu0 %v2400
        %2402 = vmatprep.subr.mxu0 0.0
        %2403 = vmatpush2.msra.mxu0 0.0
        %2404 = vmatprep.subr.mxu0 0.0
        %2405 = vmatpush2.msra.mxu0 0.0
        %2406 = vmatprep.subr.mxu0 0.0
        %2407 = vmatpush2.msra.mxu0 0.0
        %2408 = vmatprep.subr.mxu0 0.0
        %2409 = vmatpush2.msra.mxu0 0.0
        %2410 = vmatprep.subr.mxu0 0.0
        %2411 = vmatpush2.msra.mxu0 0.0
        %2412 = vmatprep.subr.mxu0 0.0
        %2413 = vmatpush2.msra.mxu0 0.0
        %2414 = vmatprep.subr.mxu0 0.0
        %2415 = vmatpush2.msra.mxu0 0.0
        %2416 = vmatprep.subr.mxu0 0.0
        %2417 = vmatpush2.msra.mxu0 0.0
        %2418 = vmatprep.subr.mxu0 0.0
        %2419 = vmatpush2.msra.mxu0 0.0
        %2420 = vmatprep.subr.mxu0 0.0
        %2421 = vmatpush2.msra.mxu0 0.0
        %2422 = vmatprep.subr.mxu0 0.0
        %2423 = vmatpush2.msra.mxu0 0.0
        %2424 = vmatprep.subr.mxu0 0.0
        %2425 = vmatpush2.msra.mxu0 0.0
        %2426 = vmatprep.subr.mxu0 0.0
        %2427 = vmatpush2.msra.mxu0 0.0
        %2428 = vmatprep.subr.mxu0 0.0
        %2429 = vmatpush2.msra.mxu0 0.0
        %2430 = vmatprep.subr.mxu0 0.0
        %2431 = vmatpush2.msra.mxu0 0.0
        %2432 = vmatprep.subr.mxu0 0.0
        %2433 = vmatpush2.msra.mxu0 0.0
        %2434 = vmatprep.mubr.f32.mxu0 0.0
        %v2435 = vand.u32 %v2268, 4294901760
        %2436 = vmatmul.mubr.f32.gmra.mxu0 %v2435
        %v2437 = vpop.f32.mrf.mxu0
        %v2438 = vadd.f32 %v2346, %v2437
        %v2439 = vpop.f32.mrf.mxu0
        %v2440 = vadd.f32 %v2348, %v2439
        %2441 = vdwg.mxu0
        %2442 = vmatprep.subr.mxu0 0.0
        %2443 = vmatpush1.msra.mxu0 0.0
        %2444 = vmatprep.subr.mxu0 0.0
        %2445 = vmatpush1.msra.mxu0 0.0
        %2446 = vmatprep.subr.mxu0 0.0
        %2447 = vmatpush1.msra.mxu0 0.0
        %2448 = vmatprep.subr.mxu0 0.0
        %2449 = vmatpush1.msra.mxu0 0.0
        %2450 = vmatprep.subr.mxu0 0.0
        %2451 = vmatpush1.msra.mxu0 0.0
        %2452 = vmatprep.subr.mxu0 0.0
        %2453 = vmatpush1.msra.mxu0 0.0
        %2454 = vmatprep.subr.mxu0 0.0
        %2455 = vmatpush1.msra.mxu0 0.0
        %2456 = vmatprep.subr.mxu0 0.0
        %2457 = vmatpush1.msra.mxu0 0.0
        %2458 = vmatprep.subr.mxu0 0.0
        %2459 = vmatpush1.msra.mxu0 0.0
        %2460 = vmatprep.subr.mxu0 0.0
        %2461 = vmatpush1.msra.mxu0 0.0
        %2462 = vmatprep.subr.mxu0 0.0
        %2463 = vmatpush1.msra.mxu0 0.0
        %2464 = vmatprep.subr.mxu0 0.0
        %2465 = vmatpush1.msra.mxu0 0.0
        %2466 = vmatprep.subr.mxu0 0.0
        %2467 = vmatpush1.msra.mxu0 0.0
        %2468 = vmatprep.subr.mxu0 0.0
        %2469 = vmatpush1.msra.mxu0 0.0
        %v2470 = vand.u32 %v302, 4294901760
        %v2471 = vsub.f32 %v302, %v2470
        %2472 = vmatprep.subr.mxu0 %v2471
        %v2473 = vand.u32 %v301, 4294901760
        %v2474 = vsub.f32 %v301, %v2473
        %2475 = vmatpush1.msra.mxu0 %v2474
        %v2476 = vand.u32 %v300, 4294901760
        %v2477 = vsub.f32 %v300, %v2476
        %2478 = vmatprep.subr.mxu0 %v2477
        %v2479 = vand.u32 %v299, 4294901760
        %v2480 = vsub.f32 %v299, %v2479
        %2481 = vmatpush1.msra.mxu0 %v2480
        %2482 = vmatprep.subr.mxu0 0.0
        %2483 = vmatpush2.msra.mxu0 0.0
        %2484 = vmatprep.subr.mxu0 0.0
        %2485 = vmatpush2.msra.mxu0 0.0
        %2486 = vmatprep.subr.mxu0 0.0
        %2487 = vmatpush2.msra.mxu0 0.0
        %2488 = vmatprep.subr.mxu0 0.0
        %2489 = vmatpush2.msra.mxu0 0.0
        %2490 = vmatprep.subr.mxu0 0.0
        %2491 = vmatpush2.msra.mxu0 0.0
        %2492 = vmatprep.subr.mxu0 0.0
        %2493 = vmatpush2.msra.mxu0 0.0
        %2494 = vmatprep.subr.mxu0 0.0
        %2495 = vmatpush2.msra.mxu0 0.0
        %2496 = vmatprep.subr.mxu0 0.0
        %2497 = vmatpush2.msra.mxu0 0.0
        %2498 = vmatprep.subr.mxu0 0.0
        %2499 = vmatpush2.msra.mxu0 0.0
        %2500 = vmatprep.subr.mxu0 0.0
        %2501 = vmatpush2.msra.mxu0 0.0
        %2502 = vmatprep.subr.mxu0 0.0
        %2503 = vmatpush2.msra.mxu0 0.0
        %2504 = vmatprep.subr.mxu0 0.0
        %2505 = vmatpush2.msra.mxu0 0.0
        %2506 = vmatprep.subr.mxu0 0.0
        %2507 = vmatpush2.msra.mxu0 0.0
        %2508 = vmatprep.subr.mxu0 0.0
        %2509 = vmatpush2.msra.mxu0 0.0
        %2510 = vmatprep.subr.mxu0 0.0
        %2511 = vmatpush2.msra.mxu0 0.0
        %2512 = vmatprep.subr.mxu0 0.0
        %2513 = vmatpush2.msra.mxu0 0.0
        %2514 = vmatprep.mubr.f32.mxu0 0.0
        %v2515 = vand.u32 %v2268, 4294901760
        %v2516 = vsub.f32 %v2268, %v2515
        %2517 = vmatmul.mubr.f32.gmra.mxu0 %v2516
        %v2518 = vpop.f32.mrf.mxu0
        %v2519 = vadd.f32 %v2438, %v2518
        %v2520 = vpop.f32.mrf.mxu0
        %v2521 = vadd.f32 %v2440, %v2520
        %2522 = vdwg.mxu0
        %2523 = vmatprep.subr.mxu0 0.0
        %2524 = vmatpush1.msra.mxu0 0.0
        %2525 = vmatprep.subr.mxu0 0.0
        %2526 = vmatpush1.msra.mxu0 0.0
        %2527 = vmatprep.subr.mxu0 0.0
        %2528 = vmatpush1.msra.mxu0 0.0
        %2529 = vmatprep.subr.mxu0 0.0
        %2530 = vmatpush1.msra.mxu0 0.0
        %2531 = vmatprep.subr.mxu0 0.0
        %2532 = vmatpush1.msra.mxu0 0.0
        %2533 = vmatprep.subr.mxu0 0.0
        %2534 = vmatpush1.msra.mxu0 0.0
        %2535 = vmatprep.subr.mxu0 0.0
        %2536 = vmatpush1.msra.mxu0 0.0
        %2537 = vmatprep.subr.mxu0 0.0
        %2538 = vmatpush1.msra.mxu0 0.0
        %2539 = vmatprep.subr.mxu0 0.0
        %2540 = vmatpush1.msra.mxu0 0.0
        %2541 = vmatprep.subr.mxu0 0.0
        %2542 = vmatpush1.msra.mxu0 0.0
        %2543 = vmatprep.subr.mxu0 0.0
        %2544 = vmatpush1.msra.mxu0 0.0
        %2545 = vmatprep.subr.mxu0 0.0
        %2546 = vmatpush1.msra.mxu0 0.0
        %2547 = vmatprep.subr.mxu0 0.0
        %2548 = vmatpush1.msra.mxu0 0.0
        %2549 = vmatprep.subr.mxu0 0.0
        %2550 = vmatpush1.msra.mxu0 0.0
        %v2551 = vand.u32 %v302, 4294901760
        %2552 = vmatprep.subr.mxu0 %v2551
        %v2553 = vand.u32 %v301, 4294901760
        %2554 = vmatpush1.msra.mxu0 %v2553
        %v2555 = vand.u32 %v300, 4294901760
        %2556 = vmatprep.subr.mxu0 %v2555
        %v2557 = vand.u32 %v299, 4294901760
        %2558 = vmatpush1.msra.mxu0 %v2557
        %2559 = vmatprep.subr.mxu0 0.0
        %2560 = vmatpush2.msra.mxu0 0.0
        %2561 = vmatprep.subr.mxu0 0.0
        %2562 = vmatpush2.msra.mxu0 0.0
        %2563 = vmatprep.subr.mxu0 0.0
        %2564 = vmatpush2.msra.mxu0 0.0
        %2565 = vmatprep.subr.mxu0 0.0
        %2566 = vmatpush2.msra.mxu0 0.0
        %2567 = vmatprep.subr.mxu0 0.0
        %2568 = vmatpush2.msra.mxu0 0.0
        %2569 = vmatprep.subr.mxu0 0.0
        %2570 = vmatpush2.msra.mxu0 0.0
        %2571 = vmatprep.subr.mxu0 0.0
        %2572 = vmatpush2.msra.mxu0 0.0
        %2573 = vmatprep.subr.mxu0 0.0
        %2574 = vmatpush2.msra.mxu0 0.0
        %2575 = vmatprep.subr.mxu0 0.0
        %2576 = vmatpush2.msra.mxu0 0.0
        %2577 = vmatprep.subr.mxu0 0.0
        %2578 = vmatpush2.msra.mxu0 0.0
        %2579 = vmatprep.subr.mxu0 0.0
        %2580 = vmatpush2.msra.mxu0 0.0
        %2581 = vmatprep.subr.mxu0 0.0
        %2582 = vmatpush2.msra.mxu0 0.0
        %2583 = vmatprep.subr.mxu0 0.0
        %2584 = vmatpush2.msra.mxu0 0.0
        %2585 = vmatprep.subr.mxu0 0.0
        %2586 = vmatpush2.msra.mxu0 0.0
        %2587 = vmatprep.subr.mxu0 0.0
        %2588 = vmatpush2.msra.mxu0 0.0
        %2589 = vmatprep.subr.mxu0 0.0
        %2590 = vmatpush2.msra.mxu0 0.0
        %2591 = vmatprep.mubr.f32.mxu0 0.0
        %v2592 = vand.u32 %v2268, 4294901760
        %v2593 = vsub.f32 %v2268, %v2592
        %v2594 = vand.u32 %v2593, 4294901760
        %2595 = vmatmul.mubr.f32.gmra.mxu0 %v2594
        %v2596 = vpop.f32.mrf.mxu0
        %v2597 = vadd.f32 %v2519, %v2596
        %v2598 = vpop.f32.mrf.mxu0
        %v2599 = vadd.f32 %v2521, %v2598
        %2600 = vdwg.mxu0
        %2601 = vmatprep.subr.mxu0 0.0
        %2602 = vmatpush1.msra.mxu0 0.0
        %2603 = vmatprep.subr.mxu0 0.0
        %2604 = vmatpush1.msra.mxu0 0.0
        %2605 = vmatprep.subr.mxu0 0.0
        %2606 = vmatpush1.msra.mxu0 0.0
        %2607 = vmatprep.subr.mxu0 0.0
        %2608 = vmatpush1.msra.mxu0 0.0
        %2609 = vmatprep.subr.mxu0 0.0
        %2610 = vmatpush1.msra.mxu0 0.0
        %2611 = vmatprep.subr.mxu0 0.0
        %2612 = vmatpush1.msra.mxu0 0.0
        %2613 = vmatprep.subr.mxu0 0.0
        %2614 = vmatpush1.msra.mxu0 0.0
        %2615 = vmatprep.subr.mxu0 0.0
        %2616 = vmatpush1.msra.mxu0 0.0
        %2617 = vmatprep.subr.mxu0 0.0
        %2618 = vmatpush1.msra.mxu0 0.0
        %2619 = vmatprep.subr.mxu0 0.0
        %2620 = vmatpush1.msra.mxu0 0.0
        %2621 = vmatprep.subr.mxu0 0.0
        %2622 = vmatpush1.msra.mxu0 0.0
        %2623 = vmatprep.subr.mxu0 0.0
        %2624 = vmatpush1.msra.mxu0 0.0
        %2625 = vmatprep.subr.mxu0 0.0
        %2626 = vmatpush1.msra.mxu0 0.0
        %2627 = vmatprep.subr.mxu0 0.0
        %2628 = vmatpush1.msra.mxu0 0.0
        %v2629 = vand.u32 %v302, 4294901760
        %v2630 = vsub.f32 %v302, %v2629
        %v2631 = vand.u32 %v2630, 4294901760
        %2632 = vmatprep.subr.mxu0 %v2631
        %v2633 = vand.u32 %v301, 4294901760
        %v2634 = vsub.f32 %v301, %v2633
        %v2635 = vand.u32 %v2634, 4294901760
        %2636 = vmatpush1.msra.mxu0 %v2635
        %v2637 = vand.u32 %v300, 4294901760
        %v2638 = vsub.f32 %v300, %v2637
        %v2639 = vand.u32 %v2638, 4294901760
        %2640 = vmatprep.subr.mxu0 %v2639
        %v2641 = vand.u32 %v299, 4294901760
        %v2642 = vsub.f32 %v299, %v2641
        %v2643 = vand.u32 %v2642, 4294901760
        %2644 = vmatpush1.msra.mxu0 %v2643
        %2645 = vmatprep.subr.mxu0 0.0
        %2646 = vmatpush2.msra.mxu0 0.0
        %2647 = vmatprep.subr.mxu0 0.0
        %2648 = vmatpush2.msra.mxu0 0.0
        %2649 = vmatprep.subr.mxu0 0.0
        %2650 = vmatpush2.msra.mxu0 0.0
        %2651 = vmatprep.subr.mxu0 0.0
        %2652 = vmatpush2.msra.mxu0 0.0
        %2653 = vmatprep.subr.mxu0 0.0
        %2654 = vmatpush2.msra.mxu0 0.0
        %2655 = vmatprep.subr.mxu0 0.0
        %2656 = vmatpush2.msra.mxu0 0.0
        %2657 = vmatprep.subr.mxu0 0.0
        %2658 = vmatpush2.msra.mxu0 0.0
        %2659 = vmatprep.subr.mxu0 0.0
        %2660 = vmatpush2.msra.mxu0 0.0
        %2661 = vmatprep.subr.mxu0 0.0
        %2662 = vmatpush2.msra.mxu0 0.0
        %2663 = vmatprep.subr.mxu0 0.0
        %2664 = vmatpush2.msra.mxu0 0.0
        %2665 = vmatprep.subr.mxu0 0.0
        %2666 = vmatpush2.msra.mxu0 0.0
        %2667 = vmatprep.subr.mxu0 0.0
        %2668 = vmatpush2.msra.mxu0 0.0
        %2669 = vmatprep.subr.mxu0 0.0
        %2670 = vmatpush2.msra.mxu0 0.0
        %2671 = vmatprep.subr.mxu0 0.0
        %2672 = vmatpush2.msra.mxu0 0.0
        %2673 = vmatprep.subr.mxu0 0.0
        %2674 = vmatpush2.msra.mxu0 0.0
        %2675 = vmatprep.subr.mxu0 0.0
        %2676 = vmatpush2.msra.mxu0 0.0
        %2677 = vmatprep.mubr.f32.mxu0 0.0
        %v2678 = vand.u32 %v2268, 4294901760
        %2679 = vmatmul.mubr.f32.gmra.mxu0 %v2678
        %v2680 = vpop.f32.mrf.mxu0
        %v2681 = vadd.f32 %v2597, %v2680
        %v2682 = vpop.f32.mrf.mxu0
        %v2683 = vadd.f32 %v2599, %v2682
        %2684 = vdwg.mxu0
        %2685 = vmatprep.subr.mxu0 0.0
        %2686 = vmatpush1.msra.mxu0 0.0
        %2687 = vmatprep.subr.mxu0 0.0
        %2688 = vmatpush1.msra.mxu0 0.0
        %2689 = vmatprep.subr.mxu0 0.0
        %2690 = vmatpush1.msra.mxu0 0.0
        %2691 = vmatprep.subr.mxu0 0.0
        %2692 = vmatpush1.msra.mxu0 0.0
        %2693 = vmatprep.subr.mxu0 0.0
        %2694 = vmatpush1.msra.mxu0 0.0
        %2695 = vmatprep.subr.mxu0 0.0
        %2696 = vmatpush1.msra.mxu0 0.0
        %2697 = vmatprep.subr.mxu0 0.0
        %2698 = vmatpush1.msra.mxu0 0.0
        %2699 = vmatprep.subr.mxu0 0.0
        %2700 = vmatpush1.msra.mxu0 0.0
        %2701 = vmatprep.subr.mxu0 0.0
        %2702 = vmatpush1.msra.mxu0 0.0
        %2703 = vmatprep.subr.mxu0 0.0
        %2704 = vmatpush1.msra.mxu0 0.0
        %2705 = vmatprep.subr.mxu0 0.0
        %2706 = vmatpush1.msra.mxu0 0.0
        %2707 = vmatprep.subr.mxu0 0.0
        %2708 = vmatpush1.msra.mxu0 0.0
        %2709 = vmatprep.subr.mxu0 0.0
        %2710 = vmatpush1.msra.mxu0 0.0
        %2711 = vmatprep.subr.mxu0 0.0
        %2712 = vmatpush1.msra.mxu0 0.0
        %v2713 = vand.u32 %v302, 4294901760
        %2714 = vmatprep.subr.mxu0 %v2713
        %v2715 = vand.u32 %v301, 4294901760
        %2716 = vmatpush1.msra.mxu0 %v2715
        %v2717 = vand.u32 %v300, 4294901760
        %2718 = vmatprep.subr.mxu0 %v2717
        %v2719 = vand.u32 %v299, 4294901760
        %2720 = vmatpush1.msra.mxu0 %v2719
        %2721 = vmatprep.subr.mxu0 0.0
        %2722 = vmatpush2.msra.mxu0 0.0
        %2723 = vmatprep.subr.mxu0 0.0
        %2724 = vmatpush2.msra.mxu0 0.0
        %2725 = vmatprep.subr.mxu0 0.0
        %2726 = vmatpush2.msra.mxu0 0.0
        %2727 = vmatprep.subr.mxu0 0.0
        %2728 = vmatpush2.msra.mxu0 0.0
        %2729 = vmatprep.subr.mxu0 0.0
        %2730 = vmatpush2.msra.mxu0 0.0
        %2731 = vmatprep.subr.mxu0 0.0
        %2732 = vmatpush2.msra.mxu0 0.0
        %2733 = vmatprep.subr.mxu0 0.0
        %2734 = vmatpush2.msra.mxu0 0.0
        %2735 = vmatprep.subr.mxu0 0.0
        %2736 = vmatpush2.msra.mxu0 0.0
        %2737 = vmatprep.subr.mxu0 0.0
        %2738 = vmatpush2.msra.mxu0 0.0
        %2739 = vmatprep.subr.mxu0 0.0
        %2740 = vmatpush2.msra.mxu0 0.0
        %2741 = vmatprep.subr.mxu0 0.0
        %2742 = vmatpush2.msra.mxu0 0.0
        %2743 = vmatprep.subr.mxu0 0.0
        %2744 = vmatpush2.msra.mxu0 0.0
        %2745 = vmatprep.subr.mxu0 0.0
        %2746 = vmatpush2.msra.mxu0 0.0
        %2747 = vmatprep.subr.mxu0 0.0
        %2748 = vmatpush2.msra.mxu0 0.0
        %2749 = vmatprep.subr.mxu0 0.0
        %2750 = vmatpush2.msra.mxu0 0.0
        %2751 = vmatprep.subr.mxu0 0.0
        %2752 = vmatpush2.msra.mxu0 0.0
        %2753 = vmatprep.mubr.f32.mxu0 0.0
        %v2754 = vand.u32 %v2268, 4294901760
        %2755 = vmatmul.mubr.f32.gmra.mxu0 %v2754
        %v2756 = vpop.f32.mrf.mxu0
        %v2757 = vadd.f32 %v2681, %v2756
        %v2758 = vpop.f32.mrf.mxu0
        %v2759 = vadd.f32 %v2683, %v2758
        %2760 = vdwg.mxu0
        %v2762 = vsel %vm2266, %v2265, 0
        %2764 = vmatprep.subr.mxu0 0.0
        %2765 = vmatpush1.msra.mxu0 0.0
        %2766 = vmatprep.subr.mxu0 0.0
        %2767 = vmatpush1.msra.mxu0 0.0
        %2768 = vmatprep.subr.mxu0 0.0
        %2769 = vmatpush1.msra.mxu0 0.0
        %2770 = vmatprep.subr.mxu0 0.0
        %2771 = vmatpush1.msra.mxu0 0.0
        %2772 = vmatprep.subr.mxu0 0.0
        %2773 = vmatpush1.msra.mxu0 0.0
        %2774 = vmatprep.subr.mxu0 0.0
        %2775 = vmatpush1.msra.mxu0 0.0
        %2776 = vmatprep.subr.mxu0 0.0
        %2777 = vmatpush1.msra.mxu0 0.0
        %2778 = vmatprep.subr.mxu0 0.0
        %2779 = vmatpush1.msra.mxu0 0.0
        %2780 = vmatprep.subr.mxu0 0.0
        %2781 = vmatpush1.msra.mxu0 0.0
        %2782 = vmatprep.subr.mxu0 0.0
        %2783 = vmatpush1.msra.mxu0 0.0
        %2784 = vmatprep.subr.mxu0 0.0
        %2785 = vmatpush1.msra.mxu0 0.0
        %2786 = vmatprep.subr.mxu0 0.0
        %2787 = vmatpush1.msra.mxu0 0.0
        %2788 = vmatprep.subr.mxu0 0.0
        %2789 = vmatpush1.msra.mxu0 0.0
        %2790 = vmatprep.subr.mxu0 0.0
        %2791 = vmatpush1.msra.mxu0 0.0
        %v2792 = vand.u32 %v306, 4294901760
        %2793 = vmatprep.subr.mxu0 %v2792
        %v2794 = vand.u32 %v305, 4294901760
        %2795 = vmatpush1.msra.mxu0 %v2794
        %v2796 = vand.u32 %v304, 4294901760
        %2797 = vmatprep.subr.mxu0 %v2796
        %v2798 = vand.u32 %v303, 4294901760
        %2799 = vmatpush1.msra.mxu0 %v2798
        %2800 = vmatprep.subr.mxu0 0.0
        %2801 = vmatpush2.msra.mxu0 0.0
        %2802 = vmatprep.subr.mxu0 0.0
        %2803 = vmatpush2.msra.mxu0 0.0
        %2804 = vmatprep.subr.mxu0 0.0
        %2805 = vmatpush2.msra.mxu0 0.0
        %2806 = vmatprep.subr.mxu0 0.0
        %2807 = vmatpush2.msra.mxu0 0.0
        %2808 = vmatprep.subr.mxu0 0.0
        %2809 = vmatpush2.msra.mxu0 0.0
        %2810 = vmatprep.subr.mxu0 0.0
        %2811 = vmatpush2.msra.mxu0 0.0
        %2812 = vmatprep.subr.mxu0 0.0
        %2813 = vmatpush2.msra.mxu0 0.0
        %2814 = vmatprep.subr.mxu0 0.0
        %2815 = vmatpush2.msra.mxu0 0.0
        %2816 = vmatprep.subr.mxu0 0.0
        %2817 = vmatpush2.msra.mxu0 0.0
        %2818 = vmatprep.subr.mxu0 0.0
        %2819 = vmatpush2.msra.mxu0 0.0
        %2820 = vmatprep.subr.mxu0 0.0
        %2821 = vmatpush2.msra.mxu0 0.0
        %2822 = vmatprep.subr.mxu0 0.0
        %2823 = vmatpush2.msra.mxu0 0.0
        %2824 = vmatprep.subr.mxu0 0.0
        %2825 = vmatpush2.msra.mxu0 0.0
        %2826 = vmatprep.subr.mxu0 0.0
        %2827 = vmatpush2.msra.mxu0 0.0
        %2828 = vmatprep.subr.mxu0 0.0
        %2829 = vmatpush2.msra.mxu0 0.0
        %2830 = vmatprep.subr.mxu0 0.0
        %2831 = vmatpush2.msra.mxu0 0.0
        %2832 = vmatprep.mubr.f32.mxu0 0.0
        %v2833 = vand.u32 %v2762, 4294901760
        %v2834 = vsub.f32 %v2762, %v2833
        %v2835 = vand.u32 %v2834, 4294901760
        %v2836 = vsub.f32 %v2834, %v2835
        %v2837 = vand.u32 %v2836, 4294901760
        %2838 = vmatmul.mubr.f32.gmra.mxu0 %v2837
        %v2839 = vpop.f32.mrf.mxu0
        %v2840 = vadd.f32 0.0, %v2839
        %v2841 = vpop.f32.mrf.mxu0
        %v2842 = vadd.f32 0.0, %v2841
        %2843 = vdwg.mxu0
        %2844 = vmatprep.subr.mxu0 0.0
        %2845 = vmatpush1.msra.mxu0 0.0
        %2846 = vmatprep.subr.mxu0 0.0
        %2847 = vmatpush1.msra.mxu0 0.0
        %2848 = vmatprep.subr.mxu0 0.0
        %2849 = vmatpush1.msra.mxu0 0.0
        %2850 = vmatprep.subr.mxu0 0.0
        %2851 = vmatpush1.msra.mxu0 0.0
        %2852 = vmatprep.subr.mxu0 0.0
        %2853 = vmatpush1.msra.mxu0 0.0
        %2854 = vmatprep.subr.mxu0 0.0
        %2855 = vmatpush1.msra.mxu0 0.0
        %2856 = vmatprep.subr.mxu0 0.0
        %2857 = vmatpush1.msra.mxu0 0.0
        %2858 = vmatprep.subr.mxu0 0.0
        %2859 = vmatpush1.msra.mxu0 0.0
        %2860 = vmatprep.subr.mxu0 0.0
        %2861 = vmatpush1.msra.mxu0 0.0
        %2862 = vmatprep.subr.mxu0 0.0
        %2863 = vmatpush1.msra.mxu0 0.0
        %2864 = vmatprep.subr.mxu0 0.0
        %2865 = vmatpush1.msra.mxu0 0.0
        %2866 = vmatprep.subr.mxu0 0.0
        %2867 = vmatpush1.msra.mxu0 0.0
        %2868 = vmatprep.subr.mxu0 0.0
        %2869 = vmatpush1.msra.mxu0 0.0
        %2870 = vmatprep.subr.mxu0 0.0
        %2871 = vmatpush1.msra.mxu0 0.0
        %v2872 = vand.u32 %v306, 4294901760
        %v2873 = vsub.f32 %v306, %v2872
        %v2874 = vand.u32 %v2873, 4294901760
        %v2875 = vsub.f32 %v2873, %v2874
        %v2876 = vand.u32 %v2875, 4294901760
        %2877 = vmatprep.subr.mxu0 %v2876
        %v2878 = vand.u32 %v305, 4294901760
        %v2879 = vsub.f32 %v305, %v2878
        %v2880 = vand.u32 %v2879, 4294901760
        %v2881 = vsub.f32 %v2879, %v2880
        %v2882 = vand.u32 %v2881, 4294901760
        %2883 = vmatpush1.msra.mxu0 %v2882
        %v2884 = vand.u32 %v304, 4294901760
        %v2885 = vsub.f32 %v304, %v2884
        %v2886 = vand.u32 %v2885, 4294901760
        %v2887 = vsub.f32 %v2885, %v2886
        %v2888 = vand.u32 %v2887, 4294901760
        %2889 = vmatprep.subr.mxu0 %v2888
        %v2890 = vand.u32 %v303, 4294901760
        %v2891 = vsub.f32 %v303, %v2890
        %v2892 = vand.u32 %v2891, 4294901760
        %v2893 = vsub.f32 %v2891, %v2892
        %v2894 = vand.u32 %v2893, 4294901760
        %2895 = vmatpush1.msra.mxu0 %v2894
        %2896 = vmatprep.subr.mxu0 0.0
        %2897 = vmatpush2.msra.mxu0 0.0
        %2898 = vmatprep.subr.mxu0 0.0
        %2899 = vmatpush2.msra.mxu0 0.0
        %2900 = vmatprep.subr.mxu0 0.0
        %2901 = vmatpush2.msra.mxu0 0.0
        %2902 = vmatprep.subr.mxu0 0.0
        %2903 = vmatpush2.msra.mxu0 0.0
        %2904 = vmatprep.subr.mxu0 0.0
        %2905 = vmatpush2.msra.mxu0 0.0
        %2906 = vmatprep.subr.mxu0 0.0
        %2907 = vmatpush2.msra.mxu0 0.0
        %2908 = vmatprep.subr.mxu0 0.0
        %2909 = vmatpush2.msra.mxu0 0.0
        %2910 = vmatprep.subr.mxu0 0.0
        %2911 = vmatpush2.msra.mxu0 0.0
        %2912 = vmatprep.subr.mxu0 0.0
        %2913 = vmatpush2.msra.mxu0 0.0
        %2914 = vmatprep.subr.mxu0 0.0
        %2915 = vmatpush2.msra.mxu0 0.0
        %2916 = vmatprep.subr.mxu0 0.0
        %2917 = vmatpush2.msra.mxu0 0.0
        %2918 = vmatprep.subr.mxu0 0.0
        %2919 = vmatpush2.msra.mxu0 0.0
        %2920 = vmatprep.subr.mxu0 0.0
        %2921 = vmatpush2.msra.mxu0 0.0
        %2922 = vmatprep.subr.mxu0 0.0
        %2923 = vmatpush2.msra.mxu0 0.0
        %2924 = vmatprep.subr.mxu0 0.0
        %2925 = vmatpush2.msra.mxu0 0.0
        %2926 = vmatprep.subr.mxu0 0.0
        %2927 = vmatpush2.msra.mxu0 0.0
        %2928 = vmatprep.mubr.f32.mxu0 0.0
        %v2929 = vand.u32 %v2762, 4294901760
        %2930 = vmatmul.mubr.f32.gmra.mxu0 %v2929
        %v2931 = vpop.f32.mrf.mxu0
        %v2932 = vadd.f32 %v2840, %v2931
        %v2933 = vpop.f32.mrf.mxu0
        %v2934 = vadd.f32 %v2842, %v2933
        %2935 = vdwg.mxu0
        %2936 = vmatprep.subr.mxu0 0.0
        %2937 = vmatpush1.msra.mxu0 0.0
        %2938 = vmatprep.subr.mxu0 0.0
        %2939 = vmatpush1.msra.mxu0 0.0
        %2940 = vmatprep.subr.mxu0 0.0
        %2941 = vmatpush1.msra.mxu0 0.0
        %2942 = vmatprep.subr.mxu0 0.0
        %2943 = vmatpush1.msra.mxu0 0.0
        %2944 = vmatprep.subr.mxu0 0.0
        %2945 = vmatpush1.msra.mxu0 0.0
        %2946 = vmatprep.subr.mxu0 0.0
        %2947 = vmatpush1.msra.mxu0 0.0
        %2948 = vmatprep.subr.mxu0 0.0
        %2949 = vmatpush1.msra.mxu0 0.0
        %2950 = vmatprep.subr.mxu0 0.0
        %2951 = vmatpush1.msra.mxu0 0.0
        %2952 = vmatprep.subr.mxu0 0.0
        %2953 = vmatpush1.msra.mxu0 0.0
        %2954 = vmatprep.subr.mxu0 0.0
        %2955 = vmatpush1.msra.mxu0 0.0
        %2956 = vmatprep.subr.mxu0 0.0
        %2957 = vmatpush1.msra.mxu0 0.0
        %2958 = vmatprep.subr.mxu0 0.0
        %2959 = vmatpush1.msra.mxu0 0.0
        %2960 = vmatprep.subr.mxu0 0.0
        %2961 = vmatpush1.msra.mxu0 0.0
        %2962 = vmatprep.subr.mxu0 0.0
        %2963 = vmatpush1.msra.mxu0 0.0
        %v2964 = vand.u32 %v306, 4294901760
        %v2965 = vsub.f32 %v306, %v2964
        %2966 = vmatprep.subr.mxu0 %v2965
        %v2967 = vand.u32 %v305, 4294901760
        %v2968 = vsub.f32 %v305, %v2967
        %2969 = vmatpush1.msra.mxu0 %v2968
        %v2970 = vand.u32 %v304, 4294901760
        %v2971 = vsub.f32 %v304, %v2970
        %2972 = vmatprep.subr.mxu0 %v2971
        %v2973 = vand.u32 %v303, 4294901760
        %v2974 = vsub.f32 %v303, %v2973
        %2975 = vmatpush1.msra.mxu0 %v2974
        %2976 = vmatprep.subr.mxu0 0.0
        %2977 = vmatpush2.msra.mxu0 0.0
        %2978 = vmatprep.subr.mxu0 0.0
        %2979 = vmatpush2.msra.mxu0 0.0
        %2980 = vmatprep.subr.mxu0 0.0
        %2981 = vmatpush2.msra.mxu0 0.0
        %2982 = vmatprep.subr.mxu0 0.0
        %2983 = vmatpush2.msra.mxu0 0.0
        %2984 = vmatprep.subr.mxu0 0.0
        %2985 = vmatpush2.msra.mxu0 0.0
        %2986 = vmatprep.subr.mxu0 0.0
        %2987 = vmatpush2.msra.mxu0 0.0
        %2988 = vmatprep.subr.mxu0 0.0
        %2989 = vmatpush2.msra.mxu0 0.0
        %2990 = vmatprep.subr.mxu0 0.0
        %2991 = vmatpush2.msra.mxu0 0.0
        %2992 = vmatprep.subr.mxu0 0.0
        %2993 = vmatpush2.msra.mxu0 0.0
        %2994 = vmatprep.subr.mxu0 0.0
        %2995 = vmatpush2.msra.mxu0 0.0
        %2996 = vmatprep.subr.mxu0 0.0
        %2997 = vmatpush2.msra.mxu0 0.0
        %2998 = vmatprep.subr.mxu0 0.0
        %2999 = vmatpush2.msra.mxu0 0.0
        %3000 = vmatprep.subr.mxu0 0.0
        %3001 = vmatpush2.msra.mxu0 0.0
        %3002 = vmatprep.subr.mxu0 0.0
        %3003 = vmatpush2.msra.mxu0 0.0
        %3004 = vmatprep.subr.mxu0 0.0
        %3005 = vmatpush2.msra.mxu0 0.0
        %3006 = vmatprep.subr.mxu0 0.0
        %3007 = vmatpush2.msra.mxu0 0.0
        %3008 = vmatprep.mubr.f32.mxu0 0.0
        %v3009 = vand.u32 %v2762, 4294901760
        %v3010 = vsub.f32 %v2762, %v3009
        %3011 = vmatmul.mubr.f32.gmra.mxu0 %v3010
        %v3012 = vpop.f32.mrf.mxu0
        %v3013 = vadd.f32 %v2932, %v3012
        %v3014 = vpop.f32.mrf.mxu0
        %v3015 = vadd.f32 %v2934, %v3014
        %3016 = vdwg.mxu0
        %3017 = vmatprep.subr.mxu0 0.0
        %3018 = vmatpush1.msra.mxu0 0.0
        %3019 = vmatprep.subr.mxu0 0.0
        %3020 = vmatpush1.msra.mxu0 0.0
        %3021 = vmatprep.subr.mxu0 0.0
        %3022 = vmatpush1.msra.mxu0 0.0
        %3023 = vmatprep.subr.mxu0 0.0
        %3024 = vmatpush1.msra.mxu0 0.0
        %3025 = vmatprep.subr.mxu0 0.0
        %3026 = vmatpush1.msra.mxu0 0.0
        %3027 = vmatprep.subr.mxu0 0.0
        %3028 = vmatpush1.msra.mxu0 0.0
        %3029 = vmatprep.subr.mxu0 0.0
        %3030 = vmatpush1.msra.mxu0 0.0
        %3031 = vmatprep.subr.mxu0 0.0
        %3032 = vmatpush1.msra.mxu0 0.0
        %3033 = vmatprep.subr.mxu0 0.0
        %3034 = vmatpush1.msra.mxu0 0.0
        %3035 = vmatprep.subr.mxu0 0.0
        %3036 = vmatpush1.msra.mxu0 0.0
        %3037 = vmatprep.subr.mxu0 0.0
        %3038 = vmatpush1.msra.mxu0 0.0
        %3039 = vmatprep.subr.mxu0 0.0
        %3040 = vmatpush1.msra.mxu0 0.0
        %3041 = vmatprep.subr.mxu0 0.0
        %3042 = vmatpush1.msra.mxu0 0.0
        %3043 = vmatprep.subr.mxu0 0.0
        %3044 = vmatpush1.msra.mxu0 0.0
        %v3045 = vand.u32 %v306, 4294901760
        %3046 = vmatprep.subr.mxu0 %v3045
        %v3047 = vand.u32 %v305, 4294901760
        %3048 = vmatpush1.msra.mxu0 %v3047
        %v3049 = vand.u32 %v304, 4294901760
        %3050 = vmatprep.subr.mxu0 %v3049
        %v3051 = vand.u32 %v303, 4294901760
        %3052 = vmatpush1.msra.mxu0 %v3051
        %3053 = vmatprep.subr.mxu0 0.0
        %3054 = vmatpush2.msra.mxu0 0.0
        %3055 = vmatprep.subr.mxu0 0.0
        %3056 = vmatpush2.msra.mxu0 0.0
        %3057 = vmatprep.subr.mxu0 0.0
        %3058 = vmatpush2.msra.mxu0 0.0
        %3059 = vmatprep.subr.mxu0 0.0
        %3060 = vmatpush2.msra.mxu0 0.0
        %3061 = vmatprep.subr.mxu0 0.0
        %3062 = vmatpush2.msra.mxu0 0.0
        %3063 = vmatprep.subr.mxu0 0.0
        %3064 = vmatpush2.msra.mxu0 0.0
        %3065 = vmatprep.subr.mxu0 0.0
        %3066 = vmatpush2.msra.mxu0 0.0
        %3067 = vmatprep.subr.mxu0 0.0
        %3068 = vmatpush2.msra.mxu0 0.0
        %3069 = vmatprep.subr.mxu0 0.0
        %3070 = vmatpush2.msra.mxu0 0.0
        %3071 = vmatprep.subr.mxu0 0.0
        %3072 = vmatpush2.msra.mxu0 0.0
        %3073 = vmatprep.subr.mxu0 0.0
        %3074 = vmatpush2.msra.mxu0 0.0
        %3075 = vmatprep.subr.mxu0 0.0
        %3076 = vmatpush2.msra.mxu0 0.0
        %3077 = vmatprep.subr.mxu0 0.0
        %3078 = vmatpush2.msra.mxu0 0.0
        %3079 = vmatprep.subr.mxu0 0.0
        %3080 = vmatpush2.msra.mxu0 0.0
        %3081 = vmatprep.subr.mxu0 0.0
        %3082 = vmatpush2.msra.mxu0 0.0
        %3083 = vmatprep.subr.mxu0 0.0
        %3084 = vmatpush2.msra.mxu0 0.0
        %3085 = vmatprep.mubr.f32.mxu0 0.0
        %v3086 = vand.u32 %v2762, 4294901760
        %v3087 = vsub.f32 %v2762, %v3086
        %v3088 = vand.u32 %v3087, 4294901760
        %3089 = vmatmul.mubr.f32.gmra.mxu0 %v3088
        %v3090 = vpop.f32.mrf.mxu0
        %v3091 = vadd.f32 %v3013, %v3090
        %v3092 = vpop.f32.mrf.mxu0
        %v3093 = vadd.f32 %v3015, %v3092
        %3094 = vdwg.mxu0
        %3095 = vmatprep.subr.mxu0 0.0
        %3096 = vmatpush1.msra.mxu0 0.0
        %3097 = vmatprep.subr.mxu0 0.0
        %3098 = vmatpush1.msra.mxu0 0.0
        %3099 = vmatprep.subr.mxu0 0.0
        %3100 = vmatpush1.msra.mxu0 0.0
        %3101 = vmatprep.subr.mxu0 0.0
        %3102 = vmatpush1.msra.mxu0 0.0
        %3103 = vmatprep.subr.mxu0 0.0
        %3104 = vmatpush1.msra.mxu0 0.0
        %3105 = vmatprep.subr.mxu0 0.0
        %3106 = vmatpush1.msra.mxu0 0.0
        %3107 = vmatprep.subr.mxu0 0.0
        %3108 = vmatpush1.msra.mxu0 0.0
        %3109 = vmatprep.subr.mxu0 0.0
        %3110 = vmatpush1.msra.mxu0 0.0
        %3111 = vmatprep.subr.mxu0 0.0
        %3112 = vmatpush1.msra.mxu0 0.0
        %3113 = vmatprep.subr.mxu0 0.0
        %3114 = vmatpush1.msra.mxu0 0.0
        %3115 = vmatprep.subr.mxu0 0.0
        %3116 = vmatpush1.msra.mxu0 0.0
        %3117 = vmatprep.subr.mxu0 0.0
        %3118 = vmatpush1.msra.mxu0 0.0
        %3119 = vmatprep.subr.mxu0 0.0
        %3120 = vmatpush1.msra.mxu0 0.0
        %3121 = vmatprep.subr.mxu0 0.0
        %3122 = vmatpush1.msra.mxu0 0.0
        %v3123 = vand.u32 %v306, 4294901760
        %v3124 = vsub.f32 %v306, %v3123
        %v3125 = vand.u32 %v3124, 4294901760
        %3126 = vmatprep.subr.mxu0 %v3125
        %v3127 = vand.u32 %v305, 4294901760
        %v3128 = vsub.f32 %v305, %v3127
        %v3129 = vand.u32 %v3128, 4294901760
        %3130 = vmatpush1.msra.mxu0 %v3129
        %v3131 = vand.u32 %v304, 4294901760
        %v3132 = vsub.f32 %v304, %v3131
        %v3133 = vand.u32 %v3132, 4294901760
        %3134 = vmatprep.subr.mxu0 %v3133
        %v3135 = vand.u32 %v303, 4294901760
        %v3136 = vsub.f32 %v303, %v3135
        %v3137 = vand.u32 %v3136, 4294901760
        %3138 = vmatpush1.msra.mxu0 %v3137
        %3139 = vmatprep.subr.mxu0 0.0
        %3140 = vmatpush2.msra.mxu0 0.0
        %3141 = vmatprep.subr.mxu0 0.0
        %3142 = vmatpush2.msra.mxu0 0.0
        %3143 = vmatprep.subr.mxu0 0.0
        %3144 = vmatpush2.msra.mxu0 0.0
        %3145 = vmatprep.subr.mxu0 0.0
        %3146 = vmatpush2.msra.mxu0 0.0
        %3147 = vmatprep.subr.mxu0 0.0
        %3148 = vmatpush2.msra.mxu0 0.0
        %3149 = vmatprep.subr.mxu0 0.0
        %3150 = vmatpush2.msra.mxu0 0.0
        %3151 = vmatprep.subr.mxu0 0.0
        %3152 = vmatpush2.msra.mxu0 0.0
        %3153 = vmatprep.subr.mxu0 0.0
        %3154 = vmatpush2.msra.mxu0 0.0
        %3155 = vmatprep.subr.mxu0 0.0
        %3156 = vmatpush2.msra.mxu0 0.0
        %3157 = vmatprep.subr.mxu0 0.0
        %3158 = vmatpush2.msra.mxu0 0.0
        %3159 = vmatprep.subr.mxu0 0.0
        %3160 = vmatpush2.msra.mxu0 0.0
        %3161 = vmatprep.subr.mxu0 0.0
        %3162 = vmatpush2.msra.mxu0 0.0
        %3163 = vmatprep.subr.mxu0 0.0
        %3164 = vmatpush2.msra.mxu0 0.0
        %3165 = vmatprep.subr.mxu0 0.0
        %3166 = vmatpush2.msra.mxu0 0.0
        %3167 = vmatprep.subr.mxu0 0.0
        %3168 = vmatpush2.msra.mxu0 0.0
        %3169 = vmatprep.subr.mxu0 0.0
        %3170 = vmatpush2.msra.mxu0 0.0
        %3171 = vmatprep.mubr.f32.mxu0 0.0
        %v3172 = vand.u32 %v2762, 4294901760
        %3173 = vmatmul.mubr.f32.gmra.mxu0 %v3172
        %v3174 = vpop.f32.mrf.mxu0
        %v3175 = vadd.f32 %v3091, %v3174
        %v3176 = vpop.f32.mrf.mxu0
        %v3177 = vadd.f32 %v3093, %v3176
        %3178 = vdwg.mxu0
        %3179 = vmatprep.subr.mxu0 0.0
        %3180 = vmatpush1.msra.mxu0 0.0
        %3181 = vmatprep.subr.mxu0 0.0
        %3182 = vmatpush1.msra.mxu0 0.0
        %3183 = vmatprep.subr.mxu0 0.0
        %3184 = vmatpush1.msra.mxu0 0.0
        %3185 = vmatprep.subr.mxu0 0.0
        %3186 = vmatpush1.msra.mxu0 0.0
        %3187 = vmatprep.subr.mxu0 0.0
        %3188 = vmatpush1.msra.mxu0 0.0
        %3189 = vmatprep.subr.mxu0 0.0
        %3190 = vmatpush1.msra.mxu0 0.0
        %3191 = vmatprep.subr.mxu0 0.0
        %3192 = vmatpush1.msra.mxu0 0.0
        %3193 = vmatprep.subr.mxu0 0.0
        %3194 = vmatpush1.msra.mxu0 0.0
        %3195 = vmatprep.subr.mxu0 0.0
        %3196 = vmatpush1.msra.mxu0 0.0
        %3197 = vmatprep.subr.mxu0 0.0
        %3198 = vmatpush1.msra.mxu0 0.0
        %3199 = vmatprep.subr.mxu0 0.0
        %3200 = vmatpush1.msra.mxu0 0.0
        %3201 = vmatprep.subr.mxu0 0.0
        %3202 = vmatpush1.msra.mxu0 0.0
        %3203 = vmatprep.subr.mxu0 0.0
        %3204 = vmatpush1.msra.mxu0 0.0
        %3205 = vmatprep.subr.mxu0 0.0
        %3206 = vmatpush1.msra.mxu0 0.0
        %v3207 = vand.u32 %v306, 4294901760
        %3208 = vmatprep.subr.mxu0 %v3207
        %v3209 = vand.u32 %v305, 4294901760
        %3210 = vmatpush1.msra.mxu0 %v3209
        %v3211 = vand.u32 %v304, 4294901760
        %3212 = vmatprep.subr.mxu0 %v3211
        %v3213 = vand.u32 %v303, 4294901760
        %3214 = vmatpush1.msra.mxu0 %v3213
        %3215 = vmatprep.subr.mxu0 0.0
        %3216 = vmatpush2.msra.mxu0 0.0
        %3217 = vmatprep.subr.mxu0 0.0
        %3218 = vmatpush2.msra.mxu0 0.0
        %3219 = vmatprep.subr.mxu0 0.0
        %3220 = vmatpush2.msra.mxu0 0.0
        %3221 = vmatprep.subr.mxu0 0.0
        %3222 = vmatpush2.msra.mxu0 0.0
        %3223 = vmatprep.subr.mxu0 0.0
        %3224 = vmatpush2.msra.mxu0 0.0
        %3225 = vmatprep.subr.mxu0 0.0
        %3226 = vmatpush2.msra.mxu0 0.0
        %3227 = vmatprep.subr.mxu0 0.0
        %3228 = vmatpush2.msra.mxu0 0.0
        %3229 = vmatprep.subr.mxu0 0.0
        %3230 = vmatpush2.msra.mxu0 0.0
        %3231 = vmatprep.subr.mxu0 0.0
        %3232 = vmatpush2.msra.mxu0 0.0
        %3233 = vmatprep.subr.mxu0 0.0
        %3234 = vmatpush2.msra.mxu0 0.0
        %3235 = vmatprep.subr.mxu0 0.0
        %3236 = vmatpush2.msra.mxu0 0.0
        %3237 = vmatprep.subr.mxu0 0.0
        %3238 = vmatpush2.msra.mxu0 0.0
        %3239 = vmatprep.subr.mxu0 0.0
        %3240 = vmatpush2.msra.mxu0 0.0
        %3241 = vmatprep.subr.mxu0 0.0
        %3242 = vmatpush2.msra.mxu0 0.0
        %3243 = vmatprep.subr.mxu0 0.0
        %3244 = vmatpush2.msra.mxu0 0.0
        %3245 = vmatprep.subr.mxu0 0.0
        %3246 = vmatpush2.msra.mxu0 0.0
        %3247 = vmatprep.mubr.f32.mxu0 0.0
        %v3248 = vand.u32 %v2762, 4294901760
        %3249 = vmatmul.mubr.f32.gmra.mxu0 %v3248
        %v3250 = vpop.f32.mrf.mxu0
        %v3251 = vadd.f32 %v3175, %v3250
        %v3252 = vpop.f32.mrf.mxu0
        %v3253 = vadd.f32 %v3177, %v3252
        %3254 = vdwg.mxu0
        %v3257 = vcombine.low %v2757, %v2759
        %v3259 = vmul.f32 %v298, %v3257
        %v3262 = vcombine.low %v3251, %v3253
        %v3264 = vmul.f32 %v3259, %v3262
        %3265 = vst [vmem:[%s297] sm:$0xff] %v3264
        %s3266 = sand.u32 %s164, 1
        %s3267 = scalar_lea.sflag [#allocation5], %s3266
        %s3268 = sand.u32 %s164, 1
        %s3269 = smul.addr %s3268, 8
        %s3270 = scalar_lea.vmem [#allocation9], %s3269
        // Predicated region
        $region57: #{tpu_custom_call.1} parent=43 // pred_check
          %p3271 = pneg %p174
        $region58: #{tpu_custom_call.1} parent=43 // pred_check_branch
          %3273 = sbr.rel (%p3271) target = $region60
        $region59: #{tpu_custom_call.1} parent=43 // pred_region
          %s3275 = ssub.s32 128, 128
          %3276 = vsyncadd %s3267, %s3275
          %s3277 = smul.addr %s25, 2
          %s3278 = smul.addr %s3277, 64
          %s3279 = scalar_lea.hbm %s6, %s3278
          %s3281 = sshll.u32 %s3270, 4
          %s3282 = int_to_ptr.vmem [resolvable:$true] %s3281
          %3284 = dma.vmem_to_hbm [thread:$0]  %s3282, 128, %s3279, %s3267
        $region60: #{tpu_custom_call.1} parent=43 // pred_fallthru
          _
      $region44: #{tpu_custom_call.1} parent=5 // pred_fallthru
        _
      %p3285 = scmp.le.s32.totalorder 2, %s20
      // Predicated region
      $region61: #{tpu_custom_call.1} parent=5 // pred_check
        %p3286 = pneg %p3285
      $region62: #{tpu_custom_call.1} parent=5 // pred_check_branch
        %3288 = sbr.rel (%p3286) target = $region64
      $region63: #{tpu_custom_call.1} parent=5 // pred_region
        %s3289 = ssub.s32 %s20, 2
        // Predicated region
        $region65: #{tpu_custom_call.1} parent=63 // pred_check
          %p3290 = pneg %p180
        $region66: #{tpu_custom_call.1} parent=63 // pred_check_branch
          %3292 = sbr.rel (%p3290) target = $region68
        $region67: #{tpu_custom_call.1} parent=63 // pred_region
          %s3293 = sand.u32 %s165, 1
          %s3294 = scalar_lea.sflag [#allocation5], %s3293
          %s3295 = sand.u32 %s165, 1
          %s3296 = smul.addr %s3295, 8
          %s3297 = scalar_lea.vmem [#allocation9], %s3296
          %3298 = dma.done %s3294, 128
        $region68: #{tpu_custom_call.1} parent=63 // pred_fallthru
          _
      $region64: #{tpu_custom_call.1} parent=5 // pred_fallthru
        _
    $region6: #{tpu_custom_call.1} parent=1 // loop_footer
      %s24 = sadd.s32 1, %s20
    $region7: #{tpu_custom_call.1} parent=1 // loop_footer_branch
      %19 = sbr.rel target = $region3
    $region8: #{tpu_custom_call.1} parent=1 // loop_exit
      _
    %3299 = vsyncpa [#allocation4], 1
    %s3300 = scalar_lea.sflag [#allocation4], 1
    %3301 = vsyncpa %s3300, 1
    %3302 = vsyncpa [#allocation7], 1
    %3303 = vsyncpa [#allocation5], 1
    %s3304 = scalar_lea.sflag [#allocation5], 1
    %3305 = vsyncpa %s3304, 1

</llo_original>
